<compile_context>
chip_gen: v7x
topology: tpu7x:2x2x1
jax: 0.10.0
libtpu: 0.0.40
codegen_flags: <defaults>
</compile_context>

<pallas_src>
import jax
import jax.numpy as jnp
import numpy as np
from jax import lax
from jax.experimental import pallas as pl
from jax.experimental.pallas import tpu as pltpu


def _leaky(x, slope=0.01):  # PyTorch nn.LeakyReLU default negative_slope
    return jnp.where(x >= 0, x, slope * x)


def gcn_disc_kernel(ten_ref, w1_ref, b1_ref, w2_ref, b2_ref, pooled_ref):
    """Grid = (G,). One step handles a batch tile across ALL slices.

    Refs (per grid step):
      ten_ref : (bt, S, N, N) f32  adjacency block for batch group g (all slices)
      w1_ref  : (S, N, N)     f32  all GCN-1 weights (VMEM-resident, constant index_map)
      b1_ref  : (S, 1, N)     f32  all GCN-1 biases
      w2_ref  : (S, N, N)     f32  all GCN-2 weights
      b2_ref  : (S, 1, N)     f32  all GCN-2 biases
      pooled_ref : (bt, N, N) f32  OUTPUT; sigmoid(max over slices), single store
    """
    bt = ten_ref.shape[0]
    s = ten_ref.shape[1]
    n = ten_ref.shape[-1]

    def slice_out(k):
        # Stack the batch tile into the MXU M dimension: (bt, N, N) -> (bt*N, N).
        adj = ten_ref[:, k, :, :].reshape(bt * n, n)
        h = jnp.dot(adj, w1_ref[k], preferred_element_type=jnp.float32) + b1_ref[k]
        h = _leaky(h)
        x = jnp.dot(h, w2_ref[k], preferred_element_type=jnp.float32) + b2_ref[k]
        return _leaky(x).reshape(bt, n, n)

    # Running max over slices lives in registers; no scratch, no per-slice output traffic.
    acc = slice_out(0)
    acc = lax.fori_loop(1, s, lambda k, a: jnp.maximum(a, slice_out(k)), acc,
                        unroll=True)
    pooled_ref[...] = jax.nn.sigmoid(acc)


def _pick_batch_tile(B):
    # Prefer bigger tiles (bigger MXU M, bigger DMAs, fewer grid steps), but keep
    # G = B // bt >= 2 whenever possible so the "parallel" axis shards across both
    # TensorCores on v7x.
    for cand in (8, 4, 2, 1):
        if B % cand == 0 and B // cand >= 2:
            return cand
    for cand in (8, 4, 2, 1):
        if B % cand == 0:
            return cand
    return 1


def discriminator_forward(ten, params, batch_tile=None):
    """ten: (B, S, N, N) float32.  Returns (logits (B, 1), flat (B, N*N))."""
    B, S, N, _ = ten.shape

    # Lane-dense layout: pad N up to a multiple of 128 (no-op when already aligned).
    Np = ((N + 127) // 128) * 128
    W1, b1 = params["W1"], params["b1"]
    W2, b2 = params["W2"], params["b2"]
    if Np != N:
        p = Np - N
        ten = jnp.pad(ten, ((0, 0), (0, 0), (0, p), (0, p)))
        W1 = jnp.pad(W1, ((0, 0), (0, p), (0, p)))
        W2 = jnp.pad(W2, ((0, 0), (0, p), (0, p)))
        b1 = jnp.pad(b1, ((0, 0), (0, 0), (0, p)))
        b2 = jnp.pad(b2, ((0, 0), (0, 0), (0, p)))

    bt = batch_tile if batch_tile is not None else _pick_batch_tile(B)
    if B % bt != 0:
        bt = 1
    G = B // bt

    f32 = jnp.float32
    pooled_p = pl.pallas_call(
        gcn_disc_kernel,
        out_shape=jax.ShapeDtypeStruct((B, Np, Np), f32),
        grid_spec=pltpu.PrefetchScalarGridSpec(
            num_scalar_prefetch=0,
            grid=(G,),
            in_specs=[
                # Streamed operand: one (bt, all-slices) adjacency block per step.
                pl.BlockSpec((bt, S, Np, Np), lambda g: (g, 0, 0, 0)),
                # VMEM-resident weights/biases: full-array block, constant index_map
                # (no re-DMA across grid steps).
                pl.BlockSpec((S, Np, Np), lambda g: (0, 0, 0)),   # W1
                pl.BlockSpec((S, 1, Np), lambda g: (0, 0, 0)),    # b1
                pl.BlockSpec((S, Np, Np), lambda g: (0, 0, 0)),   # W2
                pl.BlockSpec((S, 1, Np), lambda g: (0, 0, 0)),    # b2
            ],
            out_specs=pl.BlockSpec((bt, Np, Np), lambda g: (g, 0, 0)),
        ),
        compiler_params=pltpu.CompilerParams(
            dimension_semantics=("parallel",)),
    )(ten.astype(f32), W1.astype(f32), b1.astype(f32), W2.astype(f32), b2.astype(f32))

    pooled = pooled_p[:, :N, :N] if Np != N else pooled_p
    flat = pooled.reshape(B, N * N)
    # Final nn.Linear(N*N, 1) in the wrapper: trivial dot, fused by XLA; avoids an in-kernel
    # cross-lane reduction and an extra Wf DMA (flat is returned anyway).
    logits = flat @ params["Wf"].T + params["bf"]
    return logits, flat


def ref_forward(ten, params):
    """Pure-JAX reference mirroring the PyTorch forward (all f32)."""
    W1, b1, W2, b2 = params["W1"], params["b1"], params["W2"], params["b2"]
    B, S, N, _ = ten.shape
    h = jnp.einsum("bkij,kjl->bkil", ten, W1,
                   preferred_element_type=jnp.float32) + b1.reshape(1, S, 1, N)
    h = _leaky(h)
    x = jnp.einsum("bkij,kjl->bkil", h, W2,
                   preferred_element_type=jnp.float32) + b2.reshape(1, S, 1, N)
    x = _leaky(x)
    pooled = jax.nn.sigmoid(jnp.max(x, axis=1))          # (B, N, N)
    flat = pooled.reshape(B, N * N)
    logits = flat @ params["Wf"].T + params["bf"]
    return logits, flat


def make_params(key, slices, num_nodes):
    ks = jax.random.split(key, 6)
    S, N = slices, num_nodes
    return {
        "W1": jax.random.normal(ks[0], (S, N, N), jnp.float32) * 0.05,
        "b1": jax.random.normal(ks[1], (S, 1, N), jnp.float32) * 0.05,
        "W2": jax.random.normal(ks[2], (S, N, N), jnp.float32) * 0.05,
        "b2": jax.random.normal(ks[3], (S, 1, N), jnp.float32) * 0.05,
        # nn.Linear(N*N, 1): weight (1, N*N), bias (1,)
        "Wf": jax.random.normal(ks[4], (1, N * N), jnp.float32) * 0.01,
        "bf": jnp.full((1,), 0.1, jnp.float32),
    }


if __name__ == "__main__":
    # Small shapes consistent with the module (num_nodes scaled down to an MXU-friendly 128).
    B, S, N = 4, 4, 128
    key = jax.random.PRNGKey(0)
    kp, kx = jax.random.split(key)
    params = make_params(kp, S, N)
    ten = jax.random.normal(kx, (B, S, N, N), jnp.float32)

    logits, flat = jax.block_until_ready(discriminator_forward(ten, params))
    ref_logits, ref_flat = ref_forward(ten, params)

    np.testing.assert_allclose(np.asarray(flat), np.asarray(ref_flat),
                               rtol=1e-4, atol=1e-4)
    np.testing.assert_allclose(np.asarray(logits), np.asarray(ref_logits),
                               rtol=1e-4, atol=1e-4)

    print("KERNEL_OK")
</pallas_src>

<mosaic_0001>
module attributes {stable_mosaic.version = 11 : i64} {
  func.func @gcn_disc_kernel(%arg0: i32, %arg1: memref<2x4x128x128xf32, #tpu.memory_space<vmem>>, %arg2: memref<4x128x128xf32, #tpu.memory_space<vmem>>, %arg3: memref<4x1x128xf32, #tpu.memory_space<vmem>>, %arg4: memref<4x128x128xf32, #tpu.memory_space<vmem>>, %arg5: memref<4x1x128xf32, #tpu.memory_space<vmem>>, %arg6: memref<2x128x128xf32, #tpu.memory_space<vmem>>) attributes {dimension_semantics = [#tpu.dimension_semantics<parallel>], iteration_bounds = array<i64: 2>, scalar_prefetch = 0 : i64, scratch_operands = 0 : i64, tpu.core_type = #tpu.core_type<tc>, window_params = [{transform_indices = @transform_0, window_bounds = array<i64: 2, 4, 128, 128>}, {pipeline_mode = #tpu.pipeline_mode<synchronous>, transform_indices = @transform_1, window_bounds = array<i64: 4, 128, 128>}, {pipeline_mode = #tpu.pipeline_mode<synchronous>, transform_indices = @transform_2, window_bounds = array<i64: 4, 1, 128>}, {pipeline_mode = #tpu.pipeline_mode<synchronous>, transform_indices = @transform_3, window_bounds = array<i64: 4, 128, 128>}, {pipeline_mode = #tpu.pipeline_mode<synchronous>, transform_indices = @transform_4, window_bounds = array<i64: 4, 1, 128>}, {transform_indices = @transform_5, window_bounds = array<i64: 2, 128, 128>}]} {
    %c0 = arith.constant 0 : index
    %c0_0 = arith.constant 0 : index
    %c0_1 = arith.constant 0 : index
    %c0_2 = arith.constant 0 : index
    %0 = vector.load %arg1[%c0, %c0_0, %c0_1, %c0_2] : memref<2x4x128x128xf32, #tpu.memory_space<vmem>>, vector<2x1x128x128xf32>
    %1 = vector.shape_cast %0 : vector<2x1x128x128xf32> to vector<2x128x128xf32>
    %2 = vector.shape_cast %1 : vector<2x128x128xf32> to vector<256x128xf32>
    %c0_3 = arith.constant 0 : index
    %c0_4 = arith.constant 0 : index
    %c0_5 = arith.constant 0 : index
    %3 = vector.load %arg2[%c0_3, %c0_4, %c0_5] : memref<4x128x128xf32, #tpu.memory_space<vmem>>, vector<1x128x128xf32>
    %4 = vector.shape_cast %3 : vector<1x128x128xf32> to vector<128x128xf32>
    %cst = arith.constant dense<0.000000e+00> : vector<256x128xf32>
    %5 = tpu.matmul %2, %4, %cst {dimension_numbers = #tpu.dot_dimension_numbers<[1], [0], [0], [1], [0, 0, 1, 1], [], []>} : vector<256x128xf32>, vector<128x128xf32>, vector<256x128xf32> -> vector<256x128xf32>
    %c0_6 = arith.constant 0 : index
    %c0_7 = arith.constant 0 : index
    %c0_8 = arith.constant 0 : index
    %6 = vector.load %arg3[%c0_6, %c0_7, %c0_8] : memref<4x1x128xf32, #tpu.memory_space<vmem>>, vector<1x1x128xf32>
    %7 = vector.shape_cast %6 : vector<1x1x128xf32> to vector<1x128xf32>
    %8 = vector.broadcast %7 : vector<1x128xf32> to vector<256x128xf32>
    %9 = arith.addf %5, %8 : vector<256x128xf32>
    %cst_9 = arith.constant 0.000000e+00 : f32
    %10 = vector.broadcast %cst_9 : f32 to vector<256x128xf32>
    %11 = arith.cmpf oge, %9, %10 : vector<256x128xf32>
    %cst_10 = arith.constant 0.00999999977 : f32
    %12 = vector.broadcast %cst_10 : f32 to vector<256x128xf32>
    %13 = arith.mulf %12, %9 : vector<256x128xf32>
    %14 = arith.select %11, %9, %13 : vector<256x128xi1>, vector<256x128xf32>
    %c0_11 = arith.constant 0 : index
    %c0_12 = arith.constant 0 : index
    %c0_13 = arith.constant 0 : index
    %15 = vector.load %arg4[%c0_11, %c0_12, %c0_13] : memref<4x128x128xf32, #tpu.memory_space<vmem>>, vector<1x128x128xf32>
    %16 = vector.shape_cast %15 : vector<1x128x128xf32> to vector<128x128xf32>
    %cst_14 = arith.constant dense<0.000000e+00> : vector<256x128xf32>
    %17 = tpu.matmul %14, %16, %cst_14 {dimension_numbers = #tpu.dot_dimension_numbers<[1], [0], [0], [1], [0, 0, 1, 1], [], []>} : vector<256x128xf32>, vector<128x128xf32>, vector<256x128xf32> -> vector<256x128xf32>
    %c0_15 = arith.constant 0 : index
    %c0_16 = arith.constant 0 : index
    %c0_17 = arith.constant 0 : index
    %18 = vector.load %arg5[%c0_15, %c0_16, %c0_17] : memref<4x1x128xf32, #tpu.memory_space<vmem>>, vector<1x1x128xf32>
    %19 = vector.shape_cast %18 : vector<1x1x128xf32> to vector<1x128xf32>
    %20 = vector.broadcast %19 : vector<1x128xf32> to vector<256x128xf32>
    %21 = arith.addf %17, %20 : vector<256x128xf32>
    %cst_18 = arith.constant 0.000000e+00 : f32
    %22 = vector.broadcast %cst_18 : f32 to vector<256x128xf32>
    %23 = arith.cmpf oge, %21, %22 : vector<256x128xf32>
    %cst_19 = arith.constant 0.00999999977 : f32
    %24 = vector.broadcast %cst_19 : f32 to vector<256x128xf32>
    %25 = arith.mulf %24, %21 : vector<256x128xf32>
    %26 = arith.select %23, %21, %25 : vector<256x128xi1>, vector<256x128xf32>
    %27 = vector.shape_cast %26 : vector<256x128xf32> to vector<2x128x128xf32>
    %c1_i32 = arith.constant 1 : i32
    %c0_20 = arith.constant 0 : index
    %28 = arith.index_cast %c1_i32 : i32 to index
    %c0_21 = arith.constant 0 : index
    %c0_22 = arith.constant 0 : index
    %29 = vector.load %arg1[%c0_20, %28, %c0_21, %c0_22] : memref<2x4x128x128xf32, #tpu.memory_space<vmem>>, vector<2x1x128x128xf32>
    %30 = vector.shape_cast %29 : vector<2x1x128x128xf32> to vector<2x128x128xf32>
    %31 = vector.shape_cast %30 : vector<2x128x128xf32> to vector<256x128xf32>
    %32 = arith.index_cast %c1_i32 : i32 to index
    %c0_23 = arith.constant 0 : index
    %c0_24 = arith.constant 0 : index
    %33 = vector.load %arg2[%32, %c0_23, %c0_24] : memref<4x128x128xf32, #tpu.memory_space<vmem>>, vector<1x128x128xf32>
    %34 = vector.shape_cast %33 : vector<1x128x128xf32> to vector<128x128xf32>
    %cst_25 = arith.constant dense<0.000000e+00> : vector<256x128xf32>
    %35 = tpu.matmul %31, %34, %cst_25 {dimension_numbers = #tpu.dot_dimension_numbers<[1], [0], [0], [1], [0, 0, 1, 1], [], []>} : vector<256x128xf32>, vector<128x128xf32>, vector<256x128xf32> -> vector<256x128xf32>
    %36 = arith.index_cast %c1_i32 : i32 to index
    %c0_26 = arith.constant 0 : index
    %c0_27 = arith.constant 0 : index
    %37 = vector.load %arg3[%36, %c0_26, %c0_27] : memref<4x1x128xf32, #tpu.memory_space<vmem>>, vector<1x1x128xf32>
    %38 = vector.shape_cast %37 : vector<1x1x128xf32> to vector<1x128xf32>
    %39 = vector.broadcast %38 : vector<1x128xf32> to vector<256x128xf32>
    %40 = arith.addf %35, %39 : vector<256x128xf32>
    %cst_28 = arith.constant 0.000000e+00 : f32
    %41 = vector.broadcast %cst_28 : f32 to vector<256x128xf32>
    %42 = arith.cmpf oge, %40, %41 : vector<256x128xf32>
    %cst_29 = arith.constant 0.00999999977 : f32
    %43 = vector.broadcast %cst_29 : f32 to vector<256x128xf32>
    %44 = arith.mulf %43, %40 : vector<256x128xf32>
    %45 = arith.select %42, %40, %44 : vector<256x128xi1>, vector<256x128xf32>
    %46 = arith.index_cast %c1_i32 : i32 to index
    %c0_30 = arith.constant 0 : index
    %c0_31 = arith.constant 0 : index
    %47 = vector.load %arg4[%46, %c0_30, %c0_31] : memref<4x128x128xf32, #tpu.memory_space<vmem>>, vector<1x128x128xf32>
    %48 = vector.shape_cast %47 : vector<1x128x128xf32> to vector<128x128xf32>
    %cst_32 = arith.constant dense<0.000000e+00> : vector<256x128xf32>
    %49 = tpu.matmul %45, %48, %cst_32 {dimension_numbers = #tpu.dot_dimension_numbers<[1], [0], [0], [1], [0, 0, 1, 1], [], []>} : vector<256x128xf32>, vector<128x128xf32>, vector<256x128xf32> -> vector<256x128xf32>
    %50 = arith.index_cast %c1_i32 : i32 to index
    %c0_33 = arith.constant 0 : index
    %c0_34 = arith.constant 0 : index
    %51 = vector.load %arg5[%50, %c0_33, %c0_34] : memref<4x1x128xf32, #tpu.memory_space<vmem>>, vector<1x1x128xf32>
    %52 = vector.shape_cast %51 : vector<1x1x128xf32> to vector<1x128xf32>
    %53 = vector.broadcast %52 : vector<1x128xf32> to vector<256x128xf32>
    %54 = arith.addf %49, %53 : vector<256x128xf32>
    %cst_35 = arith.constant 0.000000e+00 : f32
    %55 = vector.broadcast %cst_35 : f32 to vector<256x128xf32>
    %56 = arith.cmpf oge, %54, %55 : vector<256x128xf32>
    %cst_36 = arith.constant 0.00999999977 : f32
    %57 = vector.broadcast %cst_36 : f32 to vector<256x128xf32>
    %58 = arith.mulf %57, %54 : vector<256x128xf32>
    %59 = arith.select %56, %54, %58 : vector<256x128xi1>, vector<256x128xf32>
    %60 = vector.shape_cast %59 : vector<256x128xf32> to vector<2x128x128xf32>
    %61 = arith.maximumf %27, %60 : vector<2x128x128xf32>
    %c2_i32 = arith.constant 2 : i32
    %c0_37 = arith.constant 0 : index
    %62 = arith.index_cast %c2_i32 : i32 to index
    %c0_38 = arith.constant 0 : index
    %c0_39 = arith.constant 0 : index
    %63 = vector.load %arg1[%c0_37, %62, %c0_38, %c0_39] : memref<2x4x128x128xf32, #tpu.memory_space<vmem>>, vector<2x1x128x128xf32>
    %64 = vector.shape_cast %63 : vector<2x1x128x128xf32> to vector<2x128x128xf32>
    %65 = vector.shape_cast %64 : vector<2x128x128xf32> to vector<256x128xf32>
    %66 = arith.index_cast %c2_i32 : i32 to index
    %c0_40 = arith.constant 0 : index
    %c0_41 = arith.constant 0 : index
    %67 = vector.load %arg2[%66, %c0_40, %c0_41] : memref<4x128x128xf32, #tpu.memory_space<vmem>>, vector<1x128x128xf32>
    %68 = vector.shape_cast %67 : vector<1x128x128xf32> to vector<128x128xf32>
    %cst_42 = arith.constant dense<0.000000e+00> : vector<256x128xf32>
    %69 = tpu.matmul %65, %68, %cst_42 {dimension_numbers = #tpu.dot_dimension_numbers<[1], [0], [0], [1], [0, 0, 1, 1], [], []>} : vector<256x128xf32>, vector<128x128xf32>, vector<256x128xf32> -> vector<256x128xf32>
    %70 = arith.index_cast %c2_i32 : i32 to index
    %c0_43 = arith.constant 0 : index
    %c0_44 = arith.constant 0 : index
    %71 = vector.load %arg3[%70, %c0_43, %c0_44] : memref<4x1x128xf32, #tpu.memory_space<vmem>>, vector<1x1x128xf32>
    %72 = vector.shape_cast %71 : vector<1x1x128xf32> to vector<1x128xf32>
    %73 = vector.broadcast %72 : vector<1x128xf32> to vector<256x128xf32>
    %74 = arith.addf %69, %73 : vector<256x128xf32>
    %cst_45 = arith.constant 0.000000e+00 : f32
    %75 = vector.broadcast %cst_45 : f32 to vector<256x128xf32>
    %76 = arith.cmpf oge, %74, %75 : vector<256x128xf32>
    %cst_46 = arith.constant 0.00999999977 : f32
    %77 = vector.broadcast %cst_46 : f32 to vector<256x128xf32>
    %78 = arith.mulf %77, %74 : vector<256x128xf32>
    %79 = arith.select %76, %74, %78 : vector<256x128xi1>, vector<256x128xf32>
    %80 = arith.index_cast %c2_i32 : i32 to index
    %c0_47 = arith.constant 0 : index
    %c0_48 = arith.constant 0 : index
    %81 = vector.load %arg4[%80, %c0_47, %c0_48] : memref<4x128x128xf32, #tpu.memory_space<vmem>>, vector<1x128x128xf32>
    %82 = vector.shape_cast %81 : vector<1x128x128xf32> to vector<128x128xf32>
    %cst_49 = arith.constant dense<0.000000e+00> : vector<256x128xf32>
    %83 = tpu.matmul %79, %82, %cst_49 {dimension_numbers = #tpu.dot_dimension_numbers<[1], [0], [0], [1], [0, 0, 1, 1], [], []>} : vector<256x128xf32>, vector<128x128xf32>, vector<256x128xf32> -> vector<256x128xf32>
    %84 = arith.index_cast %c2_i32 : i32 to index
    %c0_50 = arith.constant 0 : index
    %c0_51 = arith.constant 0 : index
    %85 = vector.load %arg5[%84, %c0_50, %c0_51] : memref<4x1x128xf32, #tpu.memory_space<vmem>>, vector<1x1x128xf32>
    %86 = vector.shape_cast %85 : vector<1x1x128xf32> to vector<1x128xf32>
    %87 = vector.broadcast %86 : vector<1x128xf32> to vector<256x128xf32>
    %88 = arith.addf %83, %87 : vector<256x128xf32>
    %cst_52 = arith.constant 0.000000e+00 : f32
    %89 = vector.broadcast %cst_52 : f32 to vector<256x128xf32>
    %90 = arith.cmpf oge, %88, %89 : vector<256x128xf32>
    %cst_53 = arith.constant 0.00999999977 : f32
    %91 = vector.broadcast %cst_53 : f32 to vector<256x128xf32>
    %92 = arith.mulf %91, %88 : vector<256x128xf32>
    %93 = arith.select %90, %88, %92 : vector<256x128xi1>, vector<256x128xf32>
    %94 = vector.shape_cast %93 : vector<256x128xf32> to vector<2x128x128xf32>
    %95 = arith.maximumf %61, %94 : vector<2x128x128xf32>
    %c3_i32 = arith.constant 3 : i32
    %c0_54 = arith.constant 0 : index
    %96 = arith.index_cast %c3_i32 : i32 to index
    %c0_55 = arith.constant 0 : index
    %c0_56 = arith.constant 0 : index
    %97 = vector.load %arg1[%c0_54, %96, %c0_55, %c0_56] : memref<2x4x128x128xf32, #tpu.memory_space<vmem>>, vector<2x1x128x128xf32>
    %98 = vector.shape_cast %97 : vector<2x1x128x128xf32> to vector<2x128x128xf32>
    %99 = vector.shape_cast %98 : vector<2x128x128xf32> to vector<256x128xf32>
    %100 = arith.index_cast %c3_i32 : i32 to index
    %c0_57 = arith.constant 0 : index
    %c0_58 = arith.constant 0 : index
    %101 = vector.load %arg2[%100, %c0_57, %c0_58] : memref<4x128x128xf32, #tpu.memory_space<vmem>>, vector<1x128x128xf32>
    %102 = vector.shape_cast %101 : vector<1x128x128xf32> to vector<128x128xf32>
    %cst_59 = arith.constant dense<0.000000e+00> : vector<256x128xf32>
    %103 = tpu.matmul %99, %102, %cst_59 {dimension_numbers = #tpu.dot_dimension_numbers<[1], [0], [0], [1], [0, 0, 1, 1], [], []>} : vector<256x128xf32>, vector<128x128xf32>, vector<256x128xf32> -> vector<256x128xf32>
    %104 = arith.index_cast %c3_i32 : i32 to index
    %c0_60 = arith.constant 0 : index
    %c0_61 = arith.constant 0 : index
    %105 = vector.load %arg3[%104, %c0_60, %c0_61] : memref<4x1x128xf32, #tpu.memory_space<vmem>>, vector<1x1x128xf32>
    %106 = vector.shape_cast %105 : vector<1x1x128xf32> to vector<1x128xf32>
    %107 = vector.broadcast %106 : vector<1x128xf32> to vector<256x128xf32>
    %108 = arith.addf %103, %107 : vector<256x128xf32>
    %cst_62 = arith.constant 0.000000e+00 : f32
    %109 = vector.broadcast %cst_62 : f32 to vector<256x128xf32>
    %110 = arith.cmpf oge, %108, %109 : vector<256x128xf32>
    %cst_63 = arith.constant 0.00999999977 : f32
    %111 = vector.broadcast %cst_63 : f32 to vector<256x128xf32>
    %112 = arith.mulf %111, %108 : vector<256x128xf32>
    %113 = arith.select %110, %108, %112 : vector<256x128xi1>, vector<256x128xf32>
    %114 = arith.index_cast %c3_i32 : i32 to index
    %c0_64 = arith.constant 0 : index
    %c0_65 = arith.constant 0 : index
    %115 = vector.load %arg4[%114, %c0_64, %c0_65] : memref<4x128x128xf32, #tpu.memory_space<vmem>>, vector<1x128x128xf32>
    %116 = vector.shape_cast %115 : vector<1x128x128xf32> to vector<128x128xf32>
    %cst_66 = arith.constant dense<0.000000e+00> : vector<256x128xf32>
    %117 = tpu.matmul %113, %116, %cst_66 {dimension_numbers = #tpu.dot_dimension_numbers<[1], [0], [0], [1], [0, 0, 1, 1], [], []>} : vector<256x128xf32>, vector<128x128xf32>, vector<256x128xf32> -> vector<256x128xf32>
    %118 = arith.index_cast %c3_i32 : i32 to index
    %c0_67 = arith.constant 0 : index
    %c0_68 = arith.constant 0 : index
    %119 = vector.load %arg5[%118, %c0_67, %c0_68] : memref<4x1x128xf32, #tpu.memory_space<vmem>>, vector<1x1x128xf32>
    %120 = vector.shape_cast %119 : vector<1x1x128xf32> to vector<1x128xf32>
    %121 = vector.broadcast %120 : vector<1x128xf32> to vector<256x128xf32>
    %122 = arith.addf %117, %121 : vector<256x128xf32>
    %cst_69 = arith.constant 0.000000e+00 : f32
    %123 = vector.broadcast %cst_69 : f32 to vector<256x128xf32>
    %124 = arith.cmpf oge, %122, %123 : vector<256x128xf32>
    %cst_70 = arith.constant 0.00999999977 : f32
    %125 = vector.broadcast %cst_70 : f32 to vector<256x128xf32>
    %126 = arith.mulf %125, %122 : vector<256x128xf32>
    %127 = arith.select %124, %122, %126 : vector<256x128xi1>, vector<256x128xf32>
    %128 = vector.shape_cast %127 : vector<256x128xf32> to vector<2x128x128xf32>
    %129 = arith.maximumf %95, %128 : vector<2x128x128xf32>
    %c3_i32_71 = arith.constant 3 : i32
    %130 = arith.negf %129 : vector<2x128x128xf32>
    %131 = math.exp %130 : vector<2x128x128xf32>
    %cst_72 = arith.constant 1.000000e+00 : f32
    %132 = vector.broadcast %cst_72 : f32 to vector<2x128x128xf32>
    %133 = arith.addf %132, %131 : vector<2x128x128xf32>
    %134 = arith.divf %132, %133 : vector<2x128x128xf32>
    %c0_73 = arith.constant 0 : index
    %c0_74 = arith.constant 0 : index
    %c0_75 = arith.constant 0 : index
    %135 = vector.load %arg6[%c0_73, %c0_74, %c0_75] : memref<2x128x128xf32, #tpu.memory_space<vmem>>, vector<2x128x128xf32>
    tpu.vector_store %arg6[%c0_73, %c0_74, %c0_75], %134 {strides = array<i32>} : memref<2x128x128xf32, #tpu.memory_space<vmem>>, vector<2x128x128xf32>,
    return
  }
  func.func @transform_0(%arg0: i32) -> (i32, i32, i32, i32) {
    %c0_i32 = arith.constant 0 : i32
    %c0_i32_0 = arith.constant 0 : i32
    %c0_i32_1 = arith.constant 0 : i32
    %c0_i32_2 = arith.constant 0 : i32
    return %arg0, %c0_i32, %c0_i32_0, %c0_i32_1 : i32, i32, i32, i32
  }
  func.func @transform_1(%arg0: i32) -> (i32, i32, i32) {
    %c0_i32 = arith.constant 0 : i32
    %c0_i32_0 = arith.constant 0 : i32
    %c0_i32_1 = arith.constant 0 : i32
    %c0_i32_2 = arith.constant 0 : i32
    return %c0_i32, %c0_i32_0, %c0_i32_1 : i32, i32, i32
  }
  func.func @transform_2(%arg0: i32) -> (i32, i32, i32) {
    %c0_i32 = arith.constant 0 : i32
    %c0_i32_0 = arith.constant 0 : i32
    %c0_i32_1 = arith.constant 0 : i32
    %c0_i32_2 = arith.constant 0 : i32
    return %c0_i32, %c0_i32_0, %c0_i32_1 : i32, i32, i32
  }
  func.func @transform_3(%arg0: i32) -> (i32, i32, i32) {
    %c0_i32 = arith.constant 0 : i32
    %c0_i32_0 = arith.constant 0 : i32
    %c0_i32_1 = arith.constant 0 : i32
    %c0_i32_2 = arith.constant 0 : i32
    return %c0_i32, %c0_i32_0, %c0_i32_1 : i32, i32, i32
  }
  func.func @transform_4(%arg0: i32) -> (i32, i32, i32) {
    %c0_i32 = arith.constant 0 : i32
    %c0_i32_0 = arith.constant 0 : i32
    %c0_i32_1 = arith.constant 0 : i32
    %c0_i32_2 = arith.constant 0 : i32
    return %c0_i32, %c0_i32_0, %c0_i32_1 : i32, i32, i32
  }
  func.func @transform_5(%arg0: i32) -> (i32, i32, i32) {
    %c0_i32 = arith.constant 0 : i32
    %c0_i32_0 = arith.constant 0 : i32
    %c0_i32_1 = arith.constant 0 : i32
    return %arg0, %c0_i32, %c0_i32_0 : i32, i32, i32
  }
}

</mosaic_0001>

<llo_original>
// kernel: tpu_custom_call.1
$region0: #{tpu_custom_call.1}
  #allocation0 [shape = 'u32[]', space=smem, size = 0x4, offset = 0x4, fixed_abs, tag = 'smem constant byte address 0x4 - core index']
  #allocation1 [shape = 'u32[144,128]{1,0:T(1,128)}', space=vmem, size = 0x12000, scoped, tag = 'internal scratch']
  %s0 = inlined_call_operand.hbm [shape: f32[4,4,128,128], index: 0, kind: input, shape index: {}]
  %s1 = inlined_call_operand.hbm [shape: f32[4,128,128], index: 1, kind: input, shape index: {}]
  %s2 = inlined_call_operand.vmem [shape: f32[4,1,128], index: 2, kind: input, shape index: {}]
  %s3 = inlined_call_operand.hbm [shape: f32[4,128,128], index: 3, kind: input, shape index: {}]
  %s4 = inlined_call_operand.vmem [shape: f32[4,1,128], index: 4, kind: input, shape index: {}]
  %s5 = inlined_call_operand.hbm [shape: f32[4,128,128], index: 5, kind: output, shape index: {}]
  %s6 = sld [smem:[#allocation0]]
  $region65: #{tpu_custom_call.1} parent=0
    _
  %s8 = ssub.s32 1, %s6
  %s9 = scalar_select 0, %s8, %s6
  $region1: #{tpu_custom_call.1} parent=0
    #allocation2 [shape = 'u8[1048576]{0}', space=vmem, size = 0x100000, scoped, tag = 'input window, operand 0']
    #allocation3 [shape = 's32[2]{0}', space=sflag, size = 0x8, scoped, tag = 'scoped memory for tpu_custom_call.1']
    #allocation4 [shape = 's32[2]{0}', space=sflag, size = 0x8, scoped, tag = 'scoped memory for tpu_custom_call.1']
    #allocation5 [shape = 'u8[262144]{0}', space=vmem, size = 0x40000, scoped, tag = 'input window, operand 1, single buffered']
    #allocation6 [shape = 's32[1]{0}', space=sflag, size = 0x4, scoped, tag = 'scoped memory for tpu_custom_call.1']
    #allocation7 [shape = 'u8[262144]{0}', space=vmem, size = 0x40000, scoped, tag = 'input window, operand 3, single buffered']
    #allocation8 [shape = 'u8[262144]{0}', space=vmem, size = 0x40000, scoped, tag = 'output window, operand 0']
    %10 = vsyncpa [#allocation3], 0
    %s11 = scalar_lea.sflag [#allocation3], 1
    %12 = vsyncpa %s11, 0
    %13 = vsyncpa [#allocation6], 0
    %14 = vsyncpa [#allocation4], 0
    %s15 = scalar_lea.sflag [#allocation4], 1
    %16 = vsyncpa %s15, 0
    loop: start=0, step=1, limit=4
    $region2: #{tpu_custom_call.1} parent=1 // loop_pre_header
      _
    $region3: #{tpu_custom_call.1} parent=1 // loop_header
      %s18 = sphi 0, %s22
      %p19 = scmp.ge.s32.totalorder %s18, 4
      %s28 = sphi 0, %s30
      %s31 = sphi 0, %s28
      %s32 = sphi 0, %s31
      %s48 = sphi 0, %s32
      %s52 = sphi 0, %s52
      %s54 = sphi 0, %s52
      %s55 = sphi 0, %s54
      %s69 = sphi 0, %s55
      %s73 = sphi 0, %s73
      %s75 = sphi 0, %s73
      %s76 = sphi 0, %s75
      %s90 = sphi 0, %s76
      %s94 = sphi 0, %s94
      %s96 = sphi 0, %s94
      %s97 = sphi 0, %s96
      %s111 = sphi 0, %s97
      %s115 = sphi 0, %s115
      %s117 = sphi 0, %s115
      %s118 = sphi 0, %s117
      %s132 = sphi 0, %s118
      %s138 = sphi 0, %s140
      %s141 = sphi 0, %s138
      %s142 = sphi 0, %s141
      %s158 = sphi 0, %s142
    $region4: #{tpu_custom_call.1} parent=1 // loop_header_branch
      %21 = sbr.rel (%p19) target = $region8
    $region5: #{tpu_custom_call.1} parent=1 // loop_body
      %s23 = ssub.s32 %s18, 1
      %s24 = ssub.s32 %s18, 2
      %s25 = sadd.s32 %s18, 1
      %s26 = ssub.s32 %s18, %s25
      %p27 = scmp.eq.s32.totalorder %s26, 0
      %s29 = sadd.s32 %s28, 1
      %s30 = scalar_select %p27, %s28, %s29
      %p33 = pneg %p27
      %p34 = scmp.eq.s32.totalorder %s18, 1
      %p35 = por %p33, %p34
      %p36 = scmp.ne.s32.totalorder %s28, %s31
      %p37 = scmp.eq.s32.totalorder %s18, 0
      %p38 = por %p36, %p37
      %p39 = scmp.ne.s32.totalorder %s28, %s31
      %p40 = scmp.eq.s32.totalorder %s23, 1
      %p41 = por %p39, %p40
      %p42 = scmp.ne.s32.totalorder %s31, %s32
      %p43 = scmp.eq.s32.totalorder %s23, 0
      %p44 = por %p42, %p43
      %p45 = scmp.ne.s32.totalorder %s31, %s32
      %p46 = scmp.eq.s32.totalorder %s24, 1
      %p47 = por %p45, %p46
      %p49 = scmp.ne.s32.totalorder %s32, %s48
      %p50 = scmp.eq.s32.totalorder %s24, 0
      %p51 = por %p49, %p50
      %s53 = sadd.s32 %s52, 1
      %p56 = scmp.eq.s32.totalorder %s18, 1
      %p57 = scmp.ne.s32.totalorder %s52, %s54
      %p58 = scmp.eq.s32.totalorder %s18, 0
      %p59 = por %p57, %p58
      %p60 = scmp.ne.s32.totalorder %s52, %s54
      %p61 = scmp.eq.s32.totalorder %s23, 1
      %p62 = por %p60, %p61
      %p63 = scmp.ne.s32.totalorder %s54, %s55
      %p64 = scmp.eq.s32.totalorder %s23, 0
      %p65 = por %p63, %p64
      %p66 = scmp.ne.s32.totalorder %s54, %s55
      %p67 = scmp.eq.s32.totalorder %s24, 1
      %p68 = por %p66, %p67
      %p70 = scmp.ne.s32.totalorder %s55, %s69
      %p71 = scmp.eq.s32.totalorder %s24, 0
      %p72 = por %p70, %p71
      %s74 = sadd.s32 %s73, 1
      %p77 = scmp.eq.s32.totalorder %s18, 1
      %p78 = scmp.ne.s32.totalorder %s73, %s75
      %p79 = scmp.eq.s32.totalorder %s18, 0
      %p80 = por %p78, %p79
      %p81 = scmp.ne.s32.totalorder %s73, %s75
      %p82 = scmp.eq.s32.totalorder %s23, 1
      %p83 = por %p81, %p82
      %p84 = scmp.ne.s32.totalorder %s75, %s76
      %p85 = scmp.eq.s32.totalorder %s23, 0
      %p86 = por %p84, %p85
      %p87 = scmp.ne.s32.totalorder %s75, %s76
      %p88 = scmp.eq.s32.totalorder %s24, 1
      %p89 = por %p87, %p88
      %p91 = scmp.ne.s32.totalorder %s76, %s90
      %p92 = scmp.eq.s32.totalorder %s24, 0
      %p93 = por %p91, %p92
      %s95 = sadd.s32 %s94, 1
      %p98 = scmp.eq.s32.totalorder %s18, 1
      %p99 = scmp.ne.s32.totalorder %s94, %s96
      %p100 = scmp.eq.s32.totalorder %s18, 0
      %p101 = por %p99, %p100
      %p102 = scmp.ne.s32.totalorder %s94, %s96
      %p103 = scmp.eq.s32.totalorder %s23, 1
      %p104 = por %p102, %p103
      %p105 = scmp.ne.s32.totalorder %s96, %s97
      %p106 = scmp.eq.s32.totalorder %s23, 0
      %p107 = por %p105, %p106
      %p108 = scmp.ne.s32.totalorder %s96, %s97
      %p109 = scmp.eq.s32.totalorder %s24, 1
      %p110 = por %p108, %p109
      %p112 = scmp.ne.s32.totalorder %s97, %s111
      %p113 = scmp.eq.s32.totalorder %s24, 0
      %p114 = por %p112, %p113
      %s116 = sadd.s32 %s115, 1
      %p119 = scmp.eq.s32.totalorder %s18, 1
      %p120 = scmp.ne.s32.totalorder %s115, %s117
      %p121 = scmp.eq.s32.totalorder %s18, 0
      %p122 = por %p120, %p121
      %p123 = scmp.ne.s32.totalorder %s115, %s117
      %p124 = scmp.eq.s32.totalorder %s23, 1
      %p125 = por %p123, %p124
      %p126 = scmp.ne.s32.totalorder %s117, %s118
      %p127 = scmp.eq.s32.totalorder %s23, 0
      %p128 = por %p126, %p127
      %p129 = scmp.ne.s32.totalorder %s117, %s118
      %p130 = scmp.eq.s32.totalorder %s24, 1
      %p131 = por %p129, %p130
      %p133 = scmp.ne.s32.totalorder %s118, %s132
      %p134 = scmp.eq.s32.totalorder %s24, 0
      %p135 = por %p133, %p134
      %s136 = ssub.s32 %s18, %s25
      %p137 = scmp.eq.s32.totalorder %s136, 0
      %s139 = sadd.s32 %s138, 1
      %s140 = scalar_select %p137, %s138, %s139
      %p143 = pneg %p137
      %p144 = scmp.eq.s32.totalorder %s18, 1
      %p145 = por %p143, %p144
      %p146 = scmp.ne.s32.totalorder %s138, %s141
      %p147 = scmp.eq.s32.totalorder %s18, 0
      %p148 = por %p146, %p147
      %p149 = scmp.ne.s32.totalorder %s138, %s141
      %p150 = scmp.eq.s32.totalorder %s23, 1
      %p151 = por %p149, %p150
      %p152 = scmp.ne.s32.totalorder %s141, %s142
      %p153 = scmp.eq.s32.totalorder %s23, 0
      %p154 = por %p152, %p153
      %p155 = scmp.ne.s32.totalorder %s141, %s142
      %p156 = scmp.eq.s32.totalorder %s24, 1
      %p157 = por %p155, %p156
      %p159 = scmp.ne.s32.totalorder %s142, %s158
      %p160 = scmp.eq.s32.totalorder %s24, 0
      %p161 = por %p159, %p160
      %p162 = scmp.le.s32.totalorder 1, %s18
      %p163 = scmp.lt.s32.totalorder %s18, 3
      %p164 = pnand %p162, %p163
      %p165 = pneg %p164
      // Predicated region
      $region9: #{tpu_custom_call.1} parent=5 // pred_check
        _
      $region10: #{tpu_custom_call.1} parent=5 // pred_check_branch
        %167 = sbr.rel (%p164) target = $region12
      $region11: #{tpu_custom_call.1} parent=5 // pred_region
        %s168 = ssub.s32 %s18, 1
        // Predicated region
        $region13: #{tpu_custom_call.1} parent=11 // pred_check
          %p169 = pneg %p65
        $region14: #{tpu_custom_call.1} parent=11 // pred_check_branch
          %171 = sbr.rel (%p169) target = $region16
        $region15: #{tpu_custom_call.1} parent=11 // pred_region
          %s173 = ssub.s32 8192, 8192
          %174 = vsyncadd [#allocation6], %s173
          %s175 = sshll.u32 [#allocation5], 4
          %s176 = int_to_ptr.vmem [resolvable:$true] %s175
          %181 = dma.hbm_to_vmem [thread:$0]  %s1, 8192, %s176, [#allocation6], 128, 128, 8
        $region16: #{tpu_custom_call.1} parent=11 // pred_fallthru
          _
        // Predicated region
        $region17: #{tpu_custom_call.1} parent=11 // pred_check
          %p182 = pneg %p86
        $region18: #{tpu_custom_call.1} parent=11 // pred_check_branch
          %184 = sbr.rel (%p182) target = $region20
        $region19: #{tpu_custom_call.1} parent=11 // pred_region
          _
        $region20: #{tpu_custom_call.1} parent=11 // pred_fallthru
          _
        // Predicated region
        $region21: #{tpu_custom_call.1} parent=11 // pred_check
          %p185 = pneg %p107
        $region22: #{tpu_custom_call.1} parent=11 // pred_check_branch
          %187 = sbr.rel (%p185) target = $region24
        $region23: #{tpu_custom_call.1} parent=11 // pred_region
          %s189 = ssub.s32 8192, 8192
          %190 = vsyncadd [#allocation6], %s189
          %s191 = sshll.u32 [#allocation7], 4
          %s192 = int_to_ptr.vmem [resolvable:$true] %s191
          %197 = dma.hbm_to_vmem [thread:$0]  %s3, 8192, %s192, [#allocation6], 128, 128, 8
        $region24: #{tpu_custom_call.1} parent=11 // pred_fallthru
          _
        // Predicated region
        $region25: #{tpu_custom_call.1} parent=11 // pred_check
          %p198 = pneg %p128
        $region26: #{tpu_custom_call.1} parent=11 // pred_check_branch
          %200 = sbr.rel (%p198) target = $region28
        $region27: #{tpu_custom_call.1} parent=11 // pred_region
          _
        $region28: #{tpu_custom_call.1} parent=11 // pred_fallthru
          _
      $region12: #{tpu_custom_call.1} parent=5 // pred_fallthru
        _
      %p201 = scmp.lt.s32.totalorder %s18, 2
      // Predicated region
      $region29: #{tpu_custom_call.1} parent=5 // pred_check
        %p202 = pneg %p201
      $region30: #{tpu_custom_call.1} parent=5 // pred_check_branch
        %204 = sbr.rel (%p202) target = $region32
      $region31: #{tpu_custom_call.1} parent=5 // pred_region
        // Predicated region
        $region33: #{tpu_custom_call.1} parent=31 // pred_check
          %p205 = pneg %p38
        $region34: #{tpu_custom_call.1} parent=31 // pred_check_branch
          %207 = sbr.rel (%p205) target = $region36
        $region35: #{tpu_custom_call.1} parent=31 // pred_region
          %s208 = sand.u32 %s28, 1
          %s209 = scalar_lea.sflag [#allocation3], %s208
          %s210 = sand.u32 %s28, 1
          %s211 = smul.addr %s210, 1024
          %s212 = scalar_lea.vmem [#allocation2], %s211
          %s213 = smul.u32 2, %s18
          %s215 = ssub.s32 16384, 16384
          %216 = vsyncadd %s209, %s215
          %s217 = smul.addr %s213, 64
          %s218 = smul.addr %s217, 128
          %s219 = scalar_lea.hbm %s0, %s218
          %s220 = sshll.u32 %s212, 4
          %s221 = int_to_ptr.vmem [resolvable:$true] %s220
          %226 = dma.hbm_to_vmem [thread:$0]  %s219, 16384, %s221, %s209, 128, 128, 8
        $region36: #{tpu_custom_call.1} parent=31 // pred_fallthru
          _
      $region32: #{tpu_custom_call.1} parent=5 // pred_fallthru
        _
      %p227 = scmp.le.s32.totalorder 1, %s18
      %p228 = scmp.lt.s32.totalorder %s18, 3
      %p229 = pnand %p227, %p228
      %p230 = pneg %p229
      // Predicated region
      $region37: #{tpu_custom_call.1} parent=5 // pred_check
        _
      $region38: #{tpu_custom_call.1} parent=5 // pred_check_branch
        %232 = sbr.rel (%p229) target = $region40
      $region39: #{tpu_custom_call.1} parent=5 // pred_region
        %s233 = ssub.s32 %s18, 1
        %s234 = sand.u32 %s31, 1
        %s235 = scalar_lea.sflag [#allocation3], %s234
        %s236 = sand.u32 %s31, 1
        %s237 = smul.addr %s236, 1024
        %s238 = scalar_lea.vmem [#allocation2], %s237
        // Predicated region
        $region41: #{tpu_custom_call.1} parent=39 // pred_check
          %p239 = pneg %p44
        $region42: #{tpu_custom_call.1} parent=39 // pred_check_branch
          %241 = sbr.rel (%p239) target = $region44
        $region43: #{tpu_custom_call.1} parent=39 // pred_region
          %242 = dma.done %s235, 16384
        $region44: #{tpu_custom_call.1} parent=39 // pred_fallthru
          _
        // Predicated region
        $region45: #{tpu_custom_call.1} parent=39 // pred_check
          %p243 = pneg %p65
        $region46: #{tpu_custom_call.1} parent=39 // pred_check_branch
          %245 = sbr.rel (%p243) target = $region48
        $region47: #{tpu_custom_call.1} parent=39 // pred_region
          %246 = dma.done [#allocation6], 8192
        $region48: #{tpu_custom_call.1} parent=39 // pred_fallthru
          _
        // Predicated region
        $region49: #{tpu_custom_call.1} parent=39 // pred_check
          %p247 = pneg %p107
        $region50: #{tpu_custom_call.1} parent=39 // pred_check_branch
          %249 = sbr.rel (%p247) target = $region52
        $region51: #{tpu_custom_call.1} parent=39 // pred_region
          %250 = dma.done [#allocation6], 8192
        $region52: #{tpu_custom_call.1} parent=39 // pred_fallthru
          _
        %s251 = sand.u32 %s31, 1
        %s252 = scalar_lea.sflag [#allocation3], %s251
        %s253 = sand.u32 %s31, 1
        %s254 = smul.addr %s253, 1024
        %s255 = scalar_lea.vmem [#allocation2], %s254
        %p256 = pneg %p44
        %p257 = pneg %p41
        %p258 = pneg %p65
        %p259 = pneg %p62
        %p260 = pneg %p86
        %p261 = pneg %p83
        %p262 = pneg %p107
        %p263 = pneg %p104
        %p264 = pneg %p128
        %p265 = pneg %p125
        %p266 = pneg %p154
        %p267 = pneg %p151
        %s268 = sand.u32 %s141, 1
        %s269 = scalar_lea.sflag [#allocation4], %s268
        %s270 = sand.u32 %s141, 1
        %s271 = smul.addr %s270, 256
        %s272 = scalar_lea.vmem [#allocation8], %s271
        %s273 = smul.u32 2, %s23
        %s274 = smul.u32 2, %s23
        %v275 = vld [vmem:[%s238] sm:$0xff]
        %v276 = vld [vmem:[%s238 + $0x8] sm:$0xff]
        %v277 = vld [vmem:[%s238 + $0x10] sm:$0xff]
        %v278 = vld [vmem:[%s238 + $0x18] sm:$0xff]
        %v279 = vld [vmem:[%s238 + $0x20] sm:$0xff]
        %v280 = vld [vmem:[%s238 + $0x28] sm:$0xff]
        %v281 = vld [vmem:[%s238 + $0x30] sm:$0xff]
        %v282 = vld [vmem:[%s238 + $0x38] sm:$0xff]
        %v283 = vld [vmem:[%s238 + $0x40] sm:$0xff]
        %v284 = vld [vmem:[%s238 + $0x48] sm:$0xff]
        %v285 = vld [vmem:[%s238 + $0x50] sm:$0xff]
        %v286 = vld [vmem:[%s238 + $0x58] sm:$0xff]
        %v287 = vld [vmem:[%s238 + $0x60] sm:$0xff]
        %v288 = vld [vmem:[%s238 + $0x68] sm:$0xff]
        %v289 = vld [vmem:[%s238 + $0x70] sm:$0xff]
        %v290 = vld [vmem:[%s238 + $0x78] sm:$0xff]
        %v291 = vld [vmem:[%s238 + $0x200] sm:$0xff]
        %v292 = vld [vmem:[%s238 + $0x208] sm:$0xff]
        %v293 = vld [vmem:[%s238 + $0x210] sm:$0xff]
        %v294 = vld [vmem:[%s238 + $0x218] sm:$0xff]
        %v295 = vld [vmem:[%s238 + $0x220] sm:$0xff]
        %v296 = vld [vmem:[%s238 + $0x228] sm:$0xff]
        %v297 = vld [vmem:[%s238 + $0x230] sm:$0xff]
        %v298 = vld [vmem:[%s238 + $0x238] sm:$0xff]
        %v299 = vld [vmem:[%s238 + $0x240] sm:$0xff]
        %v300 = vld [vmem:[%s238 + $0x248] sm:$0xff]
        %v301 = vld [vmem:[%s238 + $0x250] sm:$0xff]
        %v302 = vld [vmem:[%s238 + $0x258] sm:$0xff]
        %v303 = vld [vmem:[%s238 + $0x260] sm:$0xff]
        %v304 = vld [vmem:[%s238 + $0x268] sm:$0xff]
        %v305 = vld [vmem:[%s238 + $0x270] sm:$0xff]
        %v306 = vld [vmem:[%s238 + $0x278] sm:$0xff]
        %v307 = vld [vmem:[#allocation5] sm:$0xff]
        %v308 = vld [vmem:[#allocation5 + $0x8] sm:$0xff]
        %v309 = vld [vmem:[#allocation5 + $0x10] sm:$0xff]
        %v310 = vld [vmem:[#allocation5 + $0x18] sm:$0xff]
        %v311 = vld [vmem:[#allocation5 + $0x20] sm:$0xff]
        %v312 = vld [vmem:[#allocation5 + $0x28] sm:$0xff]
        %v313 = vld [vmem:[#allocation5 + $0x30] sm:$0xff]
        %v314 = vld [vmem:[#allocation5 + $0x38] sm:$0xff]
        %v315 = vld [vmem:[#allocation5 + $0x40] sm:$0xff]
        %v316 = vld [vmem:[#allocation5 + $0x48] sm:$0xff]
        %v317 = vld [vmem:[#allocation5 + $0x50] sm:$0xff]
        %v318 = vld [vmem:[#allocation5 + $0x58] sm:$0xff]
        %v319 = vld [vmem:[#allocation5 + $0x60] sm:$0xff]
        %v320 = vld [vmem:[#allocation5 + $0x68] sm:$0xff]
        %v321 = vld [vmem:[#allocation5 + $0x70] sm:$0xff]
        %v322 = vld [vmem:[#allocation5 + $0x78] sm:$0xff]
        %v323 = vld [vmem:[%s2] sm:$0x1]
        %v325 = vlaneseq
        %v326 = vshrl.u32 %v325, 7
        %v327 = vsub.s32 0, %v326
        %v328 = vrot.slane %v323, %v327
        %330 = vmatprep.subr.mxu0 0.0
        %331 = vmatpush1.msra.mxu0 %v307
        %332 = vmatprep.subr.mxu0 0.0
        %333 = vmatpush1.msra.mxu0 %v308
        %334 = vmatprep.subr.mxu0 0.0
        %335 = vmatpush1.msra.mxu0 %v309
        %336 = vmatprep.subr.mxu0 0.0
        %337 = vmatpush1.msra.mxu0 %v310
        %338 = vmatprep.subr.mxu0 0.0
        %339 = vmatpush1.msra.mxu0 %v311
        %340 = vmatprep.subr.mxu0 0.0
        %341 = vmatpush1.msra.mxu0 %v312
        %342 = vmatprep.subr.mxu0 0.0
        %343 = vmatpush1.msra.mxu0 %v313
        %344 = vmatprep.subr.mxu0 0.0
        %345 = vmatpush1.msra.mxu0 %v314
        %346 = vmatprep.subr.mxu0 0.0
        %347 = vmatpush1.msra.mxu0 %v315
        %348 = vmatprep.subr.mxu0 0.0
        %349 = vmatpush1.msra.mxu0 %v316
        %350 = vmatprep.subr.mxu0 0.0
        %351 = vmatpush1.msra.mxu0 %v317
        %352 = vmatprep.subr.mxu0 0.0
        %353 = vmatpush1.msra.mxu0 %v318
        %354 = vmatprep.subr.mxu0 0.0
        %355 = vmatpush1.msra.mxu0 %v319
        %356 = vmatprep.subr.mxu0 0.0
        %357 = vmatpush1.msra.mxu0 %v320
        %358 = vmatprep.subr.mxu0 0.0
        %359 = vmatpush1.msra.mxu0 %v321
        %360 = vmatprep.subr.mxu0 0.0
        %361 = vmatpush1.msra.mxu0 %v322
        %362 = vmatprep.subr.mxu0 0.0
        %363 = vmatpush1.msra.mxu0 0.0
        %364 = vmatprep.subr.mxu0 0.0
        %365 = vmatpush1.msra.mxu0 0.0
        %366 = vmatprep.subr.mxu0 0.0
        %367 = vmatpush1.msra.mxu0 0.0
        %368 = vmatprep.subr.mxu0 0.0
        %369 = vmatpush1.msra.mxu0 0.0
        %370 = vmatprep.subr.mxu0 0.0
        %371 = vmatpush1.msra.mxu0 0.0
        %372 = vmatprep.subr.mxu0 0.0
        %373 = vmatpush1.msra.mxu0 0.0
        %374 = vmatprep.subr.mxu0 0.0
        %375 = vmatpush1.msra.mxu0 0.0
        %376 = vmatprep.subr.mxu0 0.0
        %377 = vmatpush1.msra.mxu0 0.0
        %378 = vmatprep.subr.mxu0 0.0
        %379 = vmatpush1.msra.mxu0 0.0
        %380 = vmatprep.subr.mxu0 0.0
        %381 = vmatpush1.msra.mxu0 0.0
        %382 = vmatprep.subr.mxu0 0.0
        %383 = vmatpush1.msra.mxu0 0.0
        %384 = vmatprep.subr.mxu0 0.0
        %385 = vmatpush1.msra.mxu0 0.0
        %386 = vmatprep.subr.mxu0 0.0
        %387 = vmatpush1.msra.mxu0 0.0
        %388 = vmatprep.subr.mxu0 0.0
        %389 = vmatpush1.msra.mxu0 0.0
        %390 = vmatprep.subr.mxu0 0.0
        %391 = vmatpush1.msra.mxu0 0.0
        %392 = vmatprep.subr.mxu0 0.0
        %393 = vmatpush1.msra.mxu0 0.0
        %394 = vmatprep.mubr.f32.mxu0 0.0
        %395 = vmatmul.mubr.f32.gmra.mrb[0].mxu0 %v275
        %v396 = vpop.f32.mrb[0].mxu0
        %v397 = vadd.f32 %v328, %v396
        %v398 = vpop.f32.mrb[0].mxu0
        %399 = vmatprep.mubr.f32.mxu0 0.0
        %400 = vmatmul.mubr.f32.gmra.mrb[0].mxu0 %v276
        %v401 = vpop.f32.mrb[0].mxu0
        %v402 = vadd.f32 %v328, %v401
        %v403 = vpop.f32.mrb[0].mxu0
        %404 = vmatprep.mubr.f32.mxu0 0.0
        %405 = vmatmul.mubr.f32.gmra.mrb[0].mxu0 %v277
        %v406 = vpop.f32.mrb[0].mxu0
        %v407 = vadd.f32 %v328, %v406
        %v408 = vpop.f32.mrb[0].mxu0
        %409 = vmatprep.mubr.f32.mxu0 0.0
        %410 = vmatmul.mubr.f32.gmra.mrb[0].mxu0 %v278
        %v411 = vpop.f32.mrb[0].mxu0
        %v412 = vadd.f32 %v328, %v411
        %v413 = vpop.f32.mrb[0].mxu0
        %414 = vmatprep.mubr.f32.mxu0 0.0
        %415 = vmatmul.mubr.f32.gmra.mrb[0].mxu0 %v279
        %v416 = vpop.f32.mrb[0].mxu0
        %v417 = vadd.f32 %v328, %v416
        %v418 = vpop.f32.mrb[0].mxu0
        %419 = vmatprep.mubr.f32.mxu0 0.0
        %420 = vmatmul.mubr.f32.gmra.mrb[0].mxu0 %v280
        %v421 = vpop.f32.mrb[0].mxu0
        %v422 = vadd.f32 %v328, %v421
        %v423 = vpop.f32.mrb[0].mxu0
        %424 = vmatprep.mubr.f32.mxu0 0.0
        %425 = vmatmul.mubr.f32.gmra.mrb[0].mxu0 %v281
        %v426 = vpop.f32.mrb[0].mxu0
        %v427 = vadd.f32 %v328, %v426
        %v428 = vpop.f32.mrb[0].mxu0
        %429 = vmatprep.mubr.f32.mxu0 0.0
        %430 = vmatmul.mubr.f32.gmra.mrb[0].mxu0 %v282
        %v431 = vpop.f32.mrb[0].mxu0
        %v432 = vadd.f32 %v328, %v431
        %v433 = vpop.f32.mrb[0].mxu0
        %434 = vmatprep.mubr.f32.mxu0 0.0
        %435 = vmatmul.mubr.f32.gmra.mrb[0].mxu0 %v283
        %v436 = vpop.f32.mrb[0].mxu0
        %v437 = vadd.f32 %v328, %v436
        %v438 = vpop.f32.mrb[0].mxu0
        %439 = vmatprep.mubr.f32.mxu0 0.0
        %440 = vmatmul.mubr.f32.gmra.mrb[0].mxu0 %v284
        %v441 = vpop.f32.mrb[0].mxu0
        %v442 = vadd.f32 %v328, %v441
        %v443 = vpop.f32.mrb[0].mxu0
        %444 = vmatprep.mubr.f32.mxu0 0.0
        %445 = vmatmul.mubr.f32.gmra.mrb[0].mxu0 %v285
        %v446 = vpop.f32.mrb[0].mxu0
        %v447 = vadd.f32 %v328, %v446
        %v448 = vpop.f32.mrb[0].mxu0
        %449 = vmatprep.mubr.f32.mxu0 0.0
        %450 = vmatmul.mubr.f32.gmra.mrb[0].mxu0 %v286
        %v451 = vpop.f32.mrb[0].mxu0
        %v452 = vadd.f32 %v328, %v451
        %v453 = vpop.f32.mrb[0].mxu0
        %454 = vmatprep.mubr.f32.mxu0 0.0
        %455 = vmatmul.mubr.f32.gmra.mrb[0].mxu0 %v287
        %v456 = vpop.f32.mrb[0].mxu0
        %v457 = vadd.f32 %v328, %v456
        %v458 = vpop.f32.mrb[0].mxu0
        %459 = vmatprep.mubr.f32.mxu0 0.0
        %460 = vmatmul.mubr.f32.gmra.mrb[0].mxu0 %v288
        %v461 = vpop.f32.mrb[0].mxu0
        %v462 = vadd.f32 %v328, %v461
        %v463 = vpop.f32.mrb[0].mxu0
        %464 = vmatprep.mubr.f32.mxu0 0.0
        %465 = vmatmul.mubr.f32.gmra.mrb[0].mxu0 %v289
        %v466 = vpop.f32.mrb[0].mxu0
        %v467 = vadd.f32 %v328, %v466
        %v468 = vpop.f32.mrb[0].mxu0
        %469 = vmatprep.mubr.f32.mxu0 0.0
        %470 = vmatmul.mubr.f32.gmra.mrb[0].mxu0 %v290
        %v471 = vpop.f32.mrb[0].mxu0
        %v472 = vadd.f32 %v328, %v471
        %v473 = vpop.f32.mrb[0].mxu0
        %474 = vmatprep.mubr.f32.mxu0 0.0
        %475 = vmatmul.mubr.f32.gmra.mrb[0].mxu0 %v291
        %v476 = vpop.f32.mrb[0].mxu0
        %v477 = vadd.f32 %v328, %v476
        %v478 = vpop.f32.mrb[0].mxu0
        %479 = vmatprep.mubr.f32.mxu0 0.0
        %480 = vmatmul.mubr.f32.gmra.mrb[0].mxu0 %v292
        %v481 = vpop.f32.mrb[0].mxu0
        %v482 = vadd.f32 %v328, %v481
        %v483 = vpop.f32.mrb[0].mxu0
        %484 = vmatprep.mubr.f32.mxu0 0.0
        %485 = vmatmul.mubr.f32.gmra.mrb[0].mxu0 %v293
        %v486 = vpop.f32.mrb[0].mxu0
        %v487 = vadd.f32 %v328, %v486
        %v488 = vpop.f32.mrb[0].mxu0
        %489 = vmatprep.mubr.f32.mxu0 0.0
        %490 = vmatmul.mubr.f32.gmra.mrb[0].mxu0 %v294
        %v491 = vpop.f32.mrb[0].mxu0
        %v492 = vadd.f32 %v328, %v491
        %v493 = vpop.f32.mrb[0].mxu0
        %494 = vmatprep.mubr.f32.mxu0 0.0
        %495 = vmatmul.mubr.f32.gmra.mrb[0].mxu0 %v295
        %v496 = vpop.f32.mrb[0].mxu0
        %v497 = vadd.f32 %v328, %v496
        %v498 = vpop.f32.mrb[0].mxu0
        %499 = vmatprep.mubr.f32.mxu0 0.0
        %500 = vmatmul.mubr.f32.gmra.mrb[0].mxu0 %v296
        %v501 = vpop.f32.mrb[0].mxu0
        %v502 = vadd.f32 %v328, %v501
        %v503 = vpop.f32.mrb[0].mxu0
        %504 = vmatprep.mubr.f32.mxu0 0.0
        %505 = vmatmul.mubr.f32.gmra.mrb[0].mxu0 %v297
        %v506 = vpop.f32.mrb[0].mxu0
        %v507 = vadd.f32 %v328, %v506
        %v508 = vpop.f32.mrb[0].mxu0
        %509 = vmatprep.mubr.f32.mxu0 0.0
        %510 = vmatmul.mubr.f32.gmra.mrb[0].mxu0 %v298
        %v511 = vpop.f32.mrb[0].mxu0
        %v512 = vadd.f32 %v328, %v511
        %v513 = vpop.f32.mrb[0].mxu0
        %514 = vmatprep.mubr.f32.mxu0 0.0
        %515 = vmatmul.mubr.f32.gmra.mrb[0].mxu0 %v299
        %v516 = vpop.f32.mrb[0].mxu0
        %v517 = vadd.f32 %v328, %v516
        %v518 = vpop.f32.mrb[0].mxu0
        %519 = vmatprep.mubr.f32.mxu0 0.0
        %520 = vmatmul.mubr.f32.gmra.mrb[0].mxu0 %v300
        %v521 = vpop.f32.mrb[0].mxu0
        %v522 = vadd.f32 %v328, %v521
        %v523 = vpop.f32.mrb[0].mxu0
        %524 = vmatprep.mubr.f32.mxu0 0.0
        %525 = vmatmul.mubr.f32.gmra.mrb[0].mxu0 %v301
        %v526 = vpop.f32.mrb[0].mxu0
        %v527 = vadd.f32 %v328, %v526
        %v528 = vpop.f32.mrb[0].mxu0
        %529 = vmatprep.mubr.f32.mxu0 0.0
        %530 = vmatmul.mubr.f32.gmra.mrb[0].mxu0 %v302
        %v531 = vpop.f32.mrb[0].mxu0
        %v532 = vadd.f32 %v328, %v531
        %v533 = vpop.f32.mrb[0].mxu0
        %534 = vmatprep.mubr.f32.mxu0 0.0
        %535 = vmatmul.mubr.f32.gmra.mrb[0].mxu0 %v303
        %v536 = vpop.f32.mrb[0].mxu0
        %v537 = vadd.f32 %v328, %v536
        %v538 = vpop.f32.mrb[0].mxu0
        %539 = vmatprep.mubr.f32.mxu0 0.0
        %540 = vmatmul.mubr.f32.gmra.mrb[0].mxu0 %v304
        %v541 = vpop.f32.mrb[0].mxu0
        %v542 = vadd.f32 %v328, %v541
        %v543 = vpop.f32.mrb[0].mxu0
        %544 = vmatprep.mubr.f32.mxu0 0.0
        %545 = vmatmul.mubr.f32.gmra.mrb[0].mxu0 %v305
        %v546 = vpop.f32.mrb[0].mxu0
        %v547 = vadd.f32 %v328, %v546
        %v548 = vpop.f32.mrb[0].mxu0
        %549 = vmatprep.mubr.f32.mxu0 0.0
        %550 = vmatmul.mubr.f32.gmra.mrb[0].mxu0 %v306
        %v551 = vpop.f32.mrb[0].mxu0
        %v552 = vadd.f32 %v328, %v551
        %v553 = vpop.f32.mrb[0].mxu0
        %554 = vdwg.mxu0
        %vm555 = vcmp.ge.f32.partialorder %v397, 0.0
        %vm556 = vcmp.ge.f32.partialorder %v402, 0.0
        %vm557 = vcmp.ge.f32.partialorder %v407, 0.0
        %vm558 = vcmp.ge.f32.partialorder %v412, 0.0
        %vm559 = vcmp.ge.f32.partialorder %v417, 0.0
        %vm560 = vcmp.ge.f32.partialorder %v422, 0.0
        %vm561 = vcmp.ge.f32.partialorder %v427, 0.0
        %vm562 = vcmp.ge.f32.partialorder %v432, 0.0
        %vm563 = vcmp.ge.f32.partialorder %v437, 0.0
        %vm564 = vcmp.ge.f32.partialorder %v442, 0.0
        %vm565 = vcmp.ge.f32.partialorder %v447, 0.0
        %vm566 = vcmp.ge.f32.partialorder %v452, 0.0
        %vm567 = vcmp.ge.f32.partialorder %v457, 0.0
        %vm568 = vcmp.ge.f32.partialorder %v462, 0.0
        %vm569 = vcmp.ge.f32.partialorder %v467, 0.0
        %vm570 = vcmp.ge.f32.partialorder %v472, 0.0
        %vm571 = vcmp.ge.f32.partialorder %v477, 0.0
        %vm572 = vcmp.ge.f32.partialorder %v482, 0.0
        %vm573 = vcmp.ge.f32.partialorder %v487, 0.0
        %vm574 = vcmp.ge.f32.partialorder %v492, 0.0
        %vm575 = vcmp.ge.f32.partialorder %v497, 0.0
        %vm576 = vcmp.ge.f32.partialorder %v502, 0.0
        %vm577 = vcmp.ge.f32.partialorder %v507, 0.0
        %vm578 = vcmp.ge.f32.partialorder %v512, 0.0
        %vm579 = vcmp.ge.f32.partialorder %v517, 0.0
        %vm580 = vcmp.ge.f32.partialorder %v522, 0.0
        %vm581 = vcmp.ge.f32.partialorder %v527, 0.0
        %vm582 = vcmp.ge.f32.partialorder %v532, 0.0
        %vm583 = vcmp.ge.f32.partialorder %v537, 0.0
        %vm584 = vcmp.ge.f32.partialorder %v542, 0.0
        %vm585 = vcmp.ge.f32.partialorder %v547, 0.0
        %vm586 = vcmp.ge.f32.partialorder %v552, 0.0
        %v587 = vmul.f32 %v397, 0.01
        %v588 = vmul.f32 %v402, 0.01
        %v589 = vmul.f32 %v407, 0.01
        %v590 = vmul.f32 %v412, 0.01
        %v591 = vmul.f32 %v417, 0.01
        %v592 = vmul.f32 %v422, 0.01
        %v593 = vmul.f32 %v427, 0.01
        %v594 = vmul.f32 %v432, 0.01
        %v595 = vmul.f32 %v437, 0.01
        %v596 = vmul.f32 %v442, 0.01
        %v597 = vmul.f32 %v447, 0.01
        %v598 = vmul.f32 %v452, 0.01
        %v599 = vmul.f32 %v457, 0.01
        %v600 = vmul.f32 %v462, 0.01
        %v601 = vmul.f32 %v467, 0.01
        %v602 = vmul.f32 %v472, 0.01
        %v603 = vmul.f32 %v477, 0.01
        %v604 = vmul.f32 %v482, 0.01
        %v605 = vmul.f32 %v487, 0.01
        %v606 = vmul.f32 %v492, 0.01
        %v607 = vmul.f32 %v497, 0.01
        %v608 = vmul.f32 %v502, 0.01
        %v609 = vmul.f32 %v507, 0.01
        %v610 = vmul.f32 %v512, 0.01
        %v611 = vmul.f32 %v517, 0.01
        %v612 = vmul.f32 %v522, 0.01
        %v613 = vmul.f32 %v527, 0.01
        %v614 = vmul.f32 %v532, 0.01
        %v615 = vmul.f32 %v537, 0.01
        %v616 = vmul.f32 %v542, 0.01
        %v617 = vmul.f32 %v547, 0.01
        %v618 = vmul.f32 %v552, 0.01
        %v619 = vsel %vm555, %v397, %v587
        %v620 = vsel %vm556, %v402, %v588
        %v621 = vsel %vm557, %v407, %v589
        %v622 = vsel %vm558, %v412, %v590
        %v623 = vsel %vm559, %v417, %v591
        %v624 = vsel %vm560, %v422, %v592
        %v625 = vsel %vm561, %v427, %v593
        %v626 = vsel %vm562, %v432, %v594
        %v627 = vsel %vm563, %v437, %v595
        %v628 = vsel %vm564, %v442, %v596
        %v629 = vsel %vm565, %v447, %v597
        %v630 = vsel %vm566, %v452, %v598
        %v631 = vsel %vm567, %v457, %v599
        %v632 = vsel %vm568, %v462, %v600
        %v633 = vsel %vm569, %v467, %v601
        %v634 = vsel %vm570, %v472, %v602
        %v635 = vsel %vm571, %v477, %v603
        %v636 = vsel %vm572, %v482, %v604
        %v637 = vsel %vm573, %v487, %v605
        %v638 = vsel %vm574, %v492, %v606
        %v639 = vsel %vm575, %v497, %v607
        %v640 = vsel %vm576, %v502, %v608
        %v641 = vsel %vm577, %v507, %v609
        %v642 = vsel %vm578, %v512, %v610
        %v643 = vsel %vm579, %v517, %v611
        %v644 = vsel %vm580, %v522, %v612
        %v645 = vsel %vm581, %v527, %v613
        %v646 = vsel %vm582, %v532, %v614
        %v647 = vsel %vm583, %v537, %v615
        %v648 = vsel %vm584, %v542, %v616
        %v649 = vsel %vm585, %v547, %v617
        %v650 = vsel %vm586, %v552, %v618
        %v651 = vld [vmem:[#allocation7] sm:$0xff]
        %v652 = vld [vmem:[#allocation7 + $0x8] sm:$0xff]
        %v653 = vld [vmem:[#allocation7 + $0x10] sm:$0xff]
        %v654 = vld [vmem:[#allocation7 + $0x18] sm:$0xff]
        %v655 = vld [vmem:[#allocation7 + $0x20] sm:$0xff]
        %v656 = vld [vmem:[#allocation7 + $0x28] sm:$0xff]
        %v657 = vld [vmem:[#allocation7 + $0x30] sm:$0xff]
        %v658 = vld [vmem:[#allocation7 + $0x38] sm:$0xff]
        %v659 = vld [vmem:[#allocation7 + $0x40] sm:$0xff]
        %v660 = vld [vmem:[#allocation7 + $0x48] sm:$0xff]
        %v661 = vld [vmem:[#allocation7 + $0x50] sm:$0xff]
        %v662 = vld [vmem:[#allocation7 + $0x58] sm:$0xff]
        %v663 = vld [vmem:[#allocation7 + $0x60] sm:$0xff]
        %v664 = vld [vmem:[#allocation7 + $0x68] sm:$0xff]
        %v665 = vld [vmem:[#allocation7 + $0x70] sm:$0xff]
        %v666 = vld [vmem:[#allocation7 + $0x78] sm:$0xff]
        %v667 = vld [vmem:[%s4] sm:$0x1]
        %v669 = vlaneseq
        %v670 = vshrl.u32 %v669, 7
        %v671 = vsub.s32 0, %v670
        %v672 = vrot.slane %v667, %v671
        %674 = vmatprep.subr.mxu0 0.0
        %675 = vmatpush1.msra.mxu0 %v651
        %676 = vmatprep.subr.mxu0 0.0
        %677 = vmatpush1.msra.mxu0 %v652
        %678 = vmatprep.subr.mxu0 0.0
        %679 = vmatpush1.msra.mxu0 %v653
        %680 = vmatprep.subr.mxu0 0.0
        %681 = vmatpush1.msra.mxu0 %v654
        %682 = vmatprep.subr.mxu0 0.0
        %683 = vmatpush1.msra.mxu0 %v655
        %684 = vmatprep.subr.mxu0 0.0
        %685 = vmatpush1.msra.mxu0 %v656
        %686 = vmatprep.subr.mxu0 0.0
        %687 = vmatpush1.msra.mxu0 %v657
        %688 = vmatprep.subr.mxu0 0.0
        %689 = vmatpush1.msra.mxu0 %v658
        %690 = vmatprep.subr.mxu0 0.0
        %691 = vmatpush1.msra.mxu0 %v659
        %692 = vmatprep.subr.mxu0 0.0
        %693 = vmatpush1.msra.mxu0 %v660
        %694 = vmatprep.subr.mxu0 0.0
        %695 = vmatpush1.msra.mxu0 %v661
        %696 = vmatprep.subr.mxu0 0.0
        %697 = vmatpush1.msra.mxu0 %v662
        %698 = vmatprep.subr.mxu0 0.0
        %699 = vmatpush1.msra.mxu0 %v663
        %700 = vmatprep.subr.mxu0 0.0
        %701 = vmatpush1.msra.mxu0 %v664
        %702 = vmatprep.subr.mxu0 0.0
        %703 = vmatpush1.msra.mxu0 %v665
        %704 = vmatprep.subr.mxu0 0.0
        %705 = vmatpush1.msra.mxu0 %v666
        %706 = vmatprep.subr.mxu0 0.0
        %707 = vmatpush1.msra.mxu0 0.0
        %708 = vmatprep.subr.mxu0 0.0
        %709 = vmatpush1.msra.mxu0 0.0
        %710 = vmatprep.subr.mxu0 0.0
        %711 = vmatpush1.msra.mxu0 0.0
        %712 = vmatprep.subr.mxu0 0.0
        %713 = vmatpush1.msra.mxu0 0.0
        %714 = vmatprep.subr.mxu0 0.0
        %715 = vmatpush1.msra.mxu0 0.0
        %716 = vmatprep.subr.mxu0 0.0
        %717 = vmatpush1.msra.mxu0 0.0
        %718 = vmatprep.subr.mxu0 0.0
        %719 = vmatpush1.msra.mxu0 0.0
        %720 = vmatprep.subr.mxu0 0.0
        %721 = vmatpush1.msra.mxu0 0.0
        %722 = vmatprep.subr.mxu0 0.0
        %723 = vmatpush1.msra.mxu0 0.0
        %724 = vmatprep.subr.mxu0 0.0
        %725 = vmatpush1.msra.mxu0 0.0
        %726 = vmatprep.subr.mxu0 0.0
        %727 = vmatpush1.msra.mxu0 0.0
        %728 = vmatprep.subr.mxu0 0.0
        %729 = vmatpush1.msra.mxu0 0.0
        %730 = vmatprep.subr.mxu0 0.0
        %731 = vmatpush1.msra.mxu0 0.0
        %732 = vmatprep.subr.mxu0 0.0
        %733 = vmatpush1.msra.mxu0 0.0
        %734 = vmatprep.subr.mxu0 0.0
        %735 = vmatpush1.msra.mxu0 0.0
        %736 = vmatprep.subr.mxu0 0.0
        %737 = vmatpush1.msra.mxu0 0.0
        %738 = vmatprep.mubr.f32.mxu0 0.0
        %739 = vmatmul.mubr.f32.gmra.mrb[0].mxu0 %v619
        %v740 = vpop.f32.mrb[0].mxu0
        %v741 = vadd.f32 %v672, %v740
        %v742 = vpop.f32.mrb[0].mxu0
        %743 = vmatprep.mubr.f32.mxu0 0.0
        %744 = vmatmul.mubr.f32.gmra.mrb[0].mxu0 %v620
        %v745 = vpop.f32.mrb[0].mxu0
        %v746 = vadd.f32 %v672, %v745
        %v747 = vpop.f32.mrb[0].mxu0
        %748 = vmatprep.mubr.f32.mxu0 0.0
        %749 = vmatmul.mubr.f32.gmra.mrb[0].mxu0 %v621
        %v750 = vpop.f32.mrb[0].mxu0
        %v751 = vadd.f32 %v672, %v750
        %v752 = vpop.f32.mrb[0].mxu0
        %753 = vmatprep.mubr.f32.mxu0 0.0
        %754 = vmatmul.mubr.f32.gmra.mrb[0].mxu0 %v622
        %v755 = vpop.f32.mrb[0].mxu0
        %v756 = vadd.f32 %v672, %v755
        %v757 = vpop.f32.mrb[0].mxu0
        %758 = vmatprep.mubr.f32.mxu0 0.0
        %759 = vmatmul.mubr.f32.gmra.mrb[0].mxu0 %v623
        %v760 = vpop.f32.mrb[0].mxu0
        %v761 = vadd.f32 %v672, %v760
        %v762 = vpop.f32.mrb[0].mxu0
        %763 = vmatprep.mubr.f32.mxu0 0.0
        %764 = vmatmul.mubr.f32.gmra.mrb[0].mxu0 %v624
        %v765 = vpop.f32.mrb[0].mxu0
        %v766 = vadd.f32 %v672, %v765
        %v767 = vpop.f32.mrb[0].mxu0
        %768 = vmatprep.mubr.f32.mxu0 0.0
        %769 = vmatmul.mubr.f32.gmra.mrb[0].mxu0 %v625
        %v770 = vpop.f32.mrb[0].mxu0
        %v771 = vadd.f32 %v672, %v770
        %v772 = vpop.f32.mrb[0].mxu0
        %773 = vmatprep.mubr.f32.mxu0 0.0
        %774 = vmatmul.mubr.f32.gmra.mrb[0].mxu0 %v626
        %v775 = vpop.f32.mrb[0].mxu0
        %v776 = vadd.f32 %v672, %v775
        %v777 = vpop.f32.mrb[0].mxu0
        %778 = vmatprep.mubr.f32.mxu0 0.0
        %779 = vmatmul.mubr.f32.gmra.mrb[0].mxu0 %v627
        %v780 = vpop.f32.mrb[0].mxu0
        %v781 = vadd.f32 %v672, %v780
        %v782 = vpop.f32.mrb[0].mxu0
        %783 = vmatprep.mubr.f32.mxu0 0.0
        %784 = vmatmul.mubr.f32.gmra.mrb[0].mxu0 %v628
        %v785 = vpop.f32.mrb[0].mxu0
        %v786 = vadd.f32 %v672, %v785
        %v787 = vpop.f32.mrb[0].mxu0
        %788 = vmatprep.mubr.f32.mxu0 0.0
        %789 = vmatmul.mubr.f32.gmra.mrb[0].mxu0 %v629
        %v790 = vpop.f32.mrb[0].mxu0
        %v791 = vadd.f32 %v672, %v790
        %v792 = vpop.f32.mrb[0].mxu0
        %793 = vmatprep.mubr.f32.mxu0 0.0
        %794 = vmatmul.mubr.f32.gmra.mrb[0].mxu0 %v630
        %v795 = vpop.f32.mrb[0].mxu0
        %v796 = vadd.f32 %v672, %v795
        %v797 = vpop.f32.mrb[0].mxu0
        %798 = vmatprep.mubr.f32.mxu0 0.0
        %799 = vmatmul.mubr.f32.gmra.mrb[0].mxu0 %v631
        %v800 = vpop.f32.mrb[0].mxu0
        %v801 = vadd.f32 %v672, %v800
        %v802 = vpop.f32.mrb[0].mxu0
        %803 = vmatprep.mubr.f32.mxu0 0.0
        %804 = vmatmul.mubr.f32.gmra.mrb[0].mxu0 %v632
        %v805 = vpop.f32.mrb[0].mxu0
        %v806 = vadd.f32 %v672, %v805
        %v807 = vpop.f32.mrb[0].mxu0
        %808 = vmatprep.mubr.f32.mxu0 0.0
        %809 = vmatmul.mubr.f32.gmra.mrb[0].mxu0 %v633
        %v810 = vpop.f32.mrb[0].mxu0
        %v811 = vadd.f32 %v672, %v810
        %v812 = vpop.f32.mrb[0].mxu0
        %813 = vmatprep.mubr.f32.mxu0 0.0
        %814 = vmatmul.mubr.f32.gmra.mrb[0].mxu0 %v634
        %v815 = vpop.f32.mrb[0].mxu0
        %v816 = vadd.f32 %v672, %v815
        %v817 = vpop.f32.mrb[0].mxu0
        %818 = vmatprep.mubr.f32.mxu0 0.0
        %819 = vmatmul.mubr.f32.gmra.mrb[0].mxu0 %v635
        %v820 = vpop.f32.mrb[0].mxu0
        %v821 = vadd.f32 %v672, %v820
        %v822 = vpop.f32.mrb[0].mxu0
        %823 = vmatprep.mubr.f32.mxu0 0.0
        %824 = vmatmul.mubr.f32.gmra.mrb[0].mxu0 %v636
        %v825 = vpop.f32.mrb[0].mxu0
        %v826 = vadd.f32 %v672, %v825
        %v827 = vpop.f32.mrb[0].mxu0
        %828 = vmatprep.mubr.f32.mxu0 0.0
        %829 = vmatmul.mubr.f32.gmra.mrb[0].mxu0 %v637
        %v830 = vpop.f32.mrb[0].mxu0
        %v831 = vadd.f32 %v672, %v830
        %v832 = vpop.f32.mrb[0].mxu0
        %833 = vmatprep.mubr.f32.mxu0 0.0
        %834 = vmatmul.mubr.f32.gmra.mrb[0].mxu0 %v638
        %v835 = vpop.f32.mrb[0].mxu0
        %v836 = vadd.f32 %v672, %v835
        %v837 = vpop.f32.mrb[0].mxu0
        %838 = vmatprep.mubr.f32.mxu0 0.0
        %839 = vmatmul.mubr.f32.gmra.mrb[0].mxu0 %v639
        %v840 = vpop.f32.mrb[0].mxu0
        %v841 = vadd.f32 %v672, %v840
        %v842 = vpop.f32.mrb[0].mxu0
        %843 = vmatprep.mubr.f32.mxu0 0.0
        %844 = vmatmul.mubr.f32.gmra.mrb[0].mxu0 %v640
        %v845 = vpop.f32.mrb[0].mxu0
        %v846 = vadd.f32 %v672, %v845
        %v847 = vpop.f32.mrb[0].mxu0
        %848 = vmatprep.mubr.f32.mxu0 0.0
        %849 = vmatmul.mubr.f32.gmra.mrb[0].mxu0 %v641
        %v850 = vpop.f32.mrb[0].mxu0
        %v851 = vadd.f32 %v672, %v850
        %v852 = vpop.f32.mrb[0].mxu0
        %853 = vmatprep.mubr.f32.mxu0 0.0
        %854 = vmatmul.mubr.f32.gmra.mrb[0].mxu0 %v642
        %v855 = vpop.f32.mrb[0].mxu0
        %v856 = vadd.f32 %v672, %v855
        %v857 = vpop.f32.mrb[0].mxu0
        %858 = vmatprep.mubr.f32.mxu0 0.0
        %859 = vmatmul.mubr.f32.gmra.mrb[0].mxu0 %v643
        %v860 = vpop.f32.mrb[0].mxu0
        %v861 = vadd.f32 %v672, %v860
        %v862 = vpop.f32.mrb[0].mxu0
        %863 = vmatprep.mubr.f32.mxu0 0.0
        %864 = vmatmul.mubr.f32.gmra.mrb[0].mxu0 %v644
        %v865 = vpop.f32.mrb[0].mxu0
        %v866 = vadd.f32 %v672, %v865
        %v867 = vpop.f32.mrb[0].mxu0
        %868 = vmatprep.mubr.f32.mxu0 0.0
        %869 = vmatmul.mubr.f32.gmra.mrb[0].mxu0 %v645
        %v870 = vpop.f32.mrb[0].mxu0
        %v871 = vadd.f32 %v672, %v870
        %v872 = vpop.f32.mrb[0].mxu0
        %873 = vmatprep.mubr.f32.mxu0 0.0
        %874 = vmatmul.mubr.f32.gmra.mrb[0].mxu0 %v646
        %v875 = vpop.f32.mrb[0].mxu0
        %v876 = vadd.f32 %v672, %v875
        %v877 = vpop.f32.mrb[0].mxu0
        %878 = vmatprep.mubr.f32.mxu0 0.0
        %879 = vmatmul.mubr.f32.gmra.mrb[0].mxu0 %v647
        %v880 = vpop.f32.mrb[0].mxu0
        %v881 = vadd.f32 %v672, %v880
        %v882 = vpop.f32.mrb[0].mxu0
        %883 = vmatprep.mubr.f32.mxu0 0.0
        %884 = vmatmul.mubr.f32.gmra.mrb[0].mxu0 %v648
        %v885 = vpop.f32.mrb[0].mxu0
        %v886 = vadd.f32 %v672, %v885
        %v887 = vpop.f32.mrb[0].mxu0
        %888 = vmatprep.mubr.f32.mxu0 0.0
        %889 = vmatmul.mubr.f32.gmra.mrb[0].mxu0 %v649
        %v890 = vpop.f32.mrb[0].mxu0
        %v891 = vadd.f32 %v672, %v890
        %v892 = vpop.f32.mrb[0].mxu0
        %893 = vmatprep.mubr.f32.mxu0 0.0
        %894 = vmatmul.mubr.f32.gmra.mrb[0].mxu0 %v650
        %v895 = vpop.f32.mrb[0].mxu0
        %v896 = vadd.f32 %v672, %v895
        %v897 = vpop.f32.mrb[0].mxu0
        %898 = vdwg.mxu0
        %vm899 = vcmp.ge.f32.partialorder %v741, 0.0
        %vm900 = vcmp.ge.f32.partialorder %v746, 0.0
        %vm901 = vcmp.ge.f32.partialorder %v751, 0.0
        %vm902 = vcmp.ge.f32.partialorder %v756, 0.0
        %vm903 = vcmp.ge.f32.partialorder %v761, 0.0
        %vm904 = vcmp.ge.f32.partialorder %v766, 0.0
        %vm905 = vcmp.ge.f32.partialorder %v771, 0.0
        %vm906 = vcmp.ge.f32.partialorder %v776, 0.0
        %vm907 = vcmp.ge.f32.partialorder %v781, 0.0
        %vm908 = vcmp.ge.f32.partialorder %v786, 0.0
        %vm909 = vcmp.ge.f32.partialorder %v791, 0.0
        %vm910 = vcmp.ge.f32.partialorder %v796, 0.0
        %vm911 = vcmp.ge.f32.partialorder %v801, 0.0
        %vm912 = vcmp.ge.f32.partialorder %v806, 0.0
        %vm913 = vcmp.ge.f32.partialorder %v811, 0.0
        %vm914 = vcmp.ge.f32.partialorder %v816, 0.0
        %vm915 = vcmp.ge.f32.partialorder %v821, 0.0
        %vm916 = vcmp.ge.f32.partialorder %v826, 0.0
        %vm917 = vcmp.ge.f32.partialorder %v831, 0.0
        %vm918 = vcmp.ge.f32.partialorder %v836, 0.0
        %vm919 = vcmp.ge.f32.partialorder %v841, 0.0
        %vm920 = vcmp.ge.f32.partialorder %v846, 0.0
        %vm921 = vcmp.ge.f32.partialorder %v851, 0.0
        %vm922 = vcmp.ge.f32.partialorder %v856, 0.0
        %vm923 = vcmp.ge.f32.partialorder %v861, 0.0
        %vm924 = vcmp.ge.f32.partialorder %v866, 0.0
        %vm925 = vcmp.ge.f32.partialorder %v871, 0.0
        %vm926 = vcmp.ge.f32.partialorder %v876, 0.0
        %vm927 = vcmp.ge.f32.partialorder %v881, 0.0
        %vm928 = vcmp.ge.f32.partialorder %v886, 0.0
        %vm929 = vcmp.ge.f32.partialorder %v891, 0.0
        %vm930 = vcmp.ge.f32.partialorder %v896, 0.0
        %v931 = vmul.f32 %v741, 0.01
        %v932 = vmul.f32 %v746, 0.01
        %v933 = vmul.f32 %v751, 0.01
        %v934 = vmul.f32 %v756, 0.01
        %v935 = vmul.f32 %v761, 0.01
        %v936 = vmul.f32 %v766, 0.01
        %v937 = vmul.f32 %v771, 0.01
        %v938 = vmul.f32 %v776, 0.01
        %v939 = vmul.f32 %v781, 0.01
        %v940 = vmul.f32 %v786, 0.01
        %v941 = vmul.f32 %v791, 0.01
        %v942 = vmul.f32 %v796, 0.01
        %v943 = vmul.f32 %v801, 0.01
        %v944 = vmul.f32 %v806, 0.01
        %v945 = vmul.f32 %v811, 0.01
        %v946 = vmul.f32 %v816, 0.01
        %v947 = vmul.f32 %v821, 0.01
        %v948 = vmul.f32 %v826, 0.01
        %v949 = vmul.f32 %v831, 0.01
        %v950 = vmul.f32 %v836, 0.01
        %v951 = vmul.f32 %v841, 0.01
        %v952 = vmul.f32 %v846, 0.01
        %v953 = vmul.f32 %v851, 0.01
        %v954 = vmul.f32 %v856, 0.01
        %v955 = vmul.f32 %v861, 0.01
        %v956 = vmul.f32 %v866, 0.01
        %v957 = vmul.f32 %v871, 0.01
        %v958 = vmul.f32 %v876, 0.01
        %v959 = vmul.f32 %v881, 0.01
        %v960 = vmul.f32 %v886, 0.01
        %v961 = vmul.f32 %v891, 0.01
        %v962 = vmul.f32 %v896, 0.01
        %v963 = vsel %vm899, %v741, %v931
        %v964 = vsel %vm900, %v746, %v932
        %v965 = vsel %vm901, %v751, %v933
        %v966 = vsel %vm902, %v756, %v934
        %v967 = vsel %vm903, %v761, %v935
        %v968 = vsel %vm904, %v766, %v936
        %v969 = vsel %vm905, %v771, %v937
        %v970 = vsel %vm906, %v776, %v938
        %v971 = vsel %vm907, %v781, %v939
        %v972 = vsel %vm908, %v786, %v940
        %v973 = vsel %vm909, %v791, %v941
        %v974 = vsel %vm910, %v796, %v942
        %v975 = vsel %vm911, %v801, %v943
        %v976 = vsel %vm912, %v806, %v944
        %v977 = vsel %vm913, %v811, %v945
        %v978 = vsel %vm914, %v816, %v946
        %v979 = vsel %vm915, %v821, %v947
        %v980 = vsel %vm916, %v826, %v948
        %v981 = vsel %vm917, %v831, %v949
        %v982 = vsel %vm918, %v836, %v950
        %v983 = vsel %vm919, %v841, %v951
        %v984 = vsel %vm920, %v846, %v952
        %v985 = vsel %vm921, %v851, %v953
        %v986 = vsel %vm922, %v856, %v954
        %v987 = vsel %vm923, %v861, %v955
        %v988 = vsel %vm924, %v866, %v956
        %v989 = vsel %vm925, %v871, %v957
        %v990 = vsel %vm926, %v876, %v958
        %v991 = vsel %vm927, %v881, %v959
        %v992 = vsel %vm928, %v886, %v960
        %v993 = vsel %vm929, %v891, %v961
        %v994 = vsel %vm930, %v896, %v962
        %s995 = scalar_lea.vmem %s238, 128 [#allocation2]
        %v996 = vld [vmem:[%s995] sm:$0xff]
        %v997 = vld [vmem:[%s995 + $0x8] sm:$0xff]
        %v998 = vld [vmem:[%s995 + $0x10] sm:$0xff]
        %v999 = vld [vmem:[%s995 + $0x18] sm:$0xff]
        %v1000 = vld [vmem:[%s995 + $0x20] sm:$0xff]
        %v1001 = vld [vmem:[%s995 + $0x28] sm:$0xff]
        %v1002 = vld [vmem:[%s995 + $0x30] sm:$0xff]
        %v1003 = vld [vmem:[%s995 + $0x38] sm:$0xff]
        %v1004 = vld [vmem:[%s995 + $0x40] sm:$0xff]
        %v1005 = vld [vmem:[%s995 + $0x48] sm:$0xff]
        %v1006 = vld [vmem:[%s995 + $0x50] sm:$0xff]
        %v1007 = vld [vmem:[%s995 + $0x58] sm:$0xff]
        %v1008 = vld [vmem:[%s995 + $0x60] sm:$0xff]
        %v1009 = vld [vmem:[%s995 + $0x68] sm:$0xff]
        %v1010 = vld [vmem:[%s995 + $0x70] sm:$0xff]
        %v1011 = vld [vmem:[%s995 + $0x78] sm:$0xff]
        %v1012 = vld [vmem:[%s995 + $0x200] sm:$0xff]
        %v1013 = vld [vmem:[%s995 + $0x208] sm:$0xff]
        %v1014 = vld [vmem:[%s995 + $0x210] sm:$0xff]
        %v1015 = vld [vmem:[%s995 + $0x218] sm:$0xff]
        %v1016 = vld [vmem:[%s995 + $0x220] sm:$0xff]
        %v1017 = vld [vmem:[%s995 + $0x228] sm:$0xff]
        %v1018 = vld [vmem:[%s995 + $0x230] sm:$0xff]
        %v1019 = vld [vmem:[%s995 + $0x238] sm:$0xff]
        %v1020 = vld [vmem:[%s995 + $0x240] sm:$0xff]
        %v1021 = vld [vmem:[%s995 + $0x248] sm:$0xff]
        %v1022 = vld [vmem:[%s995 + $0x250] sm:$0xff]
        %v1023 = vld [vmem:[%s995 + $0x258] sm:$0xff]
        %v1024 = vld [vmem:[%s995 + $0x260] sm:$0xff]
        %v1025 = vld [vmem:[%s995 + $0x268] sm:$0xff]
        %v1026 = vld [vmem:[%s995 + $0x270] sm:$0xff]
        %v1027 = vld [vmem:[%s995 + $0x278] sm:$0xff]
        %s1028 = scalar_lea.vmem [#allocation5], 128
        %v1029 = vld [vmem:[%s1028] sm:$0xff]
        %v1030 = vld [vmem:[%s1028 + $0x8] sm:$0xff]
        %v1031 = vld [vmem:[%s1028 + $0x10] sm:$0xff]
        %v1032 = vld [vmem:[%s1028 + $0x18] sm:$0xff]
        %v1033 = vld [vmem:[%s1028 + $0x20] sm:$0xff]
        %v1034 = vld [vmem:[%s1028 + $0x28] sm:$0xff]
        %v1035 = vld [vmem:[%s1028 + $0x30] sm:$0xff]
        %v1036 = vld [vmem:[%s1028 + $0x38] sm:$0xff]
        %v1037 = vld [vmem:[%s1028 + $0x40] sm:$0xff]
        %v1038 = vld [vmem:[%s1028 + $0x48] sm:$0xff]
        %v1039 = vld [vmem:[%s1028 + $0x50] sm:$0xff]
        %v1040 = vld [vmem:[%s1028 + $0x58] sm:$0xff]
        %v1041 = vld [vmem:[%s1028 + $0x60] sm:$0xff]
        %v1042 = vld [vmem:[%s1028 + $0x68] sm:$0xff]
        %v1043 = vld [vmem:[%s1028 + $0x70] sm:$0xff]
        %v1044 = vld [vmem:[%s1028 + $0x78] sm:$0xff]
        %s1045 = scalar_lea.vmem %s2, 1
        %v1046 = vld [vmem:[%s1045] sm:$0x1]
        %v1048 = vlaneseq
        %v1049 = vshrl.u32 %v1048, 7
        %v1050 = vsub.s32 0, %v1049
        %v1051 = vrot.slane %v1046, %v1050
        %1053 = vmatprep.subr.mxu0 0.0
        %1054 = vmatpush1.msra.mxu0 %v1029
        %1055 = vmatprep.subr.mxu0 0.0
        %1056 = vmatpush1.msra.mxu0 %v1030
        %1057 = vmatprep.subr.mxu0 0.0
        %1058 = vmatpush1.msra.mxu0 %v1031
        %1059 = vmatprep.subr.mxu0 0.0
        %1060 = vmatpush1.msra.mxu0 %v1032
        %1061 = vmatprep.subr.mxu0 0.0
        %1062 = vmatpush1.msra.mxu0 %v1033
        %1063 = vmatprep.subr.mxu0 0.0
        %1064 = vmatpush1.msra.mxu0 %v1034
        %1065 = vmatprep.subr.mxu0 0.0
        %1066 = vmatpush1.msra.mxu0 %v1035
        %1067 = vmatprep.subr.mxu0 0.0
        %1068 = vmatpush1.msra.mxu0 %v1036
        %1069 = vmatprep.subr.mxu0 0.0
        %1070 = vmatpush1.msra.mxu0 %v1037
        %1071 = vmatprep.subr.mxu0 0.0
        %1072 = vmatpush1.msra.mxu0 %v1038
        %1073 = vmatprep.subr.mxu0 0.0
        %1074 = vmatpush1.msra.mxu0 %v1039
        %1075 = vmatprep.subr.mxu0 0.0
        %1076 = vmatpush1.msra.mxu0 %v1040
        %1077 = vmatprep.subr.mxu0 0.0
        %1078 = vmatpush1.msra.mxu0 %v1041
        %1079 = vmatprep.subr.mxu0 0.0
        %1080 = vmatpush1.msra.mxu0 %v1042
        %1081 = vmatprep.subr.mxu0 0.0
        %1082 = vmatpush1.msra.mxu0 %v1043
        %1083 = vmatprep.subr.mxu0 0.0
        %1084 = vmatpush1.msra.mxu0 %v1044
        %1085 = vmatprep.subr.mxu0 0.0
        %1086 = vmatpush1.msra.mxu0 0.0
        %1087 = vmatprep.subr.mxu0 0.0
        %1088 = vmatpush1.msra.mxu0 0.0
        %1089 = vmatprep.subr.mxu0 0.0
        %1090 = vmatpush1.msra.mxu0 0.0
        %1091 = vmatprep.subr.mxu0 0.0
        %1092 = vmatpush1.msra.mxu0 0.0
        %1093 = vmatprep.subr.mxu0 0.0
        %1094 = vmatpush1.msra.mxu0 0.0
        %1095 = vmatprep.subr.mxu0 0.0
        %1096 = vmatpush1.msra.mxu0 0.0
        %1097 = vmatprep.subr.mxu0 0.0
        %1098 = vmatpush1.msra.mxu0 0.0
        %1099 = vmatprep.subr.mxu0 0.0
        %1100 = vmatpush1.msra.mxu0 0.0
        %1101 = vmatprep.subr.mxu0 0.0
        %1102 = vmatpush1.msra.mxu0 0.0
        %1103 = vmatprep.subr.mxu0 0.0
        %1104 = vmatpush1.msra.mxu0 0.0
        %1105 = vmatprep.subr.mxu0 0.0
        %1106 = vmatpush1.msra.mxu0 0.0
        %1107 = vmatprep.subr.mxu0 0.0
        %1108 = vmatpush1.msra.mxu0 0.0
        %1109 = vmatprep.subr.mxu0 0.0
        %1110 = vmatpush1.msra.mxu0 0.0
        %1111 = vmatprep.subr.mxu0 0.0
        %1112 = vmatpush1.msra.mxu0 0.0
        %1113 = vmatprep.subr.mxu0 0.0
        %1114 = vmatpush1.msra.mxu0 0.0
        %1115 = vmatprep.subr.mxu0 0.0
        %1116 = vmatpush1.msra.mxu0 0.0
        %1117 = vmatprep.mubr.f32.mxu0 0.0
        %1118 = vmatmul.mubr.f32.gmra.mrb[0].mxu0 %v996
        %v1119 = vpop.f32.mrb[0].mxu0
        %v1120 = vadd.f32 %v1051, %v1119
        %v1121 = vpop.f32.mrb[0].mxu0
        %1122 = vmatprep.mubr.f32.mxu0 0.0
        %1123 = vmatmul.mubr.f32.gmra.mrb[0].mxu0 %v997
        %v1124 = vpop.f32.mrb[0].mxu0
        %v1125 = vadd.f32 %v1051, %v1124
        %v1126 = vpop.f32.mrb[0].mxu0
        %1127 = vmatprep.mubr.f32.mxu0 0.0
        %1128 = vmatmul.mubr.f32.gmra.mrb[0].mxu0 %v998
        %v1129 = vpop.f32.mrb[0].mxu0
        %v1130 = vadd.f32 %v1051, %v1129
        %v1131 = vpop.f32.mrb[0].mxu0
        %1132 = vmatprep.mubr.f32.mxu0 0.0
        %1133 = vmatmul.mubr.f32.gmra.mrb[0].mxu0 %v999
        %v1134 = vpop.f32.mrb[0].mxu0
        %v1135 = vadd.f32 %v1051, %v1134
        %v1136 = vpop.f32.mrb[0].mxu0
        %1137 = vmatprep.mubr.f32.mxu0 0.0
        %1138 = vmatmul.mubr.f32.gmra.mrb[0].mxu0 %v1000
        %v1139 = vpop.f32.mrb[0].mxu0
        %v1140 = vadd.f32 %v1051, %v1139
        %v1141 = vpop.f32.mrb[0].mxu0
        %1142 = vmatprep.mubr.f32.mxu0 0.0
        %1143 = vmatmul.mubr.f32.gmra.mrb[0].mxu0 %v1001
        %v1144 = vpop.f32.mrb[0].mxu0
        %v1145 = vadd.f32 %v1051, %v1144
        %v1146 = vpop.f32.mrb[0].mxu0
        %1147 = vmatprep.mubr.f32.mxu0 0.0
        %1148 = vmatmul.mubr.f32.gmra.mrb[0].mxu0 %v1002
        %v1149 = vpop.f32.mrb[0].mxu0
        %v1150 = vadd.f32 %v1051, %v1149
        %v1151 = vpop.f32.mrb[0].mxu0
        %1152 = vmatprep.mubr.f32.mxu0 0.0
        %1153 = vmatmul.mubr.f32.gmra.mrb[0].mxu0 %v1003
        %v1154 = vpop.f32.mrb[0].mxu0
        %v1155 = vadd.f32 %v1051, %v1154
        %v1156 = vpop.f32.mrb[0].mxu0
        %1157 = vmatprep.mubr.f32.mxu0 0.0
        %1158 = vmatmul.mubr.f32.gmra.mrb[0].mxu0 %v1004
        %v1159 = vpop.f32.mrb[0].mxu0
        %v1160 = vadd.f32 %v1051, %v1159
        %v1161 = vpop.f32.mrb[0].mxu0
        %1162 = vmatprep.mubr.f32.mxu0 0.0
        %1163 = vmatmul.mubr.f32.gmra.mrb[0].mxu0 %v1005
        %v1164 = vpop.f32.mrb[0].mxu0
        %v1165 = vadd.f32 %v1051, %v1164
        %v1166 = vpop.f32.mrb[0].mxu0
        %1167 = vmatprep.mubr.f32.mxu0 0.0
        %1168 = vmatmul.mubr.f32.gmra.mrb[0].mxu0 %v1006
        %v1169 = vpop.f32.mrb[0].mxu0
        %v1170 = vadd.f32 %v1051, %v1169
        %v1171 = vpop.f32.mrb[0].mxu0
        %1172 = vmatprep.mubr.f32.mxu0 0.0
        %1173 = vmatmul.mubr.f32.gmra.mrb[0].mxu0 %v1007
        %v1174 = vpop.f32.mrb[0].mxu0
        %v1175 = vadd.f32 %v1051, %v1174
        %v1176 = vpop.f32.mrb[0].mxu0
        %1177 = vmatprep.mubr.f32.mxu0 0.0
        %1178 = vmatmul.mubr.f32.gmra.mrb[0].mxu0 %v1008
        %v1179 = vpop.f32.mrb[0].mxu0
        %v1180 = vadd.f32 %v1051, %v1179
        %v1181 = vpop.f32.mrb[0].mxu0
        %1182 = vmatprep.mubr.f32.mxu0 0.0
        %1183 = vmatmul.mubr.f32.gmra.mrb[0].mxu0 %v1009
        %v1184 = vpop.f32.mrb[0].mxu0
        %v1185 = vadd.f32 %v1051, %v1184
        %v1186 = vpop.f32.mrb[0].mxu0
        %1187 = vmatprep.mubr.f32.mxu0 0.0
        %1188 = vmatmul.mubr.f32.gmra.mrb[0].mxu0 %v1010
        %v1189 = vpop.f32.mrb[0].mxu0
        %v1190 = vadd.f32 %v1051, %v1189
        %v1191 = vpop.f32.mrb[0].mxu0
        %1192 = vmatprep.mubr.f32.mxu0 0.0
        %1193 = vmatmul.mubr.f32.gmra.mrb[0].mxu0 %v1011
        %v1194 = vpop.f32.mrb[0].mxu0
        %v1195 = vadd.f32 %v1051, %v1194
        %v1196 = vpop.f32.mrb[0].mxu0
        %1197 = vmatprep.mubr.f32.mxu0 0.0
        %1198 = vmatmul.mubr.f32.gmra.mrb[0].mxu0 %v1012
        %v1199 = vpop.f32.mrb[0].mxu0
        %v1200 = vadd.f32 %v1051, %v1199
        %v1201 = vpop.f32.mrb[0].mxu0
        %1202 = vmatprep.mubr.f32.mxu0 0.0
        %1203 = vmatmul.mubr.f32.gmra.mrb[0].mxu0 %v1013
        %v1204 = vpop.f32.mrb[0].mxu0
        %v1205 = vadd.f32 %v1051, %v1204
        %v1206 = vpop.f32.mrb[0].mxu0
        %1207 = vmatprep.mubr.f32.mxu0 0.0
        %1208 = vmatmul.mubr.f32.gmra.mrb[0].mxu0 %v1014
        %v1209 = vpop.f32.mrb[0].mxu0
        %v1210 = vadd.f32 %v1051, %v1209
        %v1211 = vpop.f32.mrb[0].mxu0
        %1212 = vmatprep.mubr.f32.mxu0 0.0
        %1213 = vmatmul.mubr.f32.gmra.mrb[0].mxu0 %v1015
        %v1214 = vpop.f32.mrb[0].mxu0
        %v1215 = vadd.f32 %v1051, %v1214
        %v1216 = vpop.f32.mrb[0].mxu0
        %1217 = vmatprep.mubr.f32.mxu0 0.0
        %1218 = vmatmul.mubr.f32.gmra.mrb[0].mxu0 %v1016
        %v1219 = vpop.f32.mrb[0].mxu0
        %v1220 = vadd.f32 %v1051, %v1219
        %v1221 = vpop.f32.mrb[0].mxu0
        %1222 = vmatprep.mubr.f32.mxu0 0.0
        %1223 = vmatmul.mubr.f32.gmra.mrb[0].mxu0 %v1017
        %v1224 = vpop.f32.mrb[0].mxu0
        %v1225 = vadd.f32 %v1051, %v1224
        %v1226 = vpop.f32.mrb[0].mxu0
        %1227 = vmatprep.mubr.f32.mxu0 0.0
        %1228 = vmatmul.mubr.f32.gmra.mrb[0].mxu0 %v1018
        %v1229 = vpop.f32.mrb[0].mxu0
        %v1230 = vadd.f32 %v1051, %v1229
        %v1231 = vpop.f32.mrb[0].mxu0
        %1232 = vmatprep.mubr.f32.mxu0 0.0
        %1233 = vmatmul.mubr.f32.gmra.mrb[0].mxu0 %v1019
        %v1234 = vpop.f32.mrb[0].mxu0
        %v1235 = vadd.f32 %v1051, %v1234
        %v1236 = vpop.f32.mrb[0].mxu0
        %1237 = vmatprep.mubr.f32.mxu0 0.0
        %1238 = vmatmul.mubr.f32.gmra.mrb[0].mxu0 %v1020
        %v1239 = vpop.f32.mrb[0].mxu0
        %v1240 = vadd.f32 %v1051, %v1239
        %v1241 = vpop.f32.mrb[0].mxu0
        %1242 = vmatprep.mubr.f32.mxu0 0.0
        %1243 = vmatmul.mubr.f32.gmra.mrb[0].mxu0 %v1021
        %v1244 = vpop.f32.mrb[0].mxu0
        %v1245 = vadd.f32 %v1051, %v1244
        %v1246 = vpop.f32.mrb[0].mxu0
        %1247 = vmatprep.mubr.f32.mxu0 0.0
        %1248 = vmatmul.mubr.f32.gmra.mrb[0].mxu0 %v1022
        %v1249 = vpop.f32.mrb[0].mxu0
        %v1250 = vadd.f32 %v1051, %v1249
        %v1251 = vpop.f32.mrb[0].mxu0
        %1252 = vmatprep.mubr.f32.mxu0 0.0
        %1253 = vmatmul.mubr.f32.gmra.mrb[0].mxu0 %v1023
        %v1254 = vpop.f32.mrb[0].mxu0
        %v1255 = vadd.f32 %v1051, %v1254
        %v1256 = vpop.f32.mrb[0].mxu0
        %1257 = vmatprep.mubr.f32.mxu0 0.0
        %1258 = vmatmul.mubr.f32.gmra.mrb[0].mxu0 %v1024
        %v1259 = vpop.f32.mrb[0].mxu0
        %v1260 = vadd.f32 %v1051, %v1259
        %v1261 = vpop.f32.mrb[0].mxu0
        %1262 = vmatprep.mubr.f32.mxu0 0.0
        %1263 = vmatmul.mubr.f32.gmra.mrb[0].mxu0 %v1025
        %v1264 = vpop.f32.mrb[0].mxu0
        %v1265 = vadd.f32 %v1051, %v1264
        %v1266 = vpop.f32.mrb[0].mxu0
        %1267 = vmatprep.mubr.f32.mxu0 0.0
        %1268 = vmatmul.mubr.f32.gmra.mrb[0].mxu0 %v1026
        %v1269 = vpop.f32.mrb[0].mxu0
        %v1270 = vadd.f32 %v1051, %v1269
        %v1271 = vpop.f32.mrb[0].mxu0
        %1272 = vmatprep.mubr.f32.mxu0 0.0
        %1273 = vmatmul.mubr.f32.gmra.mrb[0].mxu0 %v1027
        %v1274 = vpop.f32.mrb[0].mxu0
        %v1275 = vadd.f32 %v1051, %v1274
        %v1276 = vpop.f32.mrb[0].mxu0
        %1277 = vdwg.mxu0
        %vm1278 = vcmp.ge.f32.partialorder %v1120, 0.0
        %vm1279 = vcmp.ge.f32.partialorder %v1125, 0.0
        %vm1280 = vcmp.ge.f32.partialorder %v1130, 0.0
        %vm1281 = vcmp.ge.f32.partialorder %v1135, 0.0
        %vm1282 = vcmp.ge.f32.partialorder %v1140, 0.0
        %vm1283 = vcmp.ge.f32.partialorder %v1145, 0.0
        %vm1284 = vcmp.ge.f32.partialorder %v1150, 0.0
        %vm1285 = vcmp.ge.f32.partialorder %v1155, 0.0
        %vm1286 = vcmp.ge.f32.partialorder %v1160, 0.0
        %vm1287 = vcmp.ge.f32.partialorder %v1165, 0.0
        %vm1288 = vcmp.ge.f32.partialorder %v1170, 0.0
        %vm1289 = vcmp.ge.f32.partialorder %v1175, 0.0
        %vm1290 = vcmp.ge.f32.partialorder %v1180, 0.0
        %vm1291 = vcmp.ge.f32.partialorder %v1185, 0.0
        %vm1292 = vcmp.ge.f32.partialorder %v1190, 0.0
        %vm1293 = vcmp.ge.f32.partialorder %v1195, 0.0
        %vm1294 = vcmp.ge.f32.partialorder %v1200, 0.0
        %vm1295 = vcmp.ge.f32.partialorder %v1205, 0.0
        %vm1296 = vcmp.ge.f32.partialorder %v1210, 0.0
        %vm1297 = vcmp.ge.f32.partialorder %v1215, 0.0
        %vm1298 = vcmp.ge.f32.partialorder %v1220, 0.0
        %vm1299 = vcmp.ge.f32.partialorder %v1225, 0.0
        %vm1300 = vcmp.ge.f32.partialorder %v1230, 0.0
        %vm1301 = vcmp.ge.f32.partialorder %v1235, 0.0
        %vm1302 = vcmp.ge.f32.partialorder %v1240, 0.0
        %vm1303 = vcmp.ge.f32.partialorder %v1245, 0.0
        %vm1304 = vcmp.ge.f32.partialorder %v1250, 0.0
        %vm1305 = vcmp.ge.f32.partialorder %v1255, 0.0
        %vm1306 = vcmp.ge.f32.partialorder %v1260, 0.0
        %vm1307 = vcmp.ge.f32.partialorder %v1265, 0.0
        %vm1308 = vcmp.ge.f32.partialorder %v1270, 0.0
        %vm1309 = vcmp.ge.f32.partialorder %v1275, 0.0
        %v1310 = vmul.f32 %v1120, 0.01
        %v1311 = vmul.f32 %v1125, 0.01
        %v1312 = vmul.f32 %v1130, 0.01
        %v1313 = vmul.f32 %v1135, 0.01
        %v1314 = vmul.f32 %v1140, 0.01
        %v1315 = vmul.f32 %v1145, 0.01
        %v1316 = vmul.f32 %v1150, 0.01
        %v1317 = vmul.f32 %v1155, 0.01
        %v1318 = vmul.f32 %v1160, 0.01
        %v1319 = vmul.f32 %v1165, 0.01
        %v1320 = vmul.f32 %v1170, 0.01
        %v1321 = vmul.f32 %v1175, 0.01
        %v1322 = vmul.f32 %v1180, 0.01
        %v1323 = vmul.f32 %v1185, 0.01
        %v1324 = vmul.f32 %v1190, 0.01
        %v1325 = vmul.f32 %v1195, 0.01
        %v1326 = vmul.f32 %v1200, 0.01
        %v1327 = vmul.f32 %v1205, 0.01
        %v1328 = vmul.f32 %v1210, 0.01
        %v1329 = vmul.f32 %v1215, 0.01
        %v1330 = vmul.f32 %v1220, 0.01
        %v1331 = vmul.f32 %v1225, 0.01
        %v1332 = vmul.f32 %v1230, 0.01
        %v1333 = vmul.f32 %v1235, 0.01
        %v1334 = vmul.f32 %v1240, 0.01
        %v1335 = vmul.f32 %v1245, 0.01
        %v1336 = vmul.f32 %v1250, 0.01
        %v1337 = vmul.f32 %v1255, 0.01
        %v1338 = vmul.f32 %v1260, 0.01
        %v1339 = vmul.f32 %v1265, 0.01
        %v1340 = vmul.f32 %v1270, 0.01
        %v1341 = vmul.f32 %v1275, 0.01
        %v1342 = vsel %vm1278, %v1120, %v1310
        %v1343 = vsel %vm1279, %v1125, %v1311
        %v1344 = vsel %vm1280, %v1130, %v1312
        %v1345 = vsel %vm1281, %v1135, %v1313
        %v1346 = vsel %vm1282, %v1140, %v1314
        %v1347 = vsel %vm1283, %v1145, %v1315
        %v1348 = vsel %vm1284, %v1150, %v1316
        %v1349 = vsel %vm1285, %v1155, %v1317
        %v1350 = vsel %vm1286, %v1160, %v1318
        %v1351 = vsel %vm1287, %v1165, %v1319
        %v1352 = vsel %vm1288, %v1170, %v1320
        %v1353 = vsel %vm1289, %v1175, %v1321
        %v1354 = vsel %vm1290, %v1180, %v1322
        %v1355 = vsel %vm1291, %v1185, %v1323
        %v1356 = vsel %vm1292, %v1190, %v1324
        %v1357 = vsel %vm1293, %v1195, %v1325
        %v1358 = vsel %vm1294, %v1200, %v1326
        %v1359 = vsel %vm1295, %v1205, %v1327
        %v1360 = vsel %vm1296, %v1210, %v1328
        %v1361 = vsel %vm1297, %v1215, %v1329
        %v1362 = vsel %vm1298, %v1220, %v1330
        %v1363 = vsel %vm1299, %v1225, %v1331
        %v1364 = vsel %vm1300, %v1230, %v1332
        %v1365 = vsel %vm1301, %v1235, %v1333
        %v1366 = vsel %vm1302, %v1240, %v1334
        %v1367 = vsel %vm1303, %v1245, %v1335
        %v1368 = vsel %vm1304, %v1250, %v1336
        %v1369 = vsel %vm1305, %v1255, %v1337
        %v1370 = vsel %vm1306, %v1260, %v1338
        %v1371 = vsel %vm1307, %v1265, %v1339
        %v1372 = vsel %vm1308, %v1270, %v1340
        %v1373 = vsel %vm1309, %v1275, %v1341
        %s1374 = scalar_lea.vmem [#allocation7], 128
        %v1375 = vld [vmem:[%s1374] sm:$0xff]
        %v1376 = vld [vmem:[%s1374 + $0x8] sm:$0xff]
        %v1377 = vld [vmem:[%s1374 + $0x10] sm:$0xff]
        %v1378 = vld [vmem:[%s1374 + $0x18] sm:$0xff]
        %v1379 = vld [vmem:[%s1374 + $0x20] sm:$0xff]
        %v1380 = vld [vmem:[%s1374 + $0x28] sm:$0xff]
        %v1381 = vld [vmem:[%s1374 + $0x30] sm:$0xff]
        %v1382 = vld [vmem:[%s1374 + $0x38] sm:$0xff]
        %v1383 = vld [vmem:[%s1374 + $0x40] sm:$0xff]
        %v1384 = vld [vmem:[%s1374 + $0x48] sm:$0xff]
        %v1385 = vld [vmem:[%s1374 + $0x50] sm:$0xff]
        %v1386 = vld [vmem:[%s1374 + $0x58] sm:$0xff]
        %v1387 = vld [vmem:[%s1374 + $0x60] sm:$0xff]
        %v1388 = vld [vmem:[%s1374 + $0x68] sm:$0xff]
        %v1389 = vld [vmem:[%s1374 + $0x70] sm:$0xff]
        %v1390 = vld [vmem:[%s1374 + $0x78] sm:$0xff]
        %s1391 = scalar_lea.vmem %s4, 1
        %v1392 = vld [vmem:[%s1391] sm:$0x1]
        %v1394 = vlaneseq
        %v1395 = vshrl.u32 %v1394, 7
        %v1396 = vsub.s32 0, %v1395
        %v1397 = vrot.slane %v1392, %v1396
        %1399 = vmatprep.subr.mxu0 0.0
        %1400 = vmatpush1.msra.mxu0 %v1375
        %1401 = vmatprep.subr.mxu0 0.0
        %1402 = vmatpush1.msra.mxu0 %v1376
        %1403 = vmatprep.subr.mxu0 0.0
        %1404 = vmatpush1.msra.mxu0 %v1377
        %1405 = vmatprep.subr.mxu0 0.0
        %1406 = vmatpush1.msra.mxu0 %v1378
        %1407 = vmatprep.subr.mxu0 0.0
        %1408 = vmatpush1.msra.mxu0 %v1379
        %1409 = vmatprep.subr.mxu0 0.0
        %1410 = vmatpush1.msra.mxu0 %v1380
        %1411 = vmatprep.subr.mxu0 0.0
        %1412 = vmatpush1.msra.mxu0 %v1381
        %1413 = vmatprep.subr.mxu0 0.0
        %1414 = vmatpush1.msra.mxu0 %v1382
        %1415 = vmatprep.subr.mxu0 0.0
        %1416 = vmatpush1.msra.mxu0 %v1383
        %1417 = vmatprep.subr.mxu0 0.0
        %1418 = vmatpush1.msra.mxu0 %v1384
        %1419 = vmatprep.subr.mxu0 0.0
        %1420 = vmatpush1.msra.mxu0 %v1385
        %1421 = vmatprep.subr.mxu0 0.0
        %1422 = vmatpush1.msra.mxu0 %v1386
        %1423 = vmatprep.subr.mxu0 0.0
        %1424 = vmatpush1.msra.mxu0 %v1387
        %1425 = vmatprep.subr.mxu0 0.0
        %1426 = vmatpush1.msra.mxu0 %v1388
        %1427 = vmatprep.subr.mxu0 0.0
        %1428 = vmatpush1.msra.mxu0 %v1389
        %1429 = vmatprep.subr.mxu0 0.0
        %1430 = vmatpush1.msra.mxu0 %v1390
        %1431 = vmatprep.subr.mxu0 0.0
        %1432 = vmatpush1.msra.mxu0 0.0
        %1433 = vmatprep.subr.mxu0 0.0
        %1434 = vmatpush1.msra.mxu0 0.0
        %1435 = vmatprep.subr.mxu0 0.0
        %1436 = vmatpush1.msra.mxu0 0.0
        %1437 = vmatprep.subr.mxu0 0.0
        %1438 = vmatpush1.msra.mxu0 0.0
        %1439 = vmatprep.subr.mxu0 0.0
        %1440 = vmatpush1.msra.mxu0 0.0
        %1441 = vmatprep.subr.mxu0 0.0
        %1442 = vmatpush1.msra.mxu0 0.0
        %1443 = vmatprep.subr.mxu0 0.0
        %1444 = vmatpush1.msra.mxu0 0.0
        %1445 = vmatprep.subr.mxu0 0.0
        %1446 = vmatpush1.msra.mxu0 0.0
        %1447 = vmatprep.subr.mxu0 0.0
        %1448 = vmatpush1.msra.mxu0 0.0
        %1449 = vmatprep.subr.mxu0 0.0
        %1450 = vmatpush1.msra.mxu0 0.0
        %1451 = vmatprep.subr.mxu0 0.0
        %1452 = vmatpush1.msra.mxu0 0.0
        %1453 = vmatprep.subr.mxu0 0.0
        %1454 = vmatpush1.msra.mxu0 0.0
        %1455 = vmatprep.subr.mxu0 0.0
        %1456 = vmatpush1.msra.mxu0 0.0
        %1457 = vmatprep.subr.mxu0 0.0
        %1458 = vmatpush1.msra.mxu0 0.0
        %1459 = vmatprep.subr.mxu0 0.0
        %1460 = vmatpush1.msra.mxu0 0.0
        %1461 = vmatprep.subr.mxu0 0.0
        %1462 = vmatpush1.msra.mxu0 0.0
        %1463 = vmatprep.mubr.f32.mxu0 0.0
        %1464 = vmatmul.mubr.f32.gmra.mrb[0].mxu0 %v1342
        %v1465 = vpop.f32.mrb[0].mxu0
        %v1466 = vadd.f32 %v1397, %v1465
        %v1467 = vpop.f32.mrb[0].mxu0
        %1468 = vmatprep.mubr.f32.mxu0 0.0
        %1469 = vmatmul.mubr.f32.gmra.mrb[0].mxu0 %v1343
        %v1470 = vpop.f32.mrb[0].mxu0
        %v1471 = vadd.f32 %v1397, %v1470
        %v1472 = vpop.f32.mrb[0].mxu0
        %1473 = vmatprep.mubr.f32.mxu0 0.0
        %1474 = vmatmul.mubr.f32.gmra.mrb[0].mxu0 %v1344
        %v1475 = vpop.f32.mrb[0].mxu0
        %v1476 = vadd.f32 %v1397, %v1475
        %v1477 = vpop.f32.mrb[0].mxu0
        %1478 = vmatprep.mubr.f32.mxu0 0.0
        %1479 = vmatmul.mubr.f32.gmra.mrb[0].mxu0 %v1345
        %v1480 = vpop.f32.mrb[0].mxu0
        %v1481 = vadd.f32 %v1397, %v1480
        %v1482 = vpop.f32.mrb[0].mxu0
        %1483 = vmatprep.mubr.f32.mxu0 0.0
        %1484 = vmatmul.mubr.f32.gmra.mrb[0].mxu0 %v1346
        %v1485 = vpop.f32.mrb[0].mxu0
        %v1486 = vadd.f32 %v1397, %v1485
        %v1487 = vpop.f32.mrb[0].mxu0
        %1488 = vmatprep.mubr.f32.mxu0 0.0
        %1489 = vmatmul.mubr.f32.gmra.mrb[0].mxu0 %v1347
        %v1490 = vpop.f32.mrb[0].mxu0
        %v1491 = vadd.f32 %v1397, %v1490
        %v1492 = vpop.f32.mrb[0].mxu0
        %1493 = vmatprep.mubr.f32.mxu0 0.0
        %1494 = vmatmul.mubr.f32.gmra.mrb[0].mxu0 %v1348
        %v1495 = vpop.f32.mrb[0].mxu0
        %v1496 = vadd.f32 %v1397, %v1495
        %v1497 = vpop.f32.mrb[0].mxu0
        %1498 = vmatprep.mubr.f32.mxu0 0.0
        %1499 = vmatmul.mubr.f32.gmra.mrb[0].mxu0 %v1349
        %v1500 = vpop.f32.mrb[0].mxu0
        %v1501 = vadd.f32 %v1397, %v1500
        %v1502 = vpop.f32.mrb[0].mxu0
        %1503 = vmatprep.mubr.f32.mxu0 0.0
        %1504 = vmatmul.mubr.f32.gmra.mrb[0].mxu0 %v1350
        %v1505 = vpop.f32.mrb[0].mxu0
        %v1506 = vadd.f32 %v1397, %v1505
        %v1507 = vpop.f32.mrb[0].mxu0
        %1508 = vmatprep.mubr.f32.mxu0 0.0
        %1509 = vmatmul.mubr.f32.gmra.mrb[0].mxu0 %v1351
        %v1510 = vpop.f32.mrb[0].mxu0
        %v1511 = vadd.f32 %v1397, %v1510
        %v1512 = vpop.f32.mrb[0].mxu0
        %1513 = vmatprep.mubr.f32.mxu0 0.0
        %1514 = vmatmul.mubr.f32.gmra.mrb[0].mxu0 %v1352
        %v1515 = vpop.f32.mrb[0].mxu0
        %v1516 = vadd.f32 %v1397, %v1515
        %v1517 = vpop.f32.mrb[0].mxu0
        %1518 = vmatprep.mubr.f32.mxu0 0.0
        %1519 = vmatmul.mubr.f32.gmra.mrb[0].mxu0 %v1353
        %v1520 = vpop.f32.mrb[0].mxu0
        %v1521 = vadd.f32 %v1397, %v1520
        %v1522 = vpop.f32.mrb[0].mxu0
        %1523 = vmatprep.mubr.f32.mxu0 0.0
        %1524 = vmatmul.mubr.f32.gmra.mrb[0].mxu0 %v1354
        %v1525 = vpop.f32.mrb[0].mxu0
        %v1526 = vadd.f32 %v1397, %v1525
        %v1527 = vpop.f32.mrb[0].mxu0
        %1528 = vmatprep.mubr.f32.mxu0 0.0
        %1529 = vmatmul.mubr.f32.gmra.mrb[0].mxu0 %v1355
        %v1530 = vpop.f32.mrb[0].mxu0
        %v1531 = vadd.f32 %v1397, %v1530
        %v1532 = vpop.f32.mrb[0].mxu0
        %1533 = vmatprep.mubr.f32.mxu0 0.0
        %1534 = vmatmul.mubr.f32.gmra.mrb[0].mxu0 %v1356
        %v1535 = vpop.f32.mrb[0].mxu0
        %v1536 = vadd.f32 %v1397, %v1535
        %v1537 = vpop.f32.mrb[0].mxu0
        %1538 = vmatprep.mubr.f32.mxu0 0.0
        %1539 = vmatmul.mubr.f32.gmra.mrb[0].mxu0 %v1357
        %v1540 = vpop.f32.mrb[0].mxu0
        %v1541 = vadd.f32 %v1397, %v1540
        %v1542 = vpop.f32.mrb[0].mxu0
        %1543 = vmatprep.mubr.f32.mxu0 0.0
        %1544 = vmatmul.mubr.f32.gmra.mrb[0].mxu0 %v1358
        %v1545 = vpop.f32.mrb[0].mxu0
        %v1546 = vadd.f32 %v1397, %v1545
        %v1547 = vpop.f32.mrb[0].mxu0
        %1548 = vmatprep.mubr.f32.mxu0 0.0
        %1549 = vmatmul.mubr.f32.gmra.mrb[0].mxu0 %v1359
        %v1550 = vpop.f32.mrb[0].mxu0
        %v1551 = vadd.f32 %v1397, %v1550
        %v1552 = vpop.f32.mrb[0].mxu0
        %1553 = vmatprep.mubr.f32.mxu0 0.0
        %1554 = vmatmul.mubr.f32.gmra.mrb[0].mxu0 %v1360
        %v1555 = vpop.f32.mrb[0].mxu0
        %v1556 = vadd.f32 %v1397, %v1555
        %v1557 = vpop.f32.mrb[0].mxu0
        %1558 = vmatprep.mubr.f32.mxu0 0.0
        %1559 = vmatmul.mubr.f32.gmra.mrb[0].mxu0 %v1361
        %v1560 = vpop.f32.mrb[0].mxu0
        %v1561 = vadd.f32 %v1397, %v1560
        %v1562 = vpop.f32.mrb[0].mxu0
        %1563 = vmatprep.mubr.f32.mxu0 0.0
        %1564 = vmatmul.mubr.f32.gmra.mrb[0].mxu0 %v1362
        %v1565 = vpop.f32.mrb[0].mxu0
        %v1566 = vadd.f32 %v1397, %v1565
        %v1567 = vpop.f32.mrb[0].mxu0
        %1568 = vmatprep.mubr.f32.mxu0 0.0
        %1569 = vmatmul.mubr.f32.gmra.mrb[0].mxu0 %v1363
        %v1570 = vpop.f32.mrb[0].mxu0
        %v1571 = vadd.f32 %v1397, %v1570
        %v1572 = vpop.f32.mrb[0].mxu0
        %1573 = vmatprep.mubr.f32.mxu0 0.0
        %1574 = vmatmul.mubr.f32.gmra.mrb[0].mxu0 %v1364
        %v1575 = vpop.f32.mrb[0].mxu0
        %v1576 = vadd.f32 %v1397, %v1575
        %v1577 = vpop.f32.mrb[0].mxu0
        %1578 = vmatprep.mubr.f32.mxu0 0.0
        %1579 = vmatmul.mubr.f32.gmra.mrb[0].mxu0 %v1365
        %v1580 = vpop.f32.mrb[0].mxu0
        %v1581 = vadd.f32 %v1397, %v1580
        %v1582 = vpop.f32.mrb[0].mxu0
        %1583 = vmatprep.mubr.f32.mxu0 0.0
        %1584 = vmatmul.mubr.f32.gmra.mrb[0].mxu0 %v1366
        %v1585 = vpop.f32.mrb[0].mxu0
        %v1586 = vadd.f32 %v1397, %v1585
        %v1587 = vpop.f32.mrb[0].mxu0
        %1588 = vmatprep.mubr.f32.mxu0 0.0
        %1589 = vmatmul.mubr.f32.gmra.mrb[0].mxu0 %v1367
        %v1590 = vpop.f32.mrb[0].mxu0
        %v1591 = vadd.f32 %v1397, %v1590
        %v1592 = vpop.f32.mrb[0].mxu0
        %1593 = vmatprep.mubr.f32.mxu0 0.0
        %1594 = vmatmul.mubr.f32.gmra.mrb[0].mxu0 %v1368
        %v1595 = vpop.f32.mrb[0].mxu0
        %v1596 = vadd.f32 %v1397, %v1595
        %v1597 = vpop.f32.mrb[0].mxu0
        %1598 = vmatprep.mubr.f32.mxu0 0.0
        %1599 = vmatmul.mubr.f32.gmra.mrb[0].mxu0 %v1369
        %v1600 = vpop.f32.mrb[0].mxu0
        %v1601 = vadd.f32 %v1397, %v1600
        %v1602 = vpop.f32.mrb[0].mxu0
        %1603 = vmatprep.mubr.f32.mxu0 0.0
        %1604 = vmatmul.mubr.f32.gmra.mrb[0].mxu0 %v1370
        %v1605 = vpop.f32.mrb[0].mxu0
        %v1606 = vadd.f32 %v1397, %v1605
        %v1607 = vpop.f32.mrb[0].mxu0
        %1608 = vmatprep.mubr.f32.mxu0 0.0
        %1609 = vmatmul.mubr.f32.gmra.mrb[0].mxu0 %v1371
        %v1610 = vpop.f32.mrb[0].mxu0
        %v1611 = vadd.f32 %v1397, %v1610
        %v1612 = vpop.f32.mrb[0].mxu0
        %1613 = vmatprep.mubr.f32.mxu0 0.0
        %1614 = vmatmul.mubr.f32.gmra.mrb[0].mxu0 %v1372
        %v1615 = vpop.f32.mrb[0].mxu0
        %v1616 = vadd.f32 %v1397, %v1615
        %v1617 = vpop.f32.mrb[0].mxu0
        %1618 = vmatprep.mubr.f32.mxu0 0.0
        %1619 = vmatmul.mubr.f32.gmra.mrb[0].mxu0 %v1373
        %v1620 = vpop.f32.mrb[0].mxu0
        %v1621 = vadd.f32 %v1397, %v1620
        %v1622 = vpop.f32.mrb[0].mxu0
        %1623 = vdwg.mxu0
        %vm1624 = vcmp.ge.f32.partialorder %v1466, 0.0
        %vm1625 = vcmp.ge.f32.partialorder %v1471, 0.0
        %vm1626 = vcmp.ge.f32.partialorder %v1476, 0.0
        %vm1627 = vcmp.ge.f32.partialorder %v1481, 0.0
        %vm1628 = vcmp.ge.f32.partialorder %v1486, 0.0
        %vm1629 = vcmp.ge.f32.partialorder %v1491, 0.0
        %vm1630 = vcmp.ge.f32.partialorder %v1496, 0.0
        %vm1631 = vcmp.ge.f32.partialorder %v1501, 0.0
        %vm1632 = vcmp.ge.f32.partialorder %v1506, 0.0
        %vm1633 = vcmp.ge.f32.partialorder %v1511, 0.0
        %vm1634 = vcmp.ge.f32.partialorder %v1516, 0.0
        %vm1635 = vcmp.ge.f32.partialorder %v1521, 0.0
        %vm1636 = vcmp.ge.f32.partialorder %v1526, 0.0
        %vm1637 = vcmp.ge.f32.partialorder %v1531, 0.0
        %vm1638 = vcmp.ge.f32.partialorder %v1536, 0.0
        %vm1639 = vcmp.ge.f32.partialorder %v1541, 0.0
        %vm1640 = vcmp.ge.f32.partialorder %v1546, 0.0
        %vm1641 = vcmp.ge.f32.partialorder %v1551, 0.0
        %vm1642 = vcmp.ge.f32.partialorder %v1556, 0.0
        %vm1643 = vcmp.ge.f32.partialorder %v1561, 0.0
        %vm1644 = vcmp.ge.f32.partialorder %v1566, 0.0
        %vm1645 = vcmp.ge.f32.partialorder %v1571, 0.0
        %vm1646 = vcmp.ge.f32.partialorder %v1576, 0.0
        %vm1647 = vcmp.ge.f32.partialorder %v1581, 0.0
        %vm1648 = vcmp.ge.f32.partialorder %v1586, 0.0
        %vm1649 = vcmp.ge.f32.partialorder %v1591, 0.0
        %vm1650 = vcmp.ge.f32.partialorder %v1596, 0.0
        %vm1651 = vcmp.ge.f32.partialorder %v1601, 0.0
        %vm1652 = vcmp.ge.f32.partialorder %v1606, 0.0
        %vm1653 = vcmp.ge.f32.partialorder %v1611, 0.0
        %vm1654 = vcmp.ge.f32.partialorder %v1616, 0.0
        %vm1655 = vcmp.ge.f32.partialorder %v1621, 0.0
        %v1656 = vmul.f32 %v1466, 0.01
        %v1657 = vmul.f32 %v1471, 0.01
        %v1658 = vmul.f32 %v1476, 0.01
        %v1659 = vmul.f32 %v1481, 0.01
        %v1660 = vmul.f32 %v1486, 0.01
        %v1661 = vmul.f32 %v1491, 0.01
        %v1662 = vmul.f32 %v1496, 0.01
        %v1663 = vmul.f32 %v1501, 0.01
        %v1664 = vmul.f32 %v1506, 0.01
        %v1665 = vmul.f32 %v1511, 0.01
        %v1666 = vmul.f32 %v1516, 0.01
        %v1667 = vmul.f32 %v1521, 0.01
        %v1668 = vmul.f32 %v1526, 0.01
        %v1669 = vmul.f32 %v1531, 0.01
        %v1670 = vmul.f32 %v1536, 0.01
        %v1671 = vmul.f32 %v1541, 0.01
        %v1672 = vmul.f32 %v1546, 0.01
        %v1673 = vmul.f32 %v1551, 0.01
        %v1674 = vmul.f32 %v1556, 0.01
        %v1675 = vmul.f32 %v1561, 0.01
        %v1676 = vmul.f32 %v1566, 0.01
        %v1677 = vmul.f32 %v1571, 0.01
        %v1678 = vmul.f32 %v1576, 0.01
        %v1679 = vmul.f32 %v1581, 0.01
        %v1680 = vmul.f32 %v1586, 0.01
        %v1681 = vmul.f32 %v1591, 0.01
        %v1682 = vmul.f32 %v1596, 0.01
        %v1683 = vmul.f32 %v1601, 0.01
        %v1684 = vmul.f32 %v1606, 0.01
        %v1685 = vmul.f32 %v1611, 0.01
        %v1686 = vmul.f32 %v1616, 0.01
        %v1687 = vmul.f32 %v1621, 0.01
        %v1688 = vsel %vm1624, %v1466, %v1656
        %v1689 = vsel %vm1625, %v1471, %v1657
        %v1690 = vsel %vm1626, %v1476, %v1658
        %v1691 = vsel %vm1627, %v1481, %v1659
        %v1692 = vsel %vm1628, %v1486, %v1660
        %v1693 = vsel %vm1629, %v1491, %v1661
        %v1694 = vsel %vm1630, %v1496, %v1662
        %v1695 = vsel %vm1631, %v1501, %v1663
        %v1696 = vsel %vm1632, %v1506, %v1664
        %v1697 = vsel %vm1633, %v1511, %v1665
        %v1698 = vsel %vm1634, %v1516, %v1666
        %v1699 = vsel %vm1635, %v1521, %v1667
        %v1700 = vsel %vm1636, %v1526, %v1668
        %v1701 = vsel %vm1637, %v1531, %v1669
        %v1702 = vsel %vm1638, %v1536, %v1670
        %v1703 = vsel %vm1639, %v1541, %v1671
        %v1704 = vsel %vm1640, %v1546, %v1672
        %v1705 = vsel %vm1641, %v1551, %v1673
        %v1706 = vsel %vm1642, %v1556, %v1674
        %v1707 = vsel %vm1643, %v1561, %v1675
        %v1708 = vsel %vm1644, %v1566, %v1676
        %v1709 = vsel %vm1645, %v1571, %v1677
        %v1710 = vsel %vm1646, %v1576, %v1678
        %v1711 = vsel %vm1647, %v1581, %v1679
        %v1712 = vsel %vm1648, %v1586, %v1680
        %v1713 = vsel %vm1649, %v1591, %v1681
        %v1714 = vsel %vm1650, %v1596, %v1682
        %v1715 = vsel %vm1651, %v1601, %v1683
        %v1716 = vsel %vm1652, %v1606, %v1684
        %v1717 = vsel %vm1653, %v1611, %v1685
        %v1718 = vsel %vm1654, %v1616, %v1686
        %v1719 = vsel %vm1655, %v1621, %v1687
        %v1720 = vmax.f32 %v963, %v1688
        %v1721 = vmax.f32 %v964, %v1689
        %v1722 = vmax.f32 %v965, %v1690
        %v1723 = vmax.f32 %v966, %v1691
        %v1724 = vmax.f32 %v967, %v1692
        %v1725 = vmax.f32 %v968, %v1693
        %v1726 = vmax.f32 %v969, %v1694
        %v1727 = vmax.f32 %v970, %v1695
        %v1728 = vmax.f32 %v971, %v1696
        %v1729 = vmax.f32 %v972, %v1697
        %v1730 = vmax.f32 %v973, %v1698
        %v1731 = vmax.f32 %v974, %v1699
        %v1732 = vmax.f32 %v975, %v1700
        %v1733 = vmax.f32 %v976, %v1701
        %v1734 = vmax.f32 %v977, %v1702
        %v1735 = vmax.f32 %v978, %v1703
        %v1736 = vmax.f32 %v979, %v1704
        %v1737 = vmax.f32 %v980, %v1705
        %v1738 = vmax.f32 %v981, %v1706
        %v1739 = vmax.f32 %v982, %v1707
        %v1740 = vmax.f32 %v983, %v1708
        %v1741 = vmax.f32 %v984, %v1709
        %v1742 = vmax.f32 %v985, %v1710
        %v1743 = vmax.f32 %v986, %v1711
        %v1744 = vmax.f32 %v987, %v1712
        %v1745 = vmax.f32 %v988, %v1713
        %v1746 = vmax.f32 %v989, %v1714
        %v1747 = vmax.f32 %v990, %v1715
        %v1748 = vmax.f32 %v991, %v1716
        %v1749 = vmax.f32 %v992, %v1717
        %v1750 = vmax.f32 %v993, %v1718
        %v1751 = vmax.f32 %v994, %v1719
        %s1752 = scalar_lea.vmem %s238, 256 [#allocation2]
        %v1753 = vld [vmem:[%s1752] sm:$0xff]
        %v1754 = vld [vmem:[%s1752 + $0x8] sm:$0xff]
        %v1755 = vld [vmem:[%s1752 + $0x10] sm:$0xff]
        %v1756 = vld [vmem:[%s1752 + $0x18] sm:$0xff]
        %v1757 = vld [vmem:[%s1752 + $0x20] sm:$0xff]
        %v1758 = vld [vmem:[%s1752 + $0x28] sm:$0xff]
        %v1759 = vld [vmem:[%s1752 + $0x30] sm:$0xff]
        %v1760 = vld [vmem:[%s1752 + $0x38] sm:$0xff]
        %v1761 = vld [vmem:[%s1752 + $0x40] sm:$0xff]
        %v1762 = vld [vmem:[%s1752 + $0x48] sm:$0xff]
        %v1763 = vld [vmem:[%s1752 + $0x50] sm:$0xff]
        %v1764 = vld [vmem:[%s1752 + $0x58] sm:$0xff]
        %v1765 = vld [vmem:[%s1752 + $0x60] sm:$0xff]
        %v1766 = vld [vmem:[%s1752 + $0x68] sm:$0xff]
        %v1767 = vld [vmem:[%s1752 + $0x70] sm:$0xff]
        %v1768 = vld [vmem:[%s1752 + $0x78] sm:$0xff]
        %v1769 = vld [vmem:[%s1752 + $0x200] sm:$0xff]
        %v1770 = vld [vmem:[%s1752 + $0x208] sm:$0xff]
        %v1771 = vld [vmem:[%s1752 + $0x210] sm:$0xff]
        %v1772 = vld [vmem:[%s1752 + $0x218] sm:$0xff]
        %v1773 = vld [vmem:[%s1752 + $0x220] sm:$0xff]
        %v1774 = vld [vmem:[%s1752 + $0x228] sm:$0xff]
        %v1775 = vld [vmem:[%s1752 + $0x230] sm:$0xff]
        %v1776 = vld [vmem:[%s1752 + $0x238] sm:$0xff]
        %v1777 = vld [vmem:[%s1752 + $0x240] sm:$0xff]
        %v1778 = vld [vmem:[%s1752 + $0x248] sm:$0xff]
        %v1779 = vld [vmem:[%s1752 + $0x250] sm:$0xff]
        %v1780 = vld [vmem:[%s1752 + $0x258] sm:$0xff]
        %v1781 = vld [vmem:[%s1752 + $0x260] sm:$0xff]
        %v1782 = vld [vmem:[%s1752 + $0x268] sm:$0xff]
        %v1783 = vld [vmem:[%s1752 + $0x270] sm:$0xff]
        %v1784 = vld [vmem:[%s1752 + $0x278] sm:$0xff]
        %s1785 = scalar_lea.vmem [#allocation5], 256
        %v1786 = vld [vmem:[%s1785] sm:$0xff]
        %v1787 = vld [vmem:[%s1785 + $0x8] sm:$0xff]
        %v1788 = vld [vmem:[%s1785 + $0x10] sm:$0xff]
        %v1789 = vld [vmem:[%s1785 + $0x18] sm:$0xff]
        %v1790 = vld [vmem:[%s1785 + $0x20] sm:$0xff]
        %v1791 = vld [vmem:[%s1785 + $0x28] sm:$0xff]
        %v1792 = vld [vmem:[%s1785 + $0x30] sm:$0xff]
        %v1793 = vld [vmem:[%s1785 + $0x38] sm:$0xff]
        %v1794 = vld [vmem:[%s1785 + $0x40] sm:$0xff]
        %v1795 = vld [vmem:[%s1785 + $0x48] sm:$0xff]
        %v1796 = vld [vmem:[%s1785 + $0x50] sm:$0xff]
        %v1797 = vld [vmem:[%s1785 + $0x58] sm:$0xff]
        %v1798 = vld [vmem:[%s1785 + $0x60] sm:$0xff]
        %v1799 = vld [vmem:[%s1785 + $0x68] sm:$0xff]
        %v1800 = vld [vmem:[%s1785 + $0x70] sm:$0xff]
        %v1801 = vld [vmem:[%s1785 + $0x78] sm:$0xff]
        %s1802 = scalar_lea.vmem %s2, 2
        %v1803 = vld [vmem:[%s1802] sm:$0x1]
        %v1805 = vlaneseq
        %v1806 = vshrl.u32 %v1805, 7
        %v1807 = vsub.s32 0, %v1806
        %v1808 = vrot.slane %v1803, %v1807
        %1810 = vmatprep.subr.mxu0 0.0
        %1811 = vmatpush1.msra.mxu0 %v1786
        %1812 = vmatprep.subr.mxu0 0.0
        %1813 = vmatpush1.msra.mxu0 %v1787
        %1814 = vmatprep.subr.mxu0 0.0
        %1815 = vmatpush1.msra.mxu0 %v1788
        %1816 = vmatprep.subr.mxu0 0.0
        %1817 = vmatpush1.msra.mxu0 %v1789
        %1818 = vmatprep.subr.mxu0 0.0
        %1819 = vmatpush1.msra.mxu0 %v1790
        %1820 = vmatprep.subr.mxu0 0.0
        %1821 = vmatpush1.msra.mxu0 %v1791
        %1822 = vmatprep.subr.mxu0 0.0
        %1823 = vmatpush1.msra.mxu0 %v1792
        %1824 = vmatprep.subr.mxu0 0.0
        %1825 = vmatpush1.msra.mxu0 %v1793
        %1826 = vmatprep.subr.mxu0 0.0
        %1827 = vmatpush1.msra.mxu0 %v1794
        %1828 = vmatprep.subr.mxu0 0.0
        %1829 = vmatpush1.msra.mxu0 %v1795
        %1830 = vmatprep.subr.mxu0 0.0
        %1831 = vmatpush1.msra.mxu0 %v1796
        %1832 = vmatprep.subr.mxu0 0.0
        %1833 = vmatpush1.msra.mxu0 %v1797
        %1834 = vmatprep.subr.mxu0 0.0
        %1835 = vmatpush1.msra.mxu0 %v1798
        %1836 = vmatprep.subr.mxu0 0.0
        %1837 = vmatpush1.msra.mxu0 %v1799
        %1838 = vmatprep.subr.mxu0 0.0
        %1839 = vmatpush1.msra.mxu0 %v1800
        %1840 = vmatprep.subr.mxu0 0.0
        %1841 = vmatpush1.msra.mxu0 %v1801
        %1842 = vmatprep.subr.mxu0 0.0
        %1843 = vmatpush1.msra.mxu0 0.0
        %1844 = vmatprep.subr.mxu0 0.0
        %1845 = vmatpush1.msra.mxu0 0.0
        %1846 = vmatprep.subr.mxu0 0.0
        %1847 = vmatpush1.msra.mxu0 0.0
        %1848 = vmatprep.subr.mxu0 0.0
        %1849 = vmatpush1.msra.mxu0 0.0
        %1850 = vmatprep.subr.mxu0 0.0
        %1851 = vmatpush1.msra.mxu0 0.0
        %1852 = vmatprep.subr.mxu0 0.0
        %1853 = vmatpush1.msra.mxu0 0.0
        %1854 = vmatprep.subr.mxu0 0.0
        %1855 = vmatpush1.msra.mxu0 0.0
        %1856 = vmatprep.subr.mxu0 0.0
        %1857 = vmatpush1.msra.mxu0 0.0
        %1858 = vmatprep.subr.mxu0 0.0
        %1859 = vmatpush1.msra.mxu0 0.0
        %1860 = vmatprep.subr.mxu0 0.0
        %1861 = vmatpush1.msra.mxu0 0.0
        %1862 = vmatprep.subr.mxu0 0.0
        %1863 = vmatpush1.msra.mxu0 0.0
        %1864 = vmatprep.subr.mxu0 0.0
        %1865 = vmatpush1.msra.mxu0 0.0
        %1866 = vmatprep.subr.mxu0 0.0
        %1867 = vmatpush1.msra.mxu0 0.0
        %1868 = vmatprep.subr.mxu0 0.0
        %1869 = vmatpush1.msra.mxu0 0.0
        %1870 = vmatprep.subr.mxu0 0.0
        %1871 = vmatpush1.msra.mxu0 0.0
        %1872 = vmatprep.subr.mxu0 0.0
        %1873 = vmatpush1.msra.mxu0 0.0
        %1874 = vmatprep.mubr.f32.mxu0 0.0
        %1875 = vmatmul.mubr.f32.gmra.mrb[0].mxu0 %v1753
        %v1876 = vpop.f32.mrb[0].mxu0
        %v1877 = vadd.f32 %v1808, %v1876
        %v1878 = vpop.f32.mrb[0].mxu0
        %1879 = vmatprep.mubr.f32.mxu0 0.0
        %1880 = vmatmul.mubr.f32.gmra.mrb[0].mxu0 %v1754
        %v1881 = vpop.f32.mrb[0].mxu0
        %v1882 = vadd.f32 %v1808, %v1881
        %v1883 = vpop.f32.mrb[0].mxu0
        %1884 = vmatprep.mubr.f32.mxu0 0.0
        %1885 = vmatmul.mubr.f32.gmra.mrb[0].mxu0 %v1755
        %v1886 = vpop.f32.mrb[0].mxu0
        %v1887 = vadd.f32 %v1808, %v1886
        %v1888 = vpop.f32.mrb[0].mxu0
        %1889 = vmatprep.mubr.f32.mxu0 0.0
        %1890 = vmatmul.mubr.f32.gmra.mrb[0].mxu0 %v1756
        %v1891 = vpop.f32.mrb[0].mxu0
        %v1892 = vadd.f32 %v1808, %v1891
        %v1893 = vpop.f32.mrb[0].mxu0
        %1894 = vmatprep.mubr.f32.mxu0 0.0
        %1895 = vmatmul.mubr.f32.gmra.mrb[0].mxu0 %v1757
        %v1896 = vpop.f32.mrb[0].mxu0
        %v1897 = vadd.f32 %v1808, %v1896
        %v1898 = vpop.f32.mrb[0].mxu0
        %1899 = vmatprep.mubr.f32.mxu0 0.0
        %1900 = vmatmul.mubr.f32.gmra.mrb[0].mxu0 %v1758
        %v1901 = vpop.f32.mrb[0].mxu0
        %v1902 = vadd.f32 %v1808, %v1901
        %v1903 = vpop.f32.mrb[0].mxu0
        %1904 = vmatprep.mubr.f32.mxu0 0.0
        %1905 = vmatmul.mubr.f32.gmra.mrb[0].mxu0 %v1759
        %v1906 = vpop.f32.mrb[0].mxu0
        %v1907 = vadd.f32 %v1808, %v1906
        %v1908 = vpop.f32.mrb[0].mxu0
        %1909 = vmatprep.mubr.f32.mxu0 0.0
        %1910 = vmatmul.mubr.f32.gmra.mrb[0].mxu0 %v1760
        %v1911 = vpop.f32.mrb[0].mxu0
        %v1912 = vadd.f32 %v1808, %v1911
        %v1913 = vpop.f32.mrb[0].mxu0
        %1914 = vmatprep.mubr.f32.mxu0 0.0
        %1915 = vmatmul.mubr.f32.gmra.mrb[0].mxu0 %v1761
        %v1916 = vpop.f32.mrb[0].mxu0
        %v1917 = vadd.f32 %v1808, %v1916
        %v1918 = vpop.f32.mrb[0].mxu0
        %1919 = vmatprep.mubr.f32.mxu0 0.0
        %1920 = vmatmul.mubr.f32.gmra.mrb[0].mxu0 %v1762
        %v1921 = vpop.f32.mrb[0].mxu0
        %v1922 = vadd.f32 %v1808, %v1921
        %v1923 = vpop.f32.mrb[0].mxu0
        %1924 = vmatprep.mubr.f32.mxu0 0.0
        %1925 = vmatmul.mubr.f32.gmra.mrb[0].mxu0 %v1763
        %v1926 = vpop.f32.mrb[0].mxu0
        %v1927 = vadd.f32 %v1808, %v1926
        %v1928 = vpop.f32.mrb[0].mxu0
        %1929 = vmatprep.mubr.f32.mxu0 0.0
        %1930 = vmatmul.mubr.f32.gmra.mrb[0].mxu0 %v1764
        %v1931 = vpop.f32.mrb[0].mxu0
        %v1932 = vadd.f32 %v1808, %v1931
        %v1933 = vpop.f32.mrb[0].mxu0
        %1934 = vmatprep.mubr.f32.mxu0 0.0
        %1935 = vmatmul.mubr.f32.gmra.mrb[0].mxu0 %v1765
        %v1936 = vpop.f32.mrb[0].mxu0
        %v1937 = vadd.f32 %v1808, %v1936
        %v1938 = vpop.f32.mrb[0].mxu0
        %1939 = vmatprep.mubr.f32.mxu0 0.0
        %1940 = vmatmul.mubr.f32.gmra.mrb[0].mxu0 %v1766
        %v1941 = vpop.f32.mrb[0].mxu0
        %v1942 = vadd.f32 %v1808, %v1941
        %v1943 = vpop.f32.mrb[0].mxu0
        %1944 = vmatprep.mubr.f32.mxu0 0.0
        %1945 = vmatmul.mubr.f32.gmra.mrb[0].mxu0 %v1767
        %v1946 = vpop.f32.mrb[0].mxu0
        %v1947 = vadd.f32 %v1808, %v1946
        %v1948 = vpop.f32.mrb[0].mxu0
        %1949 = vmatprep.mubr.f32.mxu0 0.0
        %1950 = vmatmul.mubr.f32.gmra.mrb[0].mxu0 %v1768
        %v1951 = vpop.f32.mrb[0].mxu0
        %v1952 = vadd.f32 %v1808, %v1951
        %v1953 = vpop.f32.mrb[0].mxu0
        %1954 = vmatprep.mubr.f32.mxu0 0.0
        %1955 = vmatmul.mubr.f32.gmra.mrb[0].mxu0 %v1769
        %v1956 = vpop.f32.mrb[0].mxu0
        %v1957 = vadd.f32 %v1808, %v1956
        %v1958 = vpop.f32.mrb[0].mxu0
        %1959 = vmatprep.mubr.f32.mxu0 0.0
        %1960 = vmatmul.mubr.f32.gmra.mrb[0].mxu0 %v1770
        %v1961 = vpop.f32.mrb[0].mxu0
        %v1962 = vadd.f32 %v1808, %v1961
        %v1963 = vpop.f32.mrb[0].mxu0
        %1964 = vmatprep.mubr.f32.mxu0 0.0
        %1965 = vmatmul.mubr.f32.gmra.mrb[0].mxu0 %v1771
        %v1966 = vpop.f32.mrb[0].mxu0
        %v1967 = vadd.f32 %v1808, %v1966
        %v1968 = vpop.f32.mrb[0].mxu0
        %1969 = vmatprep.mubr.f32.mxu0 0.0
        %1970 = vmatmul.mubr.f32.gmra.mrb[0].mxu0 %v1772
        %v1971 = vpop.f32.mrb[0].mxu0
        %v1972 = vadd.f32 %v1808, %v1971
        %v1973 = vpop.f32.mrb[0].mxu0
        %1974 = vmatprep.mubr.f32.mxu0 0.0
        %1975 = vmatmul.mubr.f32.gmra.mrb[0].mxu0 %v1773
        %v1976 = vpop.f32.mrb[0].mxu0
        %v1977 = vadd.f32 %v1808, %v1976
        %v1978 = vpop.f32.mrb[0].mxu0
        %1979 = vmatprep.mubr.f32.mxu0 0.0
        %1980 = vmatmul.mubr.f32.gmra.mrb[0].mxu0 %v1774
        %v1981 = vpop.f32.mrb[0].mxu0
        %v1982 = vadd.f32 %v1808, %v1981
        %v1983 = vpop.f32.mrb[0].mxu0
        %1984 = vmatprep.mubr.f32.mxu0 0.0
        %1985 = vmatmul.mubr.f32.gmra.mrb[0].mxu0 %v1775
        %v1986 = vpop.f32.mrb[0].mxu0
        %v1987 = vadd.f32 %v1808, %v1986
        %v1988 = vpop.f32.mrb[0].mxu0
        %1989 = vmatprep.mubr.f32.mxu0 0.0
        %1990 = vmatmul.mubr.f32.gmra.mrb[0].mxu0 %v1776
        %v1991 = vpop.f32.mrb[0].mxu0
        %v1992 = vadd.f32 %v1808, %v1991
        %v1993 = vpop.f32.mrb[0].mxu0
        %1994 = vmatprep.mubr.f32.mxu0 0.0
        %1995 = vmatmul.mubr.f32.gmra.mrb[0].mxu0 %v1777
        %v1996 = vpop.f32.mrb[0].mxu0
        %v1997 = vadd.f32 %v1808, %v1996
        %v1998 = vpop.f32.mrb[0].mxu0
        %1999 = vmatprep.mubr.f32.mxu0 0.0
        %2000 = vmatmul.mubr.f32.gmra.mrb[0].mxu0 %v1778
        %v2001 = vpop.f32.mrb[0].mxu0
        %v2002 = vadd.f32 %v1808, %v2001
        %v2003 = vpop.f32.mrb[0].mxu0
        %2004 = vmatprep.mubr.f32.mxu0 0.0
        %2005 = vmatmul.mubr.f32.gmra.mrb[0].mxu0 %v1779
        %v2006 = vpop.f32.mrb[0].mxu0
        %v2007 = vadd.f32 %v1808, %v2006
        %v2008 = vpop.f32.mrb[0].mxu0
        %2009 = vmatprep.mubr.f32.mxu0 0.0
        %2010 = vmatmul.mubr.f32.gmra.mrb[0].mxu0 %v1780
        %v2011 = vpop.f32.mrb[0].mxu0
        %v2012 = vadd.f32 %v1808, %v2011
        %v2013 = vpop.f32.mrb[0].mxu0
        %2014 = vmatprep.mubr.f32.mxu0 0.0
        %2015 = vmatmul.mubr.f32.gmra.mrb[0].mxu0 %v1781
        %v2016 = vpop.f32.mrb[0].mxu0
        %v2017 = vadd.f32 %v1808, %v2016
        %v2018 = vpop.f32.mrb[0].mxu0
        %2019 = vmatprep.mubr.f32.mxu0 0.0
        %2020 = vmatmul.mubr.f32.gmra.mrb[0].mxu0 %v1782
        %v2021 = vpop.f32.mrb[0].mxu0
        %v2022 = vadd.f32 %v1808, %v2021
        %v2023 = vpop.f32.mrb[0].mxu0
        %2024 = vmatprep.mubr.f32.mxu0 0.0
        %2025 = vmatmul.mubr.f32.gmra.mrb[0].mxu0 %v1783
        %v2026 = vpop.f32.mrb[0].mxu0
        %v2027 = vadd.f32 %v1808, %v2026
        %v2028 = vpop.f32.mrb[0].mxu0
        %2029 = vmatprep.mubr.f32.mxu0 0.0
        %2030 = vmatmul.mubr.f32.gmra.mrb[0].mxu0 %v1784
        %v2031 = vpop.f32.mrb[0].mxu0
        %v2032 = vadd.f32 %v1808, %v2031
        %v2033 = vpop.f32.mrb[0].mxu0
        %2034 = vdwg.mxu0
        %vm2035 = vcmp.ge.f32.partialorder %v1877, 0.0
        %vm2036 = vcmp.ge.f32.partialorder %v1882, 0.0
        %vm2037 = vcmp.ge.f32.partialorder %v1887, 0.0
        %vm2038 = vcmp.ge.f32.partialorder %v1892, 0.0
        %vm2039 = vcmp.ge.f32.partialorder %v1897, 0.0
        %vm2040 = vcmp.ge.f32.partialorder %v1902, 0.0
        %vm2041 = vcmp.ge.f32.partialorder %v1907, 0.0
        %vm2042 = vcmp.ge.f32.partialorder %v1912, 0.0
        %vm2043 = vcmp.ge.f32.partialorder %v1917, 0.0
        %vm2044 = vcmp.ge.f32.partialorder %v1922, 0.0
        %vm2045 = vcmp.ge.f32.partialorder %v1927, 0.0
        %vm2046 = vcmp.ge.f32.partialorder %v1932, 0.0
        %vm2047 = vcmp.ge.f32.partialorder %v1937, 0.0
        %vm2048 = vcmp.ge.f32.partialorder %v1942, 0.0
        %vm2049 = vcmp.ge.f32.partialorder %v1947, 0.0
        %vm2050 = vcmp.ge.f32.partialorder %v1952, 0.0
        %vm2051 = vcmp.ge.f32.partialorder %v1957, 0.0
        %vm2052 = vcmp.ge.f32.partialorder %v1962, 0.0
        %vm2053 = vcmp.ge.f32.partialorder %v1967, 0.0
        %vm2054 = vcmp.ge.f32.partialorder %v1972, 0.0
        %vm2055 = vcmp.ge.f32.partialorder %v1977, 0.0
        %vm2056 = vcmp.ge.f32.partialorder %v1982, 0.0
        %vm2057 = vcmp.ge.f32.partialorder %v1987, 0.0
        %vm2058 = vcmp.ge.f32.partialorder %v1992, 0.0
        %vm2059 = vcmp.ge.f32.partialorder %v1997, 0.0
        %vm2060 = vcmp.ge.f32.partialorder %v2002, 0.0
        %vm2061 = vcmp.ge.f32.partialorder %v2007, 0.0
        %vm2062 = vcmp.ge.f32.partialorder %v2012, 0.0
        %vm2063 = vcmp.ge.f32.partialorder %v2017, 0.0
        %vm2064 = vcmp.ge.f32.partialorder %v2022, 0.0
        %vm2065 = vcmp.ge.f32.partialorder %v2027, 0.0
        %vm2066 = vcmp.ge.f32.partialorder %v2032, 0.0
        %v2067 = vmul.f32 %v1877, 0.01
        %v2068 = vmul.f32 %v1882, 0.01
        %v2069 = vmul.f32 %v1887, 0.01
        %v2070 = vmul.f32 %v1892, 0.01
        %v2071 = vmul.f32 %v1897, 0.01
        %v2072 = vmul.f32 %v1902, 0.01
        %v2073 = vmul.f32 %v1907, 0.01
        %v2074 = vmul.f32 %v1912, 0.01
        %v2075 = vmul.f32 %v1917, 0.01
        %v2076 = vmul.f32 %v1922, 0.01
        %v2077 = vmul.f32 %v1927, 0.01
        %v2078 = vmul.f32 %v1932, 0.01
        %v2079 = vmul.f32 %v1937, 0.01
        %v2080 = vmul.f32 %v1942, 0.01
        %v2081 = vmul.f32 %v1947, 0.01
        %v2082 = vmul.f32 %v1952, 0.01
        %v2083 = vmul.f32 %v1957, 0.01
        %v2084 = vmul.f32 %v1962, 0.01
        %v2085 = vmul.f32 %v1967, 0.01
        %v2086 = vmul.f32 %v1972, 0.01
        %v2087 = vmul.f32 %v1977, 0.01
        %v2088 = vmul.f32 %v1982, 0.01
        %v2089 = vmul.f32 %v1987, 0.01
        %v2090 = vmul.f32 %v1992, 0.01
        %v2091 = vmul.f32 %v1997, 0.01
        %v2092 = vmul.f32 %v2002, 0.01
        %v2093 = vmul.f32 %v2007, 0.01
        %v2094 = vmul.f32 %v2012, 0.01
        %v2095 = vmul.f32 %v2017, 0.01
        %v2096 = vmul.f32 %v2022, 0.01
        %v2097 = vmul.f32 %v2027, 0.01
        %v2098 = vmul.f32 %v2032, 0.01
        %v2099 = vsel %vm2035, %v1877, %v2067
        %v2100 = vsel %vm2036, %v1882, %v2068
        %v2101 = vsel %vm2037, %v1887, %v2069
        %v2102 = vsel %vm2038, %v1892, %v2070
        %v2103 = vsel %vm2039, %v1897, %v2071
        %v2104 = vsel %vm2040, %v1902, %v2072
        %v2105 = vsel %vm2041, %v1907, %v2073
        %v2106 = vsel %vm2042, %v1912, %v2074
        %v2107 = vsel %vm2043, %v1917, %v2075
        %v2108 = vsel %vm2044, %v1922, %v2076
        %v2109 = vsel %vm2045, %v1927, %v2077
        %v2110 = vsel %vm2046, %v1932, %v2078
        %v2111 = vsel %vm2047, %v1937, %v2079
        %v2112 = vsel %vm2048, %v1942, %v2080
        %v2113 = vsel %vm2049, %v1947, %v2081
        %v2114 = vsel %vm2050, %v1952, %v2082
        %v2115 = vsel %vm2051, %v1957, %v2083
        %v2116 = vsel %vm2052, %v1962, %v2084
        %v2117 = vsel %vm2053, %v1967, %v2085
        %v2118 = vsel %vm2054, %v1972, %v2086
        %v2119 = vsel %vm2055, %v1977, %v2087
        %v2120 = vsel %vm2056, %v1982, %v2088
        %v2121 = vsel %vm2057, %v1987, %v2089
        %v2122 = vsel %vm2058, %v1992, %v2090
        %v2123 = vsel %vm2059, %v1997, %v2091
        %v2124 = vsel %vm2060, %v2002, %v2092
        %v2125 = vsel %vm2061, %v2007, %v2093
        %v2126 = vsel %vm2062, %v2012, %v2094
        %v2127 = vsel %vm2063, %v2017, %v2095
        %v2128 = vsel %vm2064, %v2022, %v2096
        %v2129 = vsel %vm2065, %v2027, %v2097
        %v2130 = vsel %vm2066, %v2032, %v2098
        %s2131 = scalar_lea.vmem [#allocation7], 256
        %v2132 = vld [vmem:[%s2131] sm:$0xff]
        %v2133 = vld [vmem:[%s2131 + $0x8] sm:$0xff]
        %v2134 = vld [vmem:[%s2131 + $0x10] sm:$0xff]
        %v2135 = vld [vmem:[%s2131 + $0x18] sm:$0xff]
        %v2136 = vld [vmem:[%s2131 + $0x20] sm:$0xff]
        %v2137 = vld [vmem:[%s2131 + $0x28] sm:$0xff]
        %v2138 = vld [vmem:[%s2131 + $0x30] sm:$0xff]
        %v2139 = vld [vmem:[%s2131 + $0x38] sm:$0xff]
        %v2140 = vld [vmem:[%s2131 + $0x40] sm:$0xff]
        %v2141 = vld [vmem:[%s2131 + $0x48] sm:$0xff]
        %v2142 = vld [vmem:[%s2131 + $0x50] sm:$0xff]
        %v2143 = vld [vmem:[%s2131 + $0x58] sm:$0xff]
        %v2144 = vld [vmem:[%s2131 + $0x60] sm:$0xff]
        %v2145 = vld [vmem:[%s2131 + $0x68] sm:$0xff]
        %v2146 = vld [vmem:[%s2131 + $0x70] sm:$0xff]
        %v2147 = vld [vmem:[%s2131 + $0x78] sm:$0xff]
        %s2148 = scalar_lea.vmem %s4, 2
        %v2149 = vld [vmem:[%s2148] sm:$0x1]
        %v2151 = vlaneseq
        %v2152 = vshrl.u32 %v2151, 7
        %v2153 = vsub.s32 0, %v2152
        %v2154 = vrot.slane %v2149, %v2153
        %2156 = vmatprep.subr.mxu0 0.0
        %2157 = vmatpush1.msra.mxu0 %v2132
        %2158 = vmatprep.subr.mxu0 0.0
        %2159 = vmatpush1.msra.mxu0 %v2133
        %2160 = vmatprep.subr.mxu0 0.0
        %2161 = vmatpush1.msra.mxu0 %v2134
        %2162 = vmatprep.subr.mxu0 0.0
        %2163 = vmatpush1.msra.mxu0 %v2135
        %2164 = vmatprep.subr.mxu0 0.0
        %2165 = vmatpush1.msra.mxu0 %v2136
        %2166 = vmatprep.subr.mxu0 0.0
        %2167 = vmatpush1.msra.mxu0 %v2137
        %2168 = vmatprep.subr.mxu0 0.0
        %2169 = vmatpush1.msra.mxu0 %v2138
        %2170 = vmatprep.subr.mxu0 0.0
        %2171 = vmatpush1.msra.mxu0 %v2139
        %2172 = vmatprep.subr.mxu0 0.0
        %2173 = vmatpush1.msra.mxu0 %v2140
        %2174 = vmatprep.subr.mxu0 0.0
        %2175 = vmatpush1.msra.mxu0 %v2141
        %2176 = vmatprep.subr.mxu0 0.0
        %2177 = vmatpush1.msra.mxu0 %v2142
        %2178 = vmatprep.subr.mxu0 0.0
        %2179 = vmatpush1.msra.mxu0 %v2143
        %2180 = vmatprep.subr.mxu0 0.0
        %2181 = vmatpush1.msra.mxu0 %v2144
        %2182 = vmatprep.subr.mxu0 0.0
        %2183 = vmatpush1.msra.mxu0 %v2145
        %2184 = vmatprep.subr.mxu0 0.0
        %2185 = vmatpush1.msra.mxu0 %v2146
        %2186 = vmatprep.subr.mxu0 0.0
        %2187 = vmatpush1.msra.mxu0 %v2147
        %2188 = vmatprep.subr.mxu0 0.0
        %2189 = vmatpush1.msra.mxu0 0.0
        %2190 = vmatprep.subr.mxu0 0.0
        %2191 = vmatpush1.msra.mxu0 0.0
        %2192 = vmatprep.subr.mxu0 0.0
        %2193 = vmatpush1.msra.mxu0 0.0
        %2194 = vmatprep.subr.mxu0 0.0
        %2195 = vmatpush1.msra.mxu0 0.0
        %2196 = vmatprep.subr.mxu0 0.0
        %2197 = vmatpush1.msra.mxu0 0.0
        %2198 = vmatprep.subr.mxu0 0.0
        %2199 = vmatpush1.msra.mxu0 0.0
        %2200 = vmatprep.subr.mxu0 0.0
        %2201 = vmatpush1.msra.mxu0 0.0
        %2202 = vmatprep.subr.mxu0 0.0
        %2203 = vmatpush1.msra.mxu0 0.0
        %2204 = vmatprep.subr.mxu0 0.0
        %2205 = vmatpush1.msra.mxu0 0.0
        %2206 = vmatprep.subr.mxu0 0.0
        %2207 = vmatpush1.msra.mxu0 0.0
        %2208 = vmatprep.subr.mxu0 0.0
        %2209 = vmatpush1.msra.mxu0 0.0
        %2210 = vmatprep.subr.mxu0 0.0
        %2211 = vmatpush1.msra.mxu0 0.0
        %2212 = vmatprep.subr.mxu0 0.0
        %2213 = vmatpush1.msra.mxu0 0.0
        %2214 = vmatprep.subr.mxu0 0.0
        %2215 = vmatpush1.msra.mxu0 0.0
        %2216 = vmatprep.subr.mxu0 0.0
        %2217 = vmatpush1.msra.mxu0 0.0
        %2218 = vmatprep.subr.mxu0 0.0
        %2219 = vmatpush1.msra.mxu0 0.0
        %2220 = vmatprep.mubr.f32.mxu0 0.0
        %2221 = vmatmul.mubr.f32.gmra.mrb[0].mxu0 %v2099
        %v2222 = vpop.f32.mrb[0].mxu0
        %v2223 = vadd.f32 %v2154, %v2222
        %v2224 = vpop.f32.mrb[0].mxu0
        %2225 = vmatprep.mubr.f32.mxu0 0.0
        %2226 = vmatmul.mubr.f32.gmra.mrb[0].mxu0 %v2100
        %v2227 = vpop.f32.mrb[0].mxu0
        %v2228 = vadd.f32 %v2154, %v2227
        %v2229 = vpop.f32.mrb[0].mxu0
        %2230 = vmatprep.mubr.f32.mxu0 0.0
        %2231 = vmatmul.mubr.f32.gmra.mrb[0].mxu0 %v2101
        %v2232 = vpop.f32.mrb[0].mxu0
        %v2233 = vadd.f32 %v2154, %v2232
        %v2234 = vpop.f32.mrb[0].mxu0
        %2235 = vmatprep.mubr.f32.mxu0 0.0
        %2236 = vmatmul.mubr.f32.gmra.mrb[0].mxu0 %v2102
        %v2237 = vpop.f32.mrb[0].mxu0
        %v2238 = vadd.f32 %v2154, %v2237
        %v2239 = vpop.f32.mrb[0].mxu0
        %2240 = vmatprep.mubr.f32.mxu0 0.0
        %2241 = vmatmul.mubr.f32.gmra.mrb[0].mxu0 %v2103
        %v2242 = vpop.f32.mrb[0].mxu0
        %v2243 = vadd.f32 %v2154, %v2242
        %v2244 = vpop.f32.mrb[0].mxu0
        %2245 = vmatprep.mubr.f32.mxu0 0.0
        %2246 = vmatmul.mubr.f32.gmra.mrb[0].mxu0 %v2104
        %v2247 = vpop.f32.mrb[0].mxu0
        %v2248 = vadd.f32 %v2154, %v2247
        %v2249 = vpop.f32.mrb[0].mxu0
        %2250 = vmatprep.mubr.f32.mxu0 0.0
        %2251 = vmatmul.mubr.f32.gmra.mrb[0].mxu0 %v2105
        %v2252 = vpop.f32.mrb[0].mxu0
        %v2253 = vadd.f32 %v2154, %v2252
        %v2254 = vpop.f32.mrb[0].mxu0
        %2255 = vmatprep.mubr.f32.mxu0 0.0
        %2256 = vmatmul.mubr.f32.gmra.mrb[0].mxu0 %v2106
        %v2257 = vpop.f32.mrb[0].mxu0
        %v2258 = vadd.f32 %v2154, %v2257
        %v2259 = vpop.f32.mrb[0].mxu0
        %2260 = vmatprep.mubr.f32.mxu0 0.0
        %2261 = vmatmul.mubr.f32.gmra.mrb[0].mxu0 %v2107
        %v2262 = vpop.f32.mrb[0].mxu0
        %v2263 = vadd.f32 %v2154, %v2262
        %v2264 = vpop.f32.mrb[0].mxu0
        %2265 = vmatprep.mubr.f32.mxu0 0.0
        %2266 = vmatmul.mubr.f32.gmra.mrb[0].mxu0 %v2108
        %v2267 = vpop.f32.mrb[0].mxu0
        %v2268 = vadd.f32 %v2154, %v2267
        %v2269 = vpop.f32.mrb[0].mxu0
        %2270 = vmatprep.mubr.f32.mxu0 0.0
        %2271 = vmatmul.mubr.f32.gmra.mrb[0].mxu0 %v2109
        %v2272 = vpop.f32.mrb[0].mxu0
        %v2273 = vadd.f32 %v2154, %v2272
        %v2274 = vpop.f32.mrb[0].mxu0
        %2275 = vmatprep.mubr.f32.mxu0 0.0
        %2276 = vmatmul.mubr.f32.gmra.mrb[0].mxu0 %v2110
        %v2277 = vpop.f32.mrb[0].mxu0
        %v2278 = vadd.f32 %v2154, %v2277
        %v2279 = vpop.f32.mrb[0].mxu0
        %2280 = vmatprep.mubr.f32.mxu0 0.0
        %2281 = vmatmul.mubr.f32.gmra.mrb[0].mxu0 %v2111
        %v2282 = vpop.f32.mrb[0].mxu0
        %v2283 = vadd.f32 %v2154, %v2282
        %v2284 = vpop.f32.mrb[0].mxu0
        %2285 = vmatprep.mubr.f32.mxu0 0.0
        %2286 = vmatmul.mubr.f32.gmra.mrb[0].mxu0 %v2112
        %v2287 = vpop.f32.mrb[0].mxu0
        %v2288 = vadd.f32 %v2154, %v2287
        %v2289 = vpop.f32.mrb[0].mxu0
        %2290 = vmatprep.mubr.f32.mxu0 0.0
        %2291 = vmatmul.mubr.f32.gmra.mrb[0].mxu0 %v2113
        %v2292 = vpop.f32.mrb[0].mxu0
        %v2293 = vadd.f32 %v2154, %v2292
        %v2294 = vpop.f32.mrb[0].mxu0
        %2295 = vmatprep.mubr.f32.mxu0 0.0
        %2296 = vmatmul.mubr.f32.gmra.mrb[0].mxu0 %v2114
        %v2297 = vpop.f32.mrb[0].mxu0
        %v2298 = vadd.f32 %v2154, %v2297
        %v2299 = vpop.f32.mrb[0].mxu0
        %2300 = vmatprep.mubr.f32.mxu0 0.0
        %2301 = vmatmul.mubr.f32.gmra.mrb[0].mxu0 %v2115
        %v2302 = vpop.f32.mrb[0].mxu0
        %v2303 = vadd.f32 %v2154, %v2302
        %v2304 = vpop.f32.mrb[0].mxu0
        %2305 = vmatprep.mubr.f32.mxu0 0.0
        %2306 = vmatmul.mubr.f32.gmra.mrb[0].mxu0 %v2116
        %v2307 = vpop.f32.mrb[0].mxu0
        %v2308 = vadd.f32 %v2154, %v2307
        %v2309 = vpop.f32.mrb[0].mxu0
        %2310 = vmatprep.mubr.f32.mxu0 0.0
        %2311 = vmatmul.mubr.f32.gmra.mrb[0].mxu0 %v2117
        %v2312 = vpop.f32.mrb[0].mxu0
        %v2313 = vadd.f32 %v2154, %v2312
        %v2314 = vpop.f32.mrb[0].mxu0
        %2315 = vmatprep.mubr.f32.mxu0 0.0
        %2316 = vmatmul.mubr.f32.gmra.mrb[0].mxu0 %v2118
        %v2317 = vpop.f32.mrb[0].mxu0
        %v2318 = vadd.f32 %v2154, %v2317
        %v2319 = vpop.f32.mrb[0].mxu0
        %2320 = vmatprep.mubr.f32.mxu0 0.0
        %2321 = vmatmul.mubr.f32.gmra.mrb[0].mxu0 %v2119
        %v2322 = vpop.f32.mrb[0].mxu0
        %v2323 = vadd.f32 %v2154, %v2322
        %v2324 = vpop.f32.mrb[0].mxu0
        %2325 = vmatprep.mubr.f32.mxu0 0.0
        %2326 = vmatmul.mubr.f32.gmra.mrb[0].mxu0 %v2120
        %v2327 = vpop.f32.mrb[0].mxu0
        %v2328 = vadd.f32 %v2154, %v2327
        %v2329 = vpop.f32.mrb[0].mxu0
        %2330 = vmatprep.mubr.f32.mxu0 0.0
        %2331 = vmatmul.mubr.f32.gmra.mrb[0].mxu0 %v2121
        %v2332 = vpop.f32.mrb[0].mxu0
        %v2333 = vadd.f32 %v2154, %v2332
        %v2334 = vpop.f32.mrb[0].mxu0
        %2335 = vmatprep.mubr.f32.mxu0 0.0
        %2336 = vmatmul.mubr.f32.gmra.mrb[0].mxu0 %v2122
        %v2337 = vpop.f32.mrb[0].mxu0
        %v2338 = vadd.f32 %v2154, %v2337
        %v2339 = vpop.f32.mrb[0].mxu0
        %2340 = vmatprep.mubr.f32.mxu0 0.0
        %2341 = vmatmul.mubr.f32.gmra.mrb[0].mxu0 %v2123
        %v2342 = vpop.f32.mrb[0].mxu0
        %v2343 = vadd.f32 %v2154, %v2342
        %v2344 = vpop.f32.mrb[0].mxu0
        %2345 = vmatprep.mubr.f32.mxu0 0.0
        %2346 = vmatmul.mubr.f32.gmra.mrb[0].mxu0 %v2124
        %v2347 = vpop.f32.mrb[0].mxu0
        %v2348 = vadd.f32 %v2154, %v2347
        %v2349 = vpop.f32.mrb[0].mxu0
        %2350 = vmatprep.mubr.f32.mxu0 0.0
        %2351 = vmatmul.mubr.f32.gmra.mrb[0].mxu0 %v2125
        %v2352 = vpop.f32.mrb[0].mxu0
        %v2353 = vadd.f32 %v2154, %v2352
        %v2354 = vpop.f32.mrb[0].mxu0
        %2355 = vmatprep.mubr.f32.mxu0 0.0
        %2356 = vmatmul.mubr.f32.gmra.mrb[0].mxu0 %v2126
        %v2357 = vpop.f32.mrb[0].mxu0
        %v2358 = vadd.f32 %v2154, %v2357
        %v2359 = vpop.f32.mrb[0].mxu0
        %2360 = vmatprep.mubr.f32.mxu0 0.0
        %2361 = vmatmul.mubr.f32.gmra.mrb[0].mxu0 %v2127
        %v2362 = vpop.f32.mrb[0].mxu0
        %v2363 = vadd.f32 %v2154, %v2362
        %v2364 = vpop.f32.mrb[0].mxu0
        %2365 = vmatprep.mubr.f32.mxu0 0.0
        %2366 = vmatmul.mubr.f32.gmra.mrb[0].mxu0 %v2128
        %v2367 = vpop.f32.mrb[0].mxu0
        %v2368 = vadd.f32 %v2154, %v2367
        %v2369 = vpop.f32.mrb[0].mxu0
        %2370 = vmatprep.mubr.f32.mxu0 0.0
        %2371 = vmatmul.mubr.f32.gmra.mrb[0].mxu0 %v2129
        %v2372 = vpop.f32.mrb[0].mxu0
        %v2373 = vadd.f32 %v2154, %v2372
        %v2374 = vpop.f32.mrb[0].mxu0
        %2375 = vmatprep.mubr.f32.mxu0 0.0
        %2376 = vmatmul.mubr.f32.gmra.mrb[0].mxu0 %v2130
        %v2377 = vpop.f32.mrb[0].mxu0
        %v2378 = vadd.f32 %v2154, %v2377
        %v2379 = vpop.f32.mrb[0].mxu0
        %2380 = vdwg.mxu0
        %vm2381 = vcmp.ge.f32.partialorder %v2223, 0.0
        %vm2382 = vcmp.ge.f32.partialorder %v2228, 0.0
        %vm2383 = vcmp.ge.f32.partialorder %v2233, 0.0
        %vm2384 = vcmp.ge.f32.partialorder %v2238, 0.0
        %vm2385 = vcmp.ge.f32.partialorder %v2243, 0.0
        %vm2386 = vcmp.ge.f32.partialorder %v2248, 0.0
        %vm2387 = vcmp.ge.f32.partialorder %v2253, 0.0
        %vm2388 = vcmp.ge.f32.partialorder %v2258, 0.0
        %vm2389 = vcmp.ge.f32.partialorder %v2263, 0.0
        %vm2390 = vcmp.ge.f32.partialorder %v2268, 0.0
        %vm2391 = vcmp.ge.f32.partialorder %v2273, 0.0
        %vm2392 = vcmp.ge.f32.partialorder %v2278, 0.0
        %vm2393 = vcmp.ge.f32.partialorder %v2283, 0.0
        %vm2394 = vcmp.ge.f32.partialorder %v2288, 0.0
        %vm2395 = vcmp.ge.f32.partialorder %v2293, 0.0
        %vm2396 = vcmp.ge.f32.partialorder %v2298, 0.0
        %vm2397 = vcmp.ge.f32.partialorder %v2303, 0.0
        %vm2398 = vcmp.ge.f32.partialorder %v2308, 0.0
        %vm2399 = vcmp.ge.f32.partialorder %v2313, 0.0
        %vm2400 = vcmp.ge.f32.partialorder %v2318, 0.0
        %vm2401 = vcmp.ge.f32.partialorder %v2323, 0.0
        %vm2402 = vcmp.ge.f32.partialorder %v2328, 0.0
        %vm2403 = vcmp.ge.f32.partialorder %v2333, 0.0
        %vm2404 = vcmp.ge.f32.partialorder %v2338, 0.0
        %vm2405 = vcmp.ge.f32.partialorder %v2343, 0.0
        %vm2406 = vcmp.ge.f32.partialorder %v2348, 0.0
        %vm2407 = vcmp.ge.f32.partialorder %v2353, 0.0
        %vm2408 = vcmp.ge.f32.partialorder %v2358, 0.0
        %vm2409 = vcmp.ge.f32.partialorder %v2363, 0.0
        %vm2410 = vcmp.ge.f32.partialorder %v2368, 0.0
        %vm2411 = vcmp.ge.f32.partialorder %v2373, 0.0
        %vm2412 = vcmp.ge.f32.partialorder %v2378, 0.0
        %v2413 = vmul.f32 %v2223, 0.01
        %v2414 = vmul.f32 %v2228, 0.01
        %v2415 = vmul.f32 %v2233, 0.01
        %v2416 = vmul.f32 %v2238, 0.01
        %v2417 = vmul.f32 %v2243, 0.01
        %v2418 = vmul.f32 %v2248, 0.01
        %v2419 = vmul.f32 %v2253, 0.01
        %v2420 = vmul.f32 %v2258, 0.01
        %v2421 = vmul.f32 %v2263, 0.01
        %v2422 = vmul.f32 %v2268, 0.01
        %v2423 = vmul.f32 %v2273, 0.01
        %v2424 = vmul.f32 %v2278, 0.01
        %v2425 = vmul.f32 %v2283, 0.01
        %v2426 = vmul.f32 %v2288, 0.01
        %v2427 = vmul.f32 %v2293, 0.01
        %v2428 = vmul.f32 %v2298, 0.01
        %v2429 = vmul.f32 %v2303, 0.01
        %v2430 = vmul.f32 %v2308, 0.01
        %v2431 = vmul.f32 %v2313, 0.01
        %v2432 = vmul.f32 %v2318, 0.01
        %v2433 = vmul.f32 %v2323, 0.01
        %v2434 = vmul.f32 %v2328, 0.01
        %v2435 = vmul.f32 %v2333, 0.01
        %v2436 = vmul.f32 %v2338, 0.01
        %v2437 = vmul.f32 %v2343, 0.01
        %v2438 = vmul.f32 %v2348, 0.01
        %v2439 = vmul.f32 %v2353, 0.01
        %v2440 = vmul.f32 %v2358, 0.01
        %v2441 = vmul.f32 %v2363, 0.01
        %v2442 = vmul.f32 %v2368, 0.01
        %v2443 = vmul.f32 %v2373, 0.01
        %v2444 = vmul.f32 %v2378, 0.01
        %v2445 = vsel %vm2381, %v2223, %v2413
        %v2446 = vsel %vm2382, %v2228, %v2414
        %v2447 = vsel %vm2383, %v2233, %v2415
        %v2448 = vsel %vm2384, %v2238, %v2416
        %v2449 = vsel %vm2385, %v2243, %v2417
        %v2450 = vsel %vm2386, %v2248, %v2418
        %v2451 = vsel %vm2387, %v2253, %v2419
        %v2452 = vsel %vm2388, %v2258, %v2420
        %v2453 = vsel %vm2389, %v2263, %v2421
        %v2454 = vsel %vm2390, %v2268, %v2422
        %v2455 = vsel %vm2391, %v2273, %v2423
        %v2456 = vsel %vm2392, %v2278, %v2424
        %v2457 = vsel %vm2393, %v2283, %v2425
        %v2458 = vsel %vm2394, %v2288, %v2426
        %v2459 = vsel %vm2395, %v2293, %v2427
        %v2460 = vsel %vm2396, %v2298, %v2428
        %v2461 = vsel %vm2397, %v2303, %v2429
        %v2462 = vsel %vm2398, %v2308, %v2430
        %v2463 = vsel %vm2399, %v2313, %v2431
        %v2464 = vsel %vm2400, %v2318, %v2432
        %v2465 = vsel %vm2401, %v2323, %v2433
        %v2466 = vsel %vm2402, %v2328, %v2434
        %v2467 = vsel %vm2403, %v2333, %v2435
        %v2468 = vsel %vm2404, %v2338, %v2436
        %v2469 = vsel %vm2405, %v2343, %v2437
        %v2470 = vsel %vm2406, %v2348, %v2438
        %v2471 = vsel %vm2407, %v2353, %v2439
        %v2472 = vsel %vm2408, %v2358, %v2440
        %v2473 = vsel %vm2409, %v2363, %v2441
        %v2474 = vsel %vm2410, %v2368, %v2442
        %v2475 = vsel %vm2411, %v2373, %v2443
        %v2476 = vsel %vm2412, %v2378, %v2444
        %v2477 = vmax.f32 %v1720, %v2445
        %v2478 = vmax.f32 %v1721, %v2446
        %v2479 = vmax.f32 %v1722, %v2447
        %v2480 = vmax.f32 %v1723, %v2448
        %v2481 = vmax.f32 %v1724, %v2449
        %v2482 = vmax.f32 %v1725, %v2450
        %v2483 = vmax.f32 %v1726, %v2451
        %v2484 = vmax.f32 %v1727, %v2452
        %v2485 = vmax.f32 %v1728, %v2453
        %v2486 = vmax.f32 %v1729, %v2454
        %v2487 = vmax.f32 %v1730, %v2455
        %v2488 = vmax.f32 %v1731, %v2456
        %v2489 = vmax.f32 %v1732, %v2457
        %v2490 = vmax.f32 %v1733, %v2458
        %v2491 = vmax.f32 %v1734, %v2459
        %v2492 = vmax.f32 %v1735, %v2460
        %v2493 = vmax.f32 %v1736, %v2461
        %v2494 = vmax.f32 %v1737, %v2462
        %v2495 = vmax.f32 %v1738, %v2463
        %v2496 = vmax.f32 %v1739, %v2464
        %v2497 = vmax.f32 %v1740, %v2465
        %v2498 = vmax.f32 %v1741, %v2466
        %v2499 = vmax.f32 %v1742, %v2467
        %v2500 = vmax.f32 %v1743, %v2468
        %v2501 = vmax.f32 %v1744, %v2469
        %v2502 = vmax.f32 %v1745, %v2470
        %v2503 = vmax.f32 %v1746, %v2471
        %v2504 = vmax.f32 %v1747, %v2472
        %v2505 = vmax.f32 %v1748, %v2473
        %v2506 = vmax.f32 %v1749, %v2474
        %v2507 = vmax.f32 %v1750, %v2475
        %v2508 = vmax.f32 %v1751, %v2476
        %s2509 = scalar_lea.vmem %s238, 384 [#allocation2]
        %v2510 = vld [vmem:[%s2509] sm:$0xff]
        %v2511 = vld [vmem:[%s2509 + $0x8] sm:$0xff]
        %v2512 = vld [vmem:[%s2509 + $0x10] sm:$0xff]
        %v2513 = vld [vmem:[%s2509 + $0x18] sm:$0xff]
        %v2514 = vld [vmem:[%s2509 + $0x20] sm:$0xff]
        %v2515 = vld [vmem:[%s2509 + $0x28] sm:$0xff]
        %v2516 = vld [vmem:[%s2509 + $0x30] sm:$0xff]
        %v2517 = vld [vmem:[%s2509 + $0x38] sm:$0xff]
        %v2518 = vld [vmem:[%s2509 + $0x40] sm:$0xff]
        %v2519 = vld [vmem:[%s2509 + $0x48] sm:$0xff]
        %v2520 = vld [vmem:[%s2509 + $0x50] sm:$0xff]
        %v2521 = vld [vmem:[%s2509 + $0x58] sm:$0xff]
        %v2522 = vld [vmem:[%s2509 + $0x60] sm:$0xff]
        %v2523 = vld [vmem:[%s2509 + $0x68] sm:$0xff]
        %v2524 = vld [vmem:[%s2509 + $0x70] sm:$0xff]
        %v2525 = vld [vmem:[%s2509 + $0x78] sm:$0xff]
        %v2526 = vld [vmem:[%s2509 + $0x200] sm:$0xff]
        %v2527 = vld [vmem:[%s2509 + $0x208] sm:$0xff]
        %v2528 = vld [vmem:[%s2509 + $0x210] sm:$0xff]
        %v2529 = vld [vmem:[%s2509 + $0x218] sm:$0xff]
        %v2530 = vld [vmem:[%s2509 + $0x220] sm:$0xff]
        %v2531 = vld [vmem:[%s2509 + $0x228] sm:$0xff]
        %v2532 = vld [vmem:[%s2509 + $0x230] sm:$0xff]
        %v2533 = vld [vmem:[%s2509 + $0x238] sm:$0xff]
        %v2534 = vld [vmem:[%s2509 + $0x240] sm:$0xff]
        %v2535 = vld [vmem:[%s2509 + $0x248] sm:$0xff]
        %v2536 = vld [vmem:[%s2509 + $0x250] sm:$0xff]
        %v2537 = vld [vmem:[%s2509 + $0x258] sm:$0xff]
        %v2538 = vld [vmem:[%s2509 + $0x260] sm:$0xff]
        %v2539 = vld [vmem:[%s2509 + $0x268] sm:$0xff]
        %v2540 = vld [vmem:[%s2509 + $0x270] sm:$0xff]
        %v2541 = vld [vmem:[%s2509 + $0x278] sm:$0xff]
        %s2542 = scalar_lea.vmem [#allocation5], 384
        %v2543 = vld [vmem:[%s2542] sm:$0xff]
        %v2544 = vld [vmem:[%s2542 + $0x8] sm:$0xff]
        %v2545 = vld [vmem:[%s2542 + $0x10] sm:$0xff]
        %v2546 = vld [vmem:[%s2542 + $0x18] sm:$0xff]
        %v2547 = vld [vmem:[%s2542 + $0x20] sm:$0xff]
        %v2548 = vld [vmem:[%s2542 + $0x28] sm:$0xff]
        %v2549 = vld [vmem:[%s2542 + $0x30] sm:$0xff]
        %v2550 = vld [vmem:[%s2542 + $0x38] sm:$0xff]
        %v2551 = vld [vmem:[%s2542 + $0x40] sm:$0xff]
        %v2552 = vld [vmem:[%s2542 + $0x48] sm:$0xff]
        %v2553 = vld [vmem:[%s2542 + $0x50] sm:$0xff]
        %v2554 = vld [vmem:[%s2542 + $0x58] sm:$0xff]
        %v2555 = vld [vmem:[%s2542 + $0x60] sm:$0xff]
        %v2556 = vld [vmem:[%s2542 + $0x68] sm:$0xff]
        %v2557 = vld [vmem:[%s2542 + $0x70] sm:$0xff]
        %v2558 = vld [vmem:[%s2542 + $0x78] sm:$0xff]
        %s2559 = scalar_lea.vmem %s2, 3
        %v2560 = vld [vmem:[%s2559] sm:$0x1]
        %v2562 = vlaneseq
        %v2563 = vshrl.u32 %v2562, 7
        %v2564 = vsub.s32 0, %v2563
        %v2565 = vrot.slane %v2560, %v2564
        %2567 = vmatprep.subr.mxu0 0.0
        %2568 = vmatpush1.msra.mxu0 %v2543
        %2569 = vmatprep.subr.mxu0 0.0
        %2570 = vmatpush1.msra.mxu0 %v2544
        %2571 = vmatprep.subr.mxu0 0.0
        %2572 = vmatpush1.msra.mxu0 %v2545
        %2573 = vmatprep.subr.mxu0 0.0
        %2574 = vmatpush1.msra.mxu0 %v2546
        %2575 = vmatprep.subr.mxu0 0.0
        %2576 = vmatpush1.msra.mxu0 %v2547
        %2577 = vmatprep.subr.mxu0 0.0
        %2578 = vmatpush1.msra.mxu0 %v2548
        %2579 = vmatprep.subr.mxu0 0.0
        %2580 = vmatpush1.msra.mxu0 %v2549
        %2581 = vmatprep.subr.mxu0 0.0
        %2582 = vmatpush1.msra.mxu0 %v2550
        %2583 = vmatprep.subr.mxu0 0.0
        %2584 = vmatpush1.msra.mxu0 %v2551
        %2585 = vmatprep.subr.mxu0 0.0
        %2586 = vmatpush1.msra.mxu0 %v2552
        %2587 = vmatprep.subr.mxu0 0.0
        %2588 = vmatpush1.msra.mxu0 %v2553
        %2589 = vmatprep.subr.mxu0 0.0
        %2590 = vmatpush1.msra.mxu0 %v2554
        %2591 = vmatprep.subr.mxu0 0.0
        %2592 = vmatpush1.msra.mxu0 %v2555
        %2593 = vmatprep.subr.mxu0 0.0
        %2594 = vmatpush1.msra.mxu0 %v2556
        %2595 = vmatprep.subr.mxu0 0.0
        %2596 = vmatpush1.msra.mxu0 %v2557
        %2597 = vmatprep.subr.mxu0 0.0
        %2598 = vmatpush1.msra.mxu0 %v2558
        %2599 = vmatprep.subr.mxu0 0.0
        %2600 = vmatpush1.msra.mxu0 0.0
        %2601 = vmatprep.subr.mxu0 0.0
        %2602 = vmatpush1.msra.mxu0 0.0
        %2603 = vmatprep.subr.mxu0 0.0
        %2604 = vmatpush1.msra.mxu0 0.0
        %2605 = vmatprep.subr.mxu0 0.0
        %2606 = vmatpush1.msra.mxu0 0.0
        %2607 = vmatprep.subr.mxu0 0.0
        %2608 = vmatpush1.msra.mxu0 0.0
        %2609 = vmatprep.subr.mxu0 0.0
        %2610 = vmatpush1.msra.mxu0 0.0
        %2611 = vmatprep.subr.mxu0 0.0
        %2612 = vmatpush1.msra.mxu0 0.0
        %2613 = vmatprep.subr.mxu0 0.0
        %2614 = vmatpush1.msra.mxu0 0.0
        %2615 = vmatprep.subr.mxu0 0.0
        %2616 = vmatpush1.msra.mxu0 0.0
        %2617 = vmatprep.subr.mxu0 0.0
        %2618 = vmatpush1.msra.mxu0 0.0
        %2619 = vmatprep.subr.mxu0 0.0
        %2620 = vmatpush1.msra.mxu0 0.0
        %2621 = vmatprep.subr.mxu0 0.0
        %2622 = vmatpush1.msra.mxu0 0.0
        %2623 = vmatprep.subr.mxu0 0.0
        %2624 = vmatpush1.msra.mxu0 0.0
        %2625 = vmatprep.subr.mxu0 0.0
        %2626 = vmatpush1.msra.mxu0 0.0
        %2627 = vmatprep.subr.mxu0 0.0
        %2628 = vmatpush1.msra.mxu0 0.0
        %2629 = vmatprep.subr.mxu0 0.0
        %2630 = vmatpush1.msra.mxu0 0.0
        %2631 = vmatprep.mubr.f32.mxu0 0.0
        %2632 = vmatmul.mubr.f32.gmra.mrb[0].mxu0 %v2510
        %v2633 = vpop.f32.mrb[0].mxu0
        %v2634 = vadd.f32 %v2565, %v2633
        %v2635 = vpop.f32.mrb[0].mxu0
        %2636 = vmatprep.mubr.f32.mxu0 0.0
        %2637 = vmatmul.mubr.f32.gmra.mrb[0].mxu0 %v2511
        %v2638 = vpop.f32.mrb[0].mxu0
        %v2639 = vadd.f32 %v2565, %v2638
        %v2640 = vpop.f32.mrb[0].mxu0
        %2641 = vmatprep.mubr.f32.mxu0 0.0
        %2642 = vmatmul.mubr.f32.gmra.mrb[0].mxu0 %v2512
        %v2643 = vpop.f32.mrb[0].mxu0
        %v2644 = vadd.f32 %v2565, %v2643
        %v2645 = vpop.f32.mrb[0].mxu0
        %2646 = vmatprep.mubr.f32.mxu0 0.0
        %2647 = vmatmul.mubr.f32.gmra.mrb[0].mxu0 %v2513
        %v2648 = vpop.f32.mrb[0].mxu0
        %v2649 = vadd.f32 %v2565, %v2648
        %v2650 = vpop.f32.mrb[0].mxu0
        %2651 = vmatprep.mubr.f32.mxu0 0.0
        %2652 = vmatmul.mubr.f32.gmra.mrb[0].mxu0 %v2514
        %v2653 = vpop.f32.mrb[0].mxu0
        %v2654 = vadd.f32 %v2565, %v2653
        %v2655 = vpop.f32.mrb[0].mxu0
        %2656 = vmatprep.mubr.f32.mxu0 0.0
        %2657 = vmatmul.mubr.f32.gmra.mrb[0].mxu0 %v2515
        %v2658 = vpop.f32.mrb[0].mxu0
        %v2659 = vadd.f32 %v2565, %v2658
        %v2660 = vpop.f32.mrb[0].mxu0
        %2661 = vmatprep.mubr.f32.mxu0 0.0
        %2662 = vmatmul.mubr.f32.gmra.mrb[0].mxu0 %v2516
        %v2663 = vpop.f32.mrb[0].mxu0
        %v2664 = vadd.f32 %v2565, %v2663
        %v2665 = vpop.f32.mrb[0].mxu0
        %2666 = vmatprep.mubr.f32.mxu0 0.0
        %2667 = vmatmul.mubr.f32.gmra.mrb[0].mxu0 %v2517
        %v2668 = vpop.f32.mrb[0].mxu0
        %v2669 = vadd.f32 %v2565, %v2668
        %v2670 = vpop.f32.mrb[0].mxu0
        %2671 = vmatprep.mubr.f32.mxu0 0.0
        %2672 = vmatmul.mubr.f32.gmra.mrb[0].mxu0 %v2518
        %v2673 = vpop.f32.mrb[0].mxu0
        %v2674 = vadd.f32 %v2565, %v2673
        %v2675 = vpop.f32.mrb[0].mxu0
        %2676 = vmatprep.mubr.f32.mxu0 0.0
        %2677 = vmatmul.mubr.f32.gmra.mrb[0].mxu0 %v2519
        %v2678 = vpop.f32.mrb[0].mxu0
        %v2679 = vadd.f32 %v2565, %v2678
        %v2680 = vpop.f32.mrb[0].mxu0
        %2681 = vmatprep.mubr.f32.mxu0 0.0
        %2682 = vmatmul.mubr.f32.gmra.mrb[0].mxu0 %v2520
        %v2683 = vpop.f32.mrb[0].mxu0
        %v2684 = vadd.f32 %v2565, %v2683
        %v2685 = vpop.f32.mrb[0].mxu0
        %2686 = vmatprep.mubr.f32.mxu0 0.0
        %2687 = vmatmul.mubr.f32.gmra.mrb[0].mxu0 %v2521
        %v2688 = vpop.f32.mrb[0].mxu0
        %v2689 = vadd.f32 %v2565, %v2688
        %v2690 = vpop.f32.mrb[0].mxu0
        %2691 = vmatprep.mubr.f32.mxu0 0.0
        %2692 = vmatmul.mubr.f32.gmra.mrb[0].mxu0 %v2522
        %v2693 = vpop.f32.mrb[0].mxu0
        %v2694 = vadd.f32 %v2565, %v2693
        %v2695 = vpop.f32.mrb[0].mxu0
        %2696 = vmatprep.mubr.f32.mxu0 0.0
        %2697 = vmatmul.mubr.f32.gmra.mrb[0].mxu0 %v2523
        %v2698 = vpop.f32.mrb[0].mxu0
        %v2699 = vadd.f32 %v2565, %v2698
        %v2700 = vpop.f32.mrb[0].mxu0
        %2701 = vmatprep.mubr.f32.mxu0 0.0
        %2702 = vmatmul.mubr.f32.gmra.mrb[0].mxu0 %v2524
        %v2703 = vpop.f32.mrb[0].mxu0
        %v2704 = vadd.f32 %v2565, %v2703
        %v2705 = vpop.f32.mrb[0].mxu0
        %2706 = vmatprep.mubr.f32.mxu0 0.0
        %2707 = vmatmul.mubr.f32.gmra.mrb[0].mxu0 %v2525
        %v2708 = vpop.f32.mrb[0].mxu0
        %v2709 = vadd.f32 %v2565, %v2708
        %v2710 = vpop.f32.mrb[0].mxu0
        %2711 = vmatprep.mubr.f32.mxu0 0.0
        %2712 = vmatmul.mubr.f32.gmra.mrb[0].mxu0 %v2526
        %v2713 = vpop.f32.mrb[0].mxu0
        %v2714 = vadd.f32 %v2565, %v2713
        %v2715 = vpop.f32.mrb[0].mxu0
        %2716 = vmatprep.mubr.f32.mxu0 0.0
        %2717 = vmatmul.mubr.f32.gmra.mrb[0].mxu0 %v2527
        %v2718 = vpop.f32.mrb[0].mxu0
        %v2719 = vadd.f32 %v2565, %v2718
        %v2720 = vpop.f32.mrb[0].mxu0
        %2721 = vmatprep.mubr.f32.mxu0 0.0
        %2722 = vmatmul.mubr.f32.gmra.mrb[0].mxu0 %v2528
        %v2723 = vpop.f32.mrb[0].mxu0
        %v2724 = vadd.f32 %v2565, %v2723
        %v2725 = vpop.f32.mrb[0].mxu0
        %2726 = vmatprep.mubr.f32.mxu0 0.0
        %2727 = vmatmul.mubr.f32.gmra.mrb[0].mxu0 %v2529
        %v2728 = vpop.f32.mrb[0].mxu0
        %v2729 = vadd.f32 %v2565, %v2728
        %v2730 = vpop.f32.mrb[0].mxu0
        %2731 = vmatprep.mubr.f32.mxu0 0.0
        %2732 = vmatmul.mubr.f32.gmra.mrb[0].mxu0 %v2530
        %v2733 = vpop.f32.mrb[0].mxu0
        %v2734 = vadd.f32 %v2565, %v2733
        %v2735 = vpop.f32.mrb[0].mxu0
        %2736 = vmatprep.mubr.f32.mxu0 0.0
        %2737 = vmatmul.mubr.f32.gmra.mrb[0].mxu0 %v2531
        %v2738 = vpop.f32.mrb[0].mxu0
        %v2739 = vadd.f32 %v2565, %v2738
        %v2740 = vpop.f32.mrb[0].mxu0
        %2741 = vmatprep.mubr.f32.mxu0 0.0
        %2742 = vmatmul.mubr.f32.gmra.mrb[0].mxu0 %v2532
        %v2743 = vpop.f32.mrb[0].mxu0
        %v2744 = vadd.f32 %v2565, %v2743
        %v2745 = vpop.f32.mrb[0].mxu0
        %2746 = vmatprep.mubr.f32.mxu0 0.0
        %2747 = vmatmul.mubr.f32.gmra.mrb[0].mxu0 %v2533
        %v2748 = vpop.f32.mrb[0].mxu0
        %v2749 = vadd.f32 %v2565, %v2748
        %v2750 = vpop.f32.mrb[0].mxu0
        %2751 = vmatprep.mubr.f32.mxu0 0.0
        %2752 = vmatmul.mubr.f32.gmra.mrb[0].mxu0 %v2534
        %v2753 = vpop.f32.mrb[0].mxu0
        %v2754 = vadd.f32 %v2565, %v2753
        %v2755 = vpop.f32.mrb[0].mxu0
        %2756 = vmatprep.mubr.f32.mxu0 0.0
        %2757 = vmatmul.mubr.f32.gmra.mrb[0].mxu0 %v2535
        %v2758 = vpop.f32.mrb[0].mxu0
        %v2759 = vadd.f32 %v2565, %v2758
        %v2760 = vpop.f32.mrb[0].mxu0
        %2761 = vmatprep.mubr.f32.mxu0 0.0
        %2762 = vmatmul.mubr.f32.gmra.mrb[0].mxu0 %v2536
        %v2763 = vpop.f32.mrb[0].mxu0
        %v2764 = vadd.f32 %v2565, %v2763
        %v2765 = vpop.f32.mrb[0].mxu0
        %2766 = vmatprep.mubr.f32.mxu0 0.0
        %2767 = vmatmul.mubr.f32.gmra.mrb[0].mxu0 %v2537
        %v2768 = vpop.f32.mrb[0].mxu0
        %v2769 = vadd.f32 %v2565, %v2768
        %v2770 = vpop.f32.mrb[0].mxu0
        %2771 = vmatprep.mubr.f32.mxu0 0.0
        %2772 = vmatmul.mubr.f32.gmra.mrb[0].mxu0 %v2538
        %v2773 = vpop.f32.mrb[0].mxu0
        %v2774 = vadd.f32 %v2565, %v2773
        %v2775 = vpop.f32.mrb[0].mxu0
        %2776 = vmatprep.mubr.f32.mxu0 0.0
        %2777 = vmatmul.mubr.f32.gmra.mrb[0].mxu0 %v2539
        %v2778 = vpop.f32.mrb[0].mxu0
        %v2779 = vadd.f32 %v2565, %v2778
        %v2780 = vpop.f32.mrb[0].mxu0
        %2781 = vmatprep.mubr.f32.mxu0 0.0
        %2782 = vmatmul.mubr.f32.gmra.mrb[0].mxu0 %v2540
        %v2783 = vpop.f32.mrb[0].mxu0
        %v2784 = vadd.f32 %v2565, %v2783
        %v2785 = vpop.f32.mrb[0].mxu0
        %2786 = vmatprep.mubr.f32.mxu0 0.0
        %2787 = vmatmul.mubr.f32.gmra.mrb[0].mxu0 %v2541
        %v2788 = vpop.f32.mrb[0].mxu0
        %v2789 = vadd.f32 %v2565, %v2788
        %v2790 = vpop.f32.mrb[0].mxu0
        %2791 = vdwg.mxu0
        %vm2792 = vcmp.ge.f32.partialorder %v2634, 0.0
        %vm2793 = vcmp.ge.f32.partialorder %v2639, 0.0
        %vm2794 = vcmp.ge.f32.partialorder %v2644, 0.0
        %vm2795 = vcmp.ge.f32.partialorder %v2649, 0.0
        %vm2796 = vcmp.ge.f32.partialorder %v2654, 0.0
        %vm2797 = vcmp.ge.f32.partialorder %v2659, 0.0
        %vm2798 = vcmp.ge.f32.partialorder %v2664, 0.0
        %vm2799 = vcmp.ge.f32.partialorder %v2669, 0.0
        %vm2800 = vcmp.ge.f32.partialorder %v2674, 0.0
        %vm2801 = vcmp.ge.f32.partialorder %v2679, 0.0
        %vm2802 = vcmp.ge.f32.partialorder %v2684, 0.0
        %vm2803 = vcmp.ge.f32.partialorder %v2689, 0.0
        %vm2804 = vcmp.ge.f32.partialorder %v2694, 0.0
        %vm2805 = vcmp.ge.f32.partialorder %v2699, 0.0
        %vm2806 = vcmp.ge.f32.partialorder %v2704, 0.0
        %vm2807 = vcmp.ge.f32.partialorder %v2709, 0.0
        %vm2808 = vcmp.ge.f32.partialorder %v2714, 0.0
        %vm2809 = vcmp.ge.f32.partialorder %v2719, 0.0
        %vm2810 = vcmp.ge.f32.partialorder %v2724, 0.0
        %vm2811 = vcmp.ge.f32.partialorder %v2729, 0.0
        %vm2812 = vcmp.ge.f32.partialorder %v2734, 0.0
        %vm2813 = vcmp.ge.f32.partialorder %v2739, 0.0
        %vm2814 = vcmp.ge.f32.partialorder %v2744, 0.0
        %vm2815 = vcmp.ge.f32.partialorder %v2749, 0.0
        %vm2816 = vcmp.ge.f32.partialorder %v2754, 0.0
        %vm2817 = vcmp.ge.f32.partialorder %v2759, 0.0
        %vm2818 = vcmp.ge.f32.partialorder %v2764, 0.0
        %vm2819 = vcmp.ge.f32.partialorder %v2769, 0.0
        %vm2820 = vcmp.ge.f32.partialorder %v2774, 0.0
        %vm2821 = vcmp.ge.f32.partialorder %v2779, 0.0
        %vm2822 = vcmp.ge.f32.partialorder %v2784, 0.0
        %vm2823 = vcmp.ge.f32.partialorder %v2789, 0.0
        %v2824 = vmul.f32 %v2634, 0.01
        %v2825 = vmul.f32 %v2639, 0.01
        %v2826 = vmul.f32 %v2644, 0.01
        %v2827 = vmul.f32 %v2649, 0.01
        %v2828 = vmul.f32 %v2654, 0.01
        %v2829 = vmul.f32 %v2659, 0.01
        %v2830 = vmul.f32 %v2664, 0.01
        %v2831 = vmul.f32 %v2669, 0.01
        %v2832 = vmul.f32 %v2674, 0.01
        %v2833 = vmul.f32 %v2679, 0.01
        %v2834 = vmul.f32 %v2684, 0.01
        %v2835 = vmul.f32 %v2689, 0.01
        %v2836 = vmul.f32 %v2694, 0.01
        %v2837 = vmul.f32 %v2699, 0.01
        %v2838 = vmul.f32 %v2704, 0.01
        %v2839 = vmul.f32 %v2709, 0.01
        %v2840 = vmul.f32 %v2714, 0.01
        %v2841 = vmul.f32 %v2719, 0.01
        %v2842 = vmul.f32 %v2724, 0.01
        %v2843 = vmul.f32 %v2729, 0.01
        %v2844 = vmul.f32 %v2734, 0.01
        %v2845 = vmul.f32 %v2739, 0.01
        %v2846 = vmul.f32 %v2744, 0.01
        %v2847 = vmul.f32 %v2749, 0.01
        %v2848 = vmul.f32 %v2754, 0.01
        %v2849 = vmul.f32 %v2759, 0.01
        %v2850 = vmul.f32 %v2764, 0.01
        %v2851 = vmul.f32 %v2769, 0.01
        %v2852 = vmul.f32 %v2774, 0.01
        %v2853 = vmul.f32 %v2779, 0.01
        %v2854 = vmul.f32 %v2784, 0.01
        %v2855 = vmul.f32 %v2789, 0.01
        %v2856 = vsel %vm2792, %v2634, %v2824
        %v2857 = vsel %vm2793, %v2639, %v2825
        %v2858 = vsel %vm2794, %v2644, %v2826
        %v2859 = vsel %vm2795, %v2649, %v2827
        %v2860 = vsel %vm2796, %v2654, %v2828
        %v2861 = vsel %vm2797, %v2659, %v2829
        %v2862 = vsel %vm2798, %v2664, %v2830
        %v2863 = vsel %vm2799, %v2669, %v2831
        %v2864 = vsel %vm2800, %v2674, %v2832
        %v2865 = vsel %vm2801, %v2679, %v2833
        %v2866 = vsel %vm2802, %v2684, %v2834
        %v2867 = vsel %vm2803, %v2689, %v2835
        %v2868 = vsel %vm2804, %v2694, %v2836
        %v2869 = vsel %vm2805, %v2699, %v2837
        %v2870 = vsel %vm2806, %v2704, %v2838
        %v2871 = vsel %vm2807, %v2709, %v2839
        %v2872 = vsel %vm2808, %v2714, %v2840
        %v2873 = vsel %vm2809, %v2719, %v2841
        %v2874 = vsel %vm2810, %v2724, %v2842
        %v2875 = vsel %vm2811, %v2729, %v2843
        %v2876 = vsel %vm2812, %v2734, %v2844
        %v2877 = vsel %vm2813, %v2739, %v2845
        %v2878 = vsel %vm2814, %v2744, %v2846
        %v2879 = vsel %vm2815, %v2749, %v2847
        %v2880 = vsel %vm2816, %v2754, %v2848
        %v2881 = vsel %vm2817, %v2759, %v2849
        %v2882 = vsel %vm2818, %v2764, %v2850
        %v2883 = vsel %vm2819, %v2769, %v2851
        %v2884 = vsel %vm2820, %v2774, %v2852
        %v2885 = vsel %vm2821, %v2779, %v2853
        %v2886 = vsel %vm2822, %v2784, %v2854
        %v2887 = vsel %vm2823, %v2789, %v2855
        %s2888 = scalar_lea.vmem [#allocation7], 384
        %v2889 = vld [vmem:[%s2888] sm:$0xff]
        %v2890 = vld [vmem:[%s2888 + $0x8] sm:$0xff]
        %v2891 = vld [vmem:[%s2888 + $0x10] sm:$0xff]
        %v2892 = vld [vmem:[%s2888 + $0x18] sm:$0xff]
        %v2893 = vld [vmem:[%s2888 + $0x20] sm:$0xff]
        %v2894 = vld [vmem:[%s2888 + $0x28] sm:$0xff]
        %v2895 = vld [vmem:[%s2888 + $0x30] sm:$0xff]
        %v2896 = vld [vmem:[%s2888 + $0x38] sm:$0xff]
        %v2897 = vld [vmem:[%s2888 + $0x40] sm:$0xff]
        %v2898 = vld [vmem:[%s2888 + $0x48] sm:$0xff]
        %v2899 = vld [vmem:[%s2888 + $0x50] sm:$0xff]
        %v2900 = vld [vmem:[%s2888 + $0x58] sm:$0xff]
        %v2901 = vld [vmem:[%s2888 + $0x60] sm:$0xff]
        %v2902 = vld [vmem:[%s2888 + $0x68] sm:$0xff]
        %v2903 = vld [vmem:[%s2888 + $0x70] sm:$0xff]
        %v2904 = vld [vmem:[%s2888 + $0x78] sm:$0xff]
        %s2905 = scalar_lea.vmem %s4, 3
        %v2906 = vld [vmem:[%s2905] sm:$0x1]
        %v2908 = vlaneseq
        %v2909 = vshrl.u32 %v2908, 7
        %v2910 = vsub.s32 0, %v2909
        %v2911 = vrot.slane %v2906, %v2910
        %2913 = vmatprep.subr.mxu0 0.0
        %2914 = vmatpush1.msra.mxu0 %v2889
        %2915 = vmatprep.subr.mxu0 0.0
        %2916 = vmatpush1.msra.mxu0 %v2890
        %2917 = vmatprep.subr.mxu0 0.0
        %2918 = vmatpush1.msra.mxu0 %v2891
        %2919 = vmatprep.subr.mxu0 0.0
        %2920 = vmatpush1.msra.mxu0 %v2892
        %2921 = vmatprep.subr.mxu0 0.0
        %2922 = vmatpush1.msra.mxu0 %v2893
        %2923 = vmatprep.subr.mxu0 0.0
        %2924 = vmatpush1.msra.mxu0 %v2894
        %2925 = vmatprep.subr.mxu0 0.0
        %2926 = vmatpush1.msra.mxu0 %v2895
        %2927 = vmatprep.subr.mxu0 0.0
        %2928 = vmatpush1.msra.mxu0 %v2896
        %2929 = vmatprep.subr.mxu0 0.0
        %2930 = vmatpush1.msra.mxu0 %v2897
        %2931 = vmatprep.subr.mxu0 0.0
        %2932 = vmatpush1.msra.mxu0 %v2898
        %2933 = vmatprep.subr.mxu0 0.0
        %2934 = vmatpush1.msra.mxu0 %v2899
        %2935 = vmatprep.subr.mxu0 0.0
        %2936 = vmatpush1.msra.mxu0 %v2900
        %2937 = vmatprep.subr.mxu0 0.0
        %2938 = vmatpush1.msra.mxu0 %v2901
        %2939 = vmatprep.subr.mxu0 0.0
        %2940 = vmatpush1.msra.mxu0 %v2902
        %2941 = vmatprep.subr.mxu0 0.0
        %2942 = vmatpush1.msra.mxu0 %v2903
        %2943 = vmatprep.subr.mxu0 0.0
        %2944 = vmatpush1.msra.mxu0 %v2904
        %2945 = vmatprep.subr.mxu0 0.0
        %2946 = vmatpush1.msra.mxu0 0.0
        %2947 = vmatprep.subr.mxu0 0.0
        %2948 = vmatpush1.msra.mxu0 0.0
        %2949 = vmatprep.subr.mxu0 0.0
        %2950 = vmatpush1.msra.mxu0 0.0
        %2951 = vmatprep.subr.mxu0 0.0
        %2952 = vmatpush1.msra.mxu0 0.0
        %2953 = vmatprep.subr.mxu0 0.0
        %2954 = vmatpush1.msra.mxu0 0.0
        %2955 = vmatprep.subr.mxu0 0.0
        %2956 = vmatpush1.msra.mxu0 0.0
        %2957 = vmatprep.subr.mxu0 0.0
        %2958 = vmatpush1.msra.mxu0 0.0
        %2959 = vmatprep.subr.mxu0 0.0
        %2960 = vmatpush1.msra.mxu0 0.0
        %2961 = vmatprep.subr.mxu0 0.0
        %2962 = vmatpush1.msra.mxu0 0.0
        %2963 = vmatprep.subr.mxu0 0.0
        %2964 = vmatpush1.msra.mxu0 0.0
        %2965 = vmatprep.subr.mxu0 0.0
        %2966 = vmatpush1.msra.mxu0 0.0
        %2967 = vmatprep.subr.mxu0 0.0
        %2968 = vmatpush1.msra.mxu0 0.0
        %2969 = vmatprep.subr.mxu0 0.0
        %2970 = vmatpush1.msra.mxu0 0.0
        %2971 = vmatprep.subr.mxu0 0.0
        %2972 = vmatpush1.msra.mxu0 0.0
        %2973 = vmatprep.subr.mxu0 0.0
        %2974 = vmatpush1.msra.mxu0 0.0
        %2975 = vmatprep.subr.mxu0 0.0
        %2976 = vmatpush1.msra.mxu0 0.0
        %2977 = vmatprep.mubr.f32.mxu0 0.0
        %2978 = vmatmul.mubr.f32.gmra.mrb[0].mxu0 %v2856
        %v2979 = vpop.f32.mrb[0].mxu0
        %v2980 = vadd.f32 %v2911, %v2979
        %v2981 = vpop.f32.mrb[0].mxu0
        %2982 = vmatprep.mubr.f32.mxu0 0.0
        %2983 = vmatmul.mubr.f32.gmra.mrb[0].mxu0 %v2857
        %v2984 = vpop.f32.mrb[0].mxu0
        %v2985 = vadd.f32 %v2911, %v2984
        %v2986 = vpop.f32.mrb[0].mxu0
        %2987 = vmatprep.mubr.f32.mxu0 0.0
        %2988 = vmatmul.mubr.f32.gmra.mrb[0].mxu0 %v2858
        %v2989 = vpop.f32.mrb[0].mxu0
        %v2990 = vadd.f32 %v2911, %v2989
        %v2991 = vpop.f32.mrb[0].mxu0
        %2992 = vmatprep.mubr.f32.mxu0 0.0
        %2993 = vmatmul.mubr.f32.gmra.mrb[0].mxu0 %v2859
        %v2994 = vpop.f32.mrb[0].mxu0
        %v2995 = vadd.f32 %v2911, %v2994
        %v2996 = vpop.f32.mrb[0].mxu0
        %2997 = vmatprep.mubr.f32.mxu0 0.0
        %2998 = vmatmul.mubr.f32.gmra.mrb[0].mxu0 %v2860
        %v2999 = vpop.f32.mrb[0].mxu0
        %v3000 = vadd.f32 %v2911, %v2999
        %v3001 = vpop.f32.mrb[0].mxu0
        %3002 = vmatprep.mubr.f32.mxu0 0.0
        %3003 = vmatmul.mubr.f32.gmra.mrb[0].mxu0 %v2861
        %v3004 = vpop.f32.mrb[0].mxu0
        %v3005 = vadd.f32 %v2911, %v3004
        %v3006 = vpop.f32.mrb[0].mxu0
        %3007 = vmatprep.mubr.f32.mxu0 0.0
        %3008 = vmatmul.mubr.f32.gmra.mrb[0].mxu0 %v2862
        %v3009 = vpop.f32.mrb[0].mxu0
        %v3010 = vadd.f32 %v2911, %v3009
        %v3011 = vpop.f32.mrb[0].mxu0
        %3012 = vmatprep.mubr.f32.mxu0 0.0
        %3013 = vmatmul.mubr.f32.gmra.mrb[0].mxu0 %v2863
        %v3014 = vpop.f32.mrb[0].mxu0
        %v3015 = vadd.f32 %v2911, %v3014
        %v3016 = vpop.f32.mrb[0].mxu0
        %3017 = vmatprep.mubr.f32.mxu0 0.0
        %3018 = vmatmul.mubr.f32.gmra.mrb[0].mxu0 %v2864
        %v3019 = vpop.f32.mrb[0].mxu0
        %v3020 = vadd.f32 %v2911, %v3019
        %v3021 = vpop.f32.mrb[0].mxu0
        %3022 = vmatprep.mubr.f32.mxu0 0.0
        %3023 = vmatmul.mubr.f32.gmra.mrb[0].mxu0 %v2865
        %v3024 = vpop.f32.mrb[0].mxu0
        %v3025 = vadd.f32 %v2911, %v3024
        %v3026 = vpop.f32.mrb[0].mxu0
        %3027 = vmatprep.mubr.f32.mxu0 0.0
        %3028 = vmatmul.mubr.f32.gmra.mrb[0].mxu0 %v2866
        %v3029 = vpop.f32.mrb[0].mxu0
        %v3030 = vadd.f32 %v2911, %v3029
        %v3031 = vpop.f32.mrb[0].mxu0
        %3032 = vmatprep.mubr.f32.mxu0 0.0
        %3033 = vmatmul.mubr.f32.gmra.mrb[0].mxu0 %v2867
        %v3034 = vpop.f32.mrb[0].mxu0
        %v3035 = vadd.f32 %v2911, %v3034
        %v3036 = vpop.f32.mrb[0].mxu0
        %3037 = vmatprep.mubr.f32.mxu0 0.0
        %3038 = vmatmul.mubr.f32.gmra.mrb[0].mxu0 %v2868
        %v3039 = vpop.f32.mrb[0].mxu0
        %v3040 = vadd.f32 %v2911, %v3039
        %v3041 = vpop.f32.mrb[0].mxu0
        %3042 = vmatprep.mubr.f32.mxu0 0.0
        %3043 = vmatmul.mubr.f32.gmra.mrb[0].mxu0 %v2869
        %v3044 = vpop.f32.mrb[0].mxu0
        %v3045 = vadd.f32 %v2911, %v3044
        %v3046 = vpop.f32.mrb[0].mxu0
        %3047 = vmatprep.mubr.f32.mxu0 0.0
        %3048 = vmatmul.mubr.f32.gmra.mrb[0].mxu0 %v2870
        %v3049 = vpop.f32.mrb[0].mxu0
        %v3050 = vadd.f32 %v2911, %v3049
        %v3051 = vpop.f32.mrb[0].mxu0
        %3052 = vmatprep.mubr.f32.mxu0 0.0
        %3053 = vmatmul.mubr.f32.gmra.mrb[0].mxu0 %v2871
        %v3054 = vpop.f32.mrb[0].mxu0
        %v3055 = vadd.f32 %v2911, %v3054
        %v3056 = vpop.f32.mrb[0].mxu0
        %3057 = vmatprep.mubr.f32.mxu0 0.0
        %3058 = vmatmul.mubr.f32.gmra.mrb[0].mxu0 %v2872
        %v3059 = vpop.f32.mrb[0].mxu0
        %v3060 = vadd.f32 %v2911, %v3059
        %v3061 = vpop.f32.mrb[0].mxu0
        %3062 = vmatprep.mubr.f32.mxu0 0.0
        %3063 = vmatmul.mubr.f32.gmra.mrb[0].mxu0 %v2873
        %v3064 = vpop.f32.mrb[0].mxu0
        %v3065 = vadd.f32 %v2911, %v3064
        %v3066 = vpop.f32.mrb[0].mxu0
        %3067 = vmatprep.mubr.f32.mxu0 0.0
        %3068 = vmatmul.mubr.f32.gmra.mrb[0].mxu0 %v2874
        %v3069 = vpop.f32.mrb[0].mxu0
        %v3070 = vadd.f32 %v2911, %v3069
        %v3071 = vpop.f32.mrb[0].mxu0
        %3072 = vmatprep.mubr.f32.mxu0 0.0
        %3073 = vmatmul.mubr.f32.gmra.mrb[0].mxu0 %v2875
        %v3074 = vpop.f32.mrb[0].mxu0
        %v3075 = vadd.f32 %v2911, %v3074
        %v3076 = vpop.f32.mrb[0].mxu0
        %3077 = vmatprep.mubr.f32.mxu0 0.0
        %3078 = vmatmul.mubr.f32.gmra.mrb[0].mxu0 %v2876
        %v3079 = vpop.f32.mrb[0].mxu0
        %v3080 = vadd.f32 %v2911, %v3079
        %v3081 = vpop.f32.mrb[0].mxu0
        %3082 = vmatprep.mubr.f32.mxu0 0.0
        %3083 = vmatmul.mubr.f32.gmra.mrb[0].mxu0 %v2877
        %v3084 = vpop.f32.mrb[0].mxu0
        %v3085 = vadd.f32 %v2911, %v3084
        %v3086 = vpop.f32.mrb[0].mxu0
        %3087 = vmatprep.mubr.f32.mxu0 0.0
        %3088 = vmatmul.mubr.f32.gmra.mrb[0].mxu0 %v2878
        %v3089 = vpop.f32.mrb[0].mxu0
        %v3090 = vadd.f32 %v2911, %v3089
        %v3091 = vpop.f32.mrb[0].mxu0
        %3092 = vmatprep.mubr.f32.mxu0 0.0
        %3093 = vmatmul.mubr.f32.gmra.mrb[0].mxu0 %v2879
        %v3094 = vpop.f32.mrb[0].mxu0
        %v3095 = vadd.f32 %v2911, %v3094
        %v3096 = vpop.f32.mrb[0].mxu0
        %3097 = vmatprep.mubr.f32.mxu0 0.0
        %3098 = vmatmul.mubr.f32.gmra.mrb[0].mxu0 %v2880
        %v3099 = vpop.f32.mrb[0].mxu0
        %v3100 = vadd.f32 %v2911, %v3099
        %v3101 = vpop.f32.mrb[0].mxu0
        %3102 = vmatprep.mubr.f32.mxu0 0.0
        %3103 = vmatmul.mubr.f32.gmra.mrb[0].mxu0 %v2881
        %v3104 = vpop.f32.mrb[0].mxu0
        %v3105 = vadd.f32 %v2911, %v3104
        %v3106 = vpop.f32.mrb[0].mxu0
        %3107 = vmatprep.mubr.f32.mxu0 0.0
        %3108 = vmatmul.mubr.f32.gmra.mrb[0].mxu0 %v2882
        %v3109 = vpop.f32.mrb[0].mxu0
        %v3110 = vadd.f32 %v2911, %v3109
        %v3111 = vpop.f32.mrb[0].mxu0
        %3112 = vmatprep.mubr.f32.mxu0 0.0
        %3113 = vmatmul.mubr.f32.gmra.mrb[0].mxu0 %v2883
        %v3114 = vpop.f32.mrb[0].mxu0
        %v3115 = vadd.f32 %v2911, %v3114
        %v3116 = vpop.f32.mrb[0].mxu0
        %3117 = vmatprep.mubr.f32.mxu0 0.0
        %3118 = vmatmul.mubr.f32.gmra.mrb[0].mxu0 %v2884
        %v3119 = vpop.f32.mrb[0].mxu0
        %v3120 = vadd.f32 %v2911, %v3119
        %v3121 = vpop.f32.mrb[0].mxu0
        %3122 = vmatprep.mubr.f32.mxu0 0.0
        %3123 = vmatmul.mubr.f32.gmra.mrb[0].mxu0 %v2885
        %v3124 = vpop.f32.mrb[0].mxu0
        %v3125 = vadd.f32 %v2911, %v3124
        %v3126 = vpop.f32.mrb[0].mxu0
        %3127 = vmatprep.mubr.f32.mxu0 0.0
        %3128 = vmatmul.mubr.f32.gmra.mrb[0].mxu0 %v2886
        %v3129 = vpop.f32.mrb[0].mxu0
        %v3130 = vadd.f32 %v2911, %v3129
        %v3131 = vpop.f32.mrb[0].mxu0
        %3132 = vmatprep.mubr.f32.mxu0 0.0
        %3133 = vmatmul.mubr.f32.gmra.mrb[0].mxu0 %v2887
        %v3134 = vpop.f32.mrb[0].mxu0
        %v3135 = vadd.f32 %v2911, %v3134
        %v3136 = vpop.f32.mrb[0].mxu0
        %3137 = vdwg.mxu0
        %vm3138 = vcmp.ge.f32.partialorder %v2980, 0.0
        %vm3139 = vcmp.ge.f32.partialorder %v2985, 0.0
        %vm3140 = vcmp.ge.f32.partialorder %v2990, 0.0
        %vm3141 = vcmp.ge.f32.partialorder %v2995, 0.0
        %vm3142 = vcmp.ge.f32.partialorder %v3000, 0.0
        %vm3143 = vcmp.ge.f32.partialorder %v3005, 0.0
        %vm3144 = vcmp.ge.f32.partialorder %v3010, 0.0
        %vm3145 = vcmp.ge.f32.partialorder %v3015, 0.0
        %vm3146 = vcmp.ge.f32.partialorder %v3020, 0.0
        %vm3147 = vcmp.ge.f32.partialorder %v3025, 0.0
        %vm3148 = vcmp.ge.f32.partialorder %v3030, 0.0
        %vm3149 = vcmp.ge.f32.partialorder %v3035, 0.0
        %vm3150 = vcmp.ge.f32.partialorder %v3040, 0.0
        %vm3151 = vcmp.ge.f32.partialorder %v3045, 0.0
        %vm3152 = vcmp.ge.f32.partialorder %v3050, 0.0
        %vm3153 = vcmp.ge.f32.partialorder %v3055, 0.0
        %vm3154 = vcmp.ge.f32.partialorder %v3060, 0.0
        %vm3155 = vcmp.ge.f32.partialorder %v3065, 0.0
        %vm3156 = vcmp.ge.f32.partialorder %v3070, 0.0
        %vm3157 = vcmp.ge.f32.partialorder %v3075, 0.0
        %vm3158 = vcmp.ge.f32.partialorder %v3080, 0.0
        %vm3159 = vcmp.ge.f32.partialorder %v3085, 0.0
        %vm3160 = vcmp.ge.f32.partialorder %v3090, 0.0
        %vm3161 = vcmp.ge.f32.partialorder %v3095, 0.0
        %vm3162 = vcmp.ge.f32.partialorder %v3100, 0.0
        %vm3163 = vcmp.ge.f32.partialorder %v3105, 0.0
        %vm3164 = vcmp.ge.f32.partialorder %v3110, 0.0
        %vm3165 = vcmp.ge.f32.partialorder %v3115, 0.0
        %vm3166 = vcmp.ge.f32.partialorder %v3120, 0.0
        %vm3167 = vcmp.ge.f32.partialorder %v3125, 0.0
        %vm3168 = vcmp.ge.f32.partialorder %v3130, 0.0
        %vm3169 = vcmp.ge.f32.partialorder %v3135, 0.0
        %v3170 = vmul.f32 %v2980, 0.01
        %v3171 = vmul.f32 %v2985, 0.01
        %v3172 = vmul.f32 %v2990, 0.01
        %v3173 = vmul.f32 %v2995, 0.01
        %v3174 = vmul.f32 %v3000, 0.01
        %v3175 = vmul.f32 %v3005, 0.01
        %v3176 = vmul.f32 %v3010, 0.01
        %v3177 = vmul.f32 %v3015, 0.01
        %v3178 = vmul.f32 %v3020, 0.01
        %v3179 = vmul.f32 %v3025, 0.01
        %v3180 = vmul.f32 %v3030, 0.01
        %v3181 = vmul.f32 %v3035, 0.01
        %v3182 = vmul.f32 %v3040, 0.01
        %v3183 = vmul.f32 %v3045, 0.01
        %v3184 = vmul.f32 %v3050, 0.01
        %v3185 = vmul.f32 %v3055, 0.01
        %v3186 = vmul.f32 %v3060, 0.01
        %v3187 = vmul.f32 %v3065, 0.01
        %v3188 = vmul.f32 %v3070, 0.01
        %v3189 = vmul.f32 %v3075, 0.01
        %v3190 = vmul.f32 %v3080, 0.01
        %v3191 = vmul.f32 %v3085, 0.01
        %v3192 = vmul.f32 %v3090, 0.01
        %v3193 = vmul.f32 %v3095, 0.01
        %v3194 = vmul.f32 %v3100, 0.01
        %v3195 = vmul.f32 %v3105, 0.01
        %v3196 = vmul.f32 %v3110, 0.01
        %v3197 = vmul.f32 %v3115, 0.01
        %v3198 = vmul.f32 %v3120, 0.01
        %v3199 = vmul.f32 %v3125, 0.01
        %v3200 = vmul.f32 %v3130, 0.01
        %v3201 = vmul.f32 %v3135, 0.01
        %v3202 = vsel %vm3138, %v2980, %v3170
        %v3203 = vsel %vm3139, %v2985, %v3171
        %v3204 = vsel %vm3140, %v2990, %v3172
        %v3205 = vsel %vm3141, %v2995, %v3173
        %v3206 = vsel %vm3142, %v3000, %v3174
        %v3207 = vsel %vm3143, %v3005, %v3175
        %v3208 = vsel %vm3144, %v3010, %v3176
        %v3209 = vsel %vm3145, %v3015, %v3177
        %v3210 = vsel %vm3146, %v3020, %v3178
        %v3211 = vsel %vm3147, %v3025, %v3179
        %v3212 = vsel %vm3148, %v3030, %v3180
        %v3213 = vsel %vm3149, %v3035, %v3181
        %v3214 = vsel %vm3150, %v3040, %v3182
        %v3215 = vsel %vm3151, %v3045, %v3183
        %v3216 = vsel %vm3152, %v3050, %v3184
        %v3217 = vsel %vm3153, %v3055, %v3185
        %v3218 = vsel %vm3154, %v3060, %v3186
        %v3219 = vsel %vm3155, %v3065, %v3187
        %v3220 = vsel %vm3156, %v3070, %v3188
        %v3221 = vsel %vm3157, %v3075, %v3189
        %v3222 = vsel %vm3158, %v3080, %v3190
        %v3223 = vsel %vm3159, %v3085, %v3191
        %v3224 = vsel %vm3160, %v3090, %v3192
        %v3225 = vsel %vm3161, %v3095, %v3193
        %v3226 = vsel %vm3162, %v3100, %v3194
        %v3227 = vsel %vm3163, %v3105, %v3195
        %v3228 = vsel %vm3164, %v3110, %v3196
        %v3229 = vsel %vm3165, %v3115, %v3197
        %v3230 = vsel %vm3166, %v3120, %v3198
        %v3231 = vsel %vm3167, %v3125, %v3199
        %v3232 = vsel %vm3168, %v3130, %v3200
        %v3233 = vsel %vm3169, %v3135, %v3201
        %v3234 = vmax.f32 %v2477, %v3202
        %v3235 = vmax.f32 %v2478, %v3203
        %v3236 = vmax.f32 %v2479, %v3204
        %v3237 = vmax.f32 %v2480, %v3205
        %v3238 = vmax.f32 %v2481, %v3206
        %v3239 = vmax.f32 %v2482, %v3207
        %v3240 = vmax.f32 %v2483, %v3208
        %v3241 = vmax.f32 %v2484, %v3209
        %v3242 = vmax.f32 %v2485, %v3210
        %v3243 = vmax.f32 %v2486, %v3211
        %v3244 = vmax.f32 %v2487, %v3212
        %v3245 = vmax.f32 %v2488, %v3213
        %v3246 = vmax.f32 %v2489, %v3214
        %v3247 = vmax.f32 %v2490, %v3215
        %v3248 = vmax.f32 %v2491, %v3216
        %v3249 = vmax.f32 %v2492, %v3217
        %v3250 = vmax.f32 %v2493, %v3218
        %v3251 = vmax.f32 %v2494, %v3219
        %v3252 = vmax.f32 %v2495, %v3220
        %v3253 = vmax.f32 %v2496, %v3221
        %v3254 = vmax.f32 %v2497, %v3222
        %v3255 = vmax.f32 %v2498, %v3223
        %v3256 = vmax.f32 %v2499, %v3224
        %v3257 = vmax.f32 %v2500, %v3225
        %v3258 = vmax.f32 %v2501, %v3226
        %v3259 = vmax.f32 %v2502, %v3227
        %v3260 = vmax.f32 %v2503, %v3228
        %v3261 = vmax.f32 %v2504, %v3229
        %v3262 = vmax.f32 %v2505, %v3230
        %v3263 = vmax.f32 %v2506, %v3231
        %v3264 = vmax.f32 %v2507, %v3232
        %v3265 = vmax.f32 %v2508, %v3233
        %v3266 = vxor.u32 %v3234, 2147483648
        %v3267 = vxor.u32 %v3235, 2147483648
        %v3268 = vxor.u32 %v3236, 2147483648
        %v3269 = vxor.u32 %v3237, 2147483648
        %v3270 = vxor.u32 %v3238, 2147483648
        %v3271 = vxor.u32 %v3239, 2147483648
        %v3272 = vxor.u32 %v3240, 2147483648
        %v3273 = vxor.u32 %v3241, 2147483648
        %v3274 = vxor.u32 %v3242, 2147483648
        %v3275 = vxor.u32 %v3243, 2147483648
        %v3276 = vxor.u32 %v3244, 2147483648
        %v3277 = vxor.u32 %v3245, 2147483648
        %v3278 = vxor.u32 %v3246, 2147483648
        %v3279 = vxor.u32 %v3247, 2147483648
        %v3280 = vxor.u32 %v3248, 2147483648
        %v3281 = vxor.u32 %v3249, 2147483648
        %v3282 = vxor.u32 %v3250, 2147483648
        %v3283 = vxor.u32 %v3251, 2147483648
        %v3284 = vxor.u32 %v3252, 2147483648
        %v3285 = vxor.u32 %v3253, 2147483648
        %v3286 = vxor.u32 %v3254, 2147483648
        %v3287 = vxor.u32 %v3255, 2147483648
        %v3288 = vxor.u32 %v3256, 2147483648
        %v3289 = vxor.u32 %v3257, 2147483648
        %v3290 = vxor.u32 %v3258, 2147483648
        %v3291 = vxor.u32 %v3259, 2147483648
        %v3292 = vxor.u32 %v3260, 2147483648
        %v3293 = vxor.u32 %v3261, 2147483648
        %v3294 = vxor.u32 %v3262, 2147483648
        %v3295 = vxor.u32 %v3263, 2147483648
        %v3296 = vxor.u32 %v3264, 2147483648
        %v3297 = vxor.u32 %v3265, 2147483648
        %v3298 = vmul.f32 %v3266, 1.442695
        %v3299 = vpow.pop %v3298
        %v3300 = vmul.f32 %v3267, 1.442695
        %v3301 = vpow.pop %v3300
        %v3302 = vmul.f32 %v3268, 1.442695
        %v3303 = vpow.pop %v3302
        %v3304 = vmul.f32 %v3269, 1.442695
        %v3305 = vpow.pop %v3304
        %v3306 = vmul.f32 %v3270, 1.442695
        %v3307 = vpow.pop %v3306
        %v3308 = vmul.f32 %v3271, 1.442695
        %v3309 = vpow.pop %v3308
        %v3310 = vmul.f32 %v3272, 1.442695
        %v3311 = vpow.pop %v3310
        %v3312 = vmul.f32 %v3273, 1.442695
        %v3313 = vpow.pop %v3312
        %v3314 = vmul.f32 %v3274, 1.442695
        %v3315 = vpow.pop %v3314
        %v3316 = vmul.f32 %v3275, 1.442695
        %v3317 = vpow.pop %v3316
        %v3318 = vmul.f32 %v3276, 1.442695
        %v3319 = vpow.pop %v3318
        %v3320 = vmul.f32 %v3277, 1.442695
        %v3321 = vpow.pop %v3320
        %v3322 = vmul.f32 %v3278, 1.442695
        %v3323 = vpow.pop %v3322
        %v3324 = vmul.f32 %v3279, 1.442695
        %v3325 = vpow.pop %v3324
        %v3326 = vmul.f32 %v3280, 1.442695
        %v3327 = vpow.pop %v3326
        %v3328 = vmul.f32 %v3281, 1.442695
        %v3329 = vpow.pop %v3328
        %v3330 = vmul.f32 %v3282, 1.442695
        %v3331 = vpow.pop %v3330
        %v3332 = vmul.f32 %v3283, 1.442695
        %v3333 = vpow.pop %v3332
        %v3334 = vmul.f32 %v3284, 1.442695
        %v3335 = vpow.pop %v3334
        %v3336 = vmul.f32 %v3285, 1.442695
        %v3337 = vpow.pop %v3336
        %v3338 = vmul.f32 %v3286, 1.442695
        %v3339 = vpow.pop %v3338
        %v3340 = vmul.f32 %v3287, 1.442695
        %v3341 = vpow.pop %v3340
        %v3342 = vmul.f32 %v3288, 1.442695
        %v3343 = vpow.pop %v3342
        %v3344 = vmul.f32 %v3289, 1.442695
        %v3345 = vpow.pop %v3344
        %v3346 = vmul.f32 %v3290, 1.442695
        %v3347 = vpow.pop %v3346
        %v3348 = vmul.f32 %v3291, 1.442695
        %v3349 = vpow.pop %v3348
        %v3350 = vmul.f32 %v3292, 1.442695
        %v3351 = vpow.pop %v3350
        %v3352 = vmul.f32 %v3293, 1.442695
        %v3353 = vpow.pop %v3352
        %v3354 = vmul.f32 %v3294, 1.442695
        %v3355 = vpow.pop %v3354
        %v3356 = vmul.f32 %v3295, 1.442695
        %v3357 = vpow.pop %v3356
        %v3358 = vmul.f32 %v3296, 1.442695
        %v3359 = vpow.pop %v3358
        %v3360 = vmul.f32 %v3297, 1.442695
        %v3361 = vpow.pop %v3360
        %v3362 = vadd.f32 %v3299, 1.0
        %v3363 = vadd.f32 %v3301, 1.0
        %v3364 = vadd.f32 %v3303, 1.0
        %v3365 = vadd.f32 %v3305, 1.0
        %v3366 = vadd.f32 %v3307, 1.0
        %v3367 = vadd.f32 %v3309, 1.0
        %v3368 = vadd.f32 %v3311, 1.0
        %v3369 = vadd.f32 %v3313, 1.0
        %v3370 = vadd.f32 %v3315, 1.0
        %v3371 = vadd.f32 %v3317, 1.0
        %v3372 = vadd.f32 %v3319, 1.0
        %v3373 = vadd.f32 %v3321, 1.0
        %v3374 = vadd.f32 %v3323, 1.0
        %v3375 = vadd.f32 %v3325, 1.0
        %v3376 = vadd.f32 %v3327, 1.0
        %v3377 = vadd.f32 %v3329, 1.0
        %v3378 = vadd.f32 %v3331, 1.0
        %v3379 = vadd.f32 %v3333, 1.0
        %v3380 = vadd.f32 %v3335, 1.0
        %v3381 = vadd.f32 %v3337, 1.0
        %v3382 = vadd.f32 %v3339, 1.0
        %v3383 = vadd.f32 %v3341, 1.0
        %v3384 = vadd.f32 %v3343, 1.0
        %v3385 = vadd.f32 %v3345, 1.0
        %v3386 = vadd.f32 %v3347, 1.0
        %v3387 = vadd.f32 %v3349, 1.0
        %v3388 = vadd.f32 %v3351, 1.0
        %v3389 = vadd.f32 %v3353, 1.0
        %v3390 = vadd.f32 %v3355, 1.0
        %v3391 = vadd.f32 %v3357, 1.0
        %v3392 = vadd.f32 %v3359, 1.0
        %v3393 = vadd.f32 %v3361, 1.0
        %v3394 = vrcp.pop %v3362
        %v3395 = vmul.f32 1.0, %v3394
        %v3396 = vrcp.pop %v3363
        %v3397 = vmul.f32 1.0, %v3396
        %v3398 = vrcp.pop %v3364
        %v3399 = vmul.f32 1.0, %v3398
        %v3400 = vrcp.pop %v3365
        %v3401 = vmul.f32 1.0, %v3400
        %v3402 = vrcp.pop %v3366
        %v3403 = vmul.f32 1.0, %v3402
        %v3404 = vrcp.pop %v3367
        %v3405 = vmul.f32 1.0, %v3404
        %v3406 = vrcp.pop %v3368
        %v3407 = vmul.f32 1.0, %v3406
        %v3408 = vrcp.pop %v3369
        %v3409 = vmul.f32 1.0, %v3408
        %v3410 = vrcp.pop %v3370
        %v3411 = vmul.f32 1.0, %v3410
        %v3412 = vrcp.pop %v3371
        %v3413 = vmul.f32 1.0, %v3412
        %v3414 = vrcp.pop %v3372
        %v3415 = vmul.f32 1.0, %v3414
        %v3416 = vrcp.pop %v3373
        %v3417 = vmul.f32 1.0, %v3416
        %v3418 = vrcp.pop %v3374
        %v3419 = vmul.f32 1.0, %v3418
        %v3420 = vrcp.pop %v3375
        %v3421 = vmul.f32 1.0, %v3420
        %v3422 = vrcp.pop %v3376
        %v3423 = vmul.f32 1.0, %v3422
        %v3424 = vrcp.pop %v3377
        %v3425 = vmul.f32 1.0, %v3424
        %v3426 = vrcp.pop %v3378
        %v3427 = vmul.f32 1.0, %v3426
        %v3428 = vrcp.pop %v3379
        %v3429 = vmul.f32 1.0, %v3428
        %v3430 = vrcp.pop %v3380
        %v3431 = vmul.f32 1.0, %v3430
        %v3432 = vrcp.pop %v3381
        %v3433 = vmul.f32 1.0, %v3432
        %v3434 = vrcp.pop %v3382
        %v3435 = vmul.f32 1.0, %v3434
        %v3436 = vrcp.pop %v3383
        %v3437 = vmul.f32 1.0, %v3436
        %v3438 = vrcp.pop %v3384
        %v3439 = vmul.f32 1.0, %v3438
        %v3440 = vrcp.pop %v3385
        %v3441 = vmul.f32 1.0, %v3440
        %v3442 = vrcp.pop %v3386
        %v3443 = vmul.f32 1.0, %v3442
        %v3444 = vrcp.pop %v3387
        %v3445 = vmul.f32 1.0, %v3444
        %v3446 = vrcp.pop %v3388
        %v3447 = vmul.f32 1.0, %v3446
        %v3448 = vrcp.pop %v3389
        %v3449 = vmul.f32 1.0, %v3448
        %v3450 = vrcp.pop %v3390
        %v3451 = vmul.f32 1.0, %v3450
        %v3452 = vrcp.pop %v3391
        %v3453 = vmul.f32 1.0, %v3452
        %v3454 = vrcp.pop %v3392
        %v3455 = vmul.f32 1.0, %v3454
        %v3456 = vrcp.pop %v3393
        %v3457 = vmul.f32 1.0, %v3456
        %3458 = vst [vmem:[%s272] sm:$0xff] %v3395
        %3459 = vst [vmem:[%s272 + $0x8] sm:$0xff] %v3397
        %3460 = vst [vmem:[%s272 + $0x10] sm:$0xff] %v3399
        %3461 = vst [vmem:[%s272 + $0x18] sm:$0xff] %v3401
        %3462 = vst [vmem:[%s272 + $0x20] sm:$0xff] %v3403
        %3463 = vst [vmem:[%s272 + $0x28] sm:$0xff] %v3405
        %3464 = vst [vmem:[%s272 + $0x30] sm:$0xff] %v3407
        %3465 = vst [vmem:[%s272 + $0x38] sm:$0xff] %v3409
        %3466 = vst [vmem:[%s272 + $0x40] sm:$0xff] %v3411
        %3467 = vst [vmem:[%s272 + $0x48] sm:$0xff] %v3413
        %3468 = vst [vmem:[%s272 + $0x50] sm:$0xff] %v3415
        %3469 = vst [vmem:[%s272 + $0x58] sm:$0xff] %v3417
        %3470 = vst [vmem:[%s272 + $0x60] sm:$0xff] %v3419
        %3471 = vst [vmem:[%s272 + $0x68] sm:$0xff] %v3421
        %3472 = vst [vmem:[%s272 + $0x70] sm:$0xff] %v3423
        %3473 = vst [vmem:[%s272 + $0x78] sm:$0xff] %v3425
        %3474 = vst [vmem:[%s272 + $0x80] sm:$0xff] %v3427
        %3475 = vst [vmem:[%s272 + $0x88] sm:$0xff] %v3429
        %3476 = vst [vmem:[%s272 + $0x90] sm:$0xff] %v3431
        %3477 = vst [vmem:[%s272 + $0x98] sm:$0xff] %v3433
        %3478 = vst [vmem:[%s272 + $0xa0] sm:$0xff] %v3435
        %3479 = vst [vmem:[%s272 + $0xa8] sm:$0xff] %v3437
        %3480 = vst [vmem:[%s272 + $0xb0] sm:$0xff] %v3439
        %3481 = vst [vmem:[%s272 + $0xb8] sm:$0xff] %v3441
        %3482 = vst [vmem:[%s272 + $0xc0] sm:$0xff] %v3443
        %3483 = vst [vmem:[%s272 + $0xc8] sm:$0xff] %v3445
        %3484 = vst [vmem:[%s272 + $0xd0] sm:$0xff] %v3447
        %3485 = vst [vmem:[%s272 + $0xd8] sm:$0xff] %v3449
        %3486 = vst [vmem:[%s272 + $0xe0] sm:$0xff] %v3451
        %3487 = vst [vmem:[%s272 + $0xe8] sm:$0xff] %v3453
        %3488 = vst [vmem:[%s272 + $0xf0] sm:$0xff] %v3455
        %3489 = vst [vmem:[%s272 + $0xf8] sm:$0xff] %v3457
        %s3490 = sand.u32 %s141, 1
        %s3491 = scalar_lea.sflag [#allocation4], %s3490
        %s3492 = sand.u32 %s141, 1
        %s3493 = smul.addr %s3492, 256
        %s3494 = scalar_lea.vmem [#allocation8], %s3493
        // Predicated region
        $region53: #{tpu_custom_call.1} parent=39 // pred_check
          %p3495 = pneg %p151
        $region54: #{tpu_custom_call.1} parent=39 // pred_check_branch
          %3497 = sbr.rel (%p3495) target = $region56
        $region55: #{tpu_custom_call.1} parent=39 // pred_region
          %s3498 = smul.u32 2, %s23
          %s3500 = ssub.s32 4096, 4096
          %3501 = vsyncadd %s3491, %s3500
          %s3502 = smul.addr %s3498, 16
          %s3503 = smul.addr %s3502, 128
          %s3504 = scalar_lea.hbm %s5, %s3503
          %s3505 = sshll.u32 %s3494, 4
          %s3506 = int_to_ptr.vmem [resolvable:$true] %s3505
          %3511 = dma.vmem_to_hbm [thread:$0]  %s3506, 4096, %s3504, %s3491, 128, 128, 8
        $region56: #{tpu_custom_call.1} parent=39 // pred_fallthru
          _
      $region40: #{tpu_custom_call.1} parent=5 // pred_fallthru
        _
      %p3512 = scmp.le.s32.totalorder 2, %s18
      // Predicated region
      $region57: #{tpu_custom_call.1} parent=5 // pred_check
        %p3513 = pneg %p3512
      $region58: #{tpu_custom_call.1} parent=5 // pred_check_branch
        %3515 = sbr.rel (%p3513) target = $region60
      $region59: #{tpu_custom_call.1} parent=5 // pred_region
        %s3516 = ssub.s32 %s18, 2
        // Predicated region
        $region61: #{tpu_custom_call.1} parent=59 // pred_check
          %p3517 = pneg %p157
        $region62: #{tpu_custom_call.1} parent=59 // pred_check_branch
          %3519 = sbr.rel (%p3517) target = $region64
        $region63: #{tpu_custom_call.1} parent=59 // pred_region
          %s3520 = sand.u32 %s142, 1
          %s3521 = scalar_lea.sflag [#allocation4], %s3520
          %s3522 = sand.u32 %s142, 1
          %s3523 = smul.addr %s3522, 256
          %s3524 = scalar_lea.vmem [#allocation8], %s3523
          %3525 = dma.done %s3521, 4096
        $region64: #{tpu_custom_call.1} parent=59 // pred_fallthru
          _
      $region60: #{tpu_custom_call.1} parent=5 // pred_fallthru
        _
    $region6: #{tpu_custom_call.1} parent=1 // loop_footer
      %s22 = sadd.s32 1, %s18
    $region7: #{tpu_custom_call.1} parent=1 // loop_footer_branch
      %17 = sbr.rel target = $region3
    $region8: #{tpu_custom_call.1} parent=1 // loop_exit
      _
    %3526 = vsyncpa [#allocation3], 1
    %s3527 = scalar_lea.sflag [#allocation3], 1
    %3528 = vsyncpa %s3527, 1
    %3529 = vsyncpa [#allocation6], 1
    %3530 = vsyncpa [#allocation4], 1
    %s3531 = scalar_lea.sflag [#allocation4], 1
    %3532 = vsyncpa %s3531, 1

</llo_original>
